<compile_context>
chip_gen: v6e
topology: v6e:2x2x1
jax: 0.10.0
libtpu: 0.0.40
codegen_flags: <defaults>
</compile_context>

<pallas_src>
import functools

import jax
import jax.numpy as jnp
from jax.experimental import pallas as pl
from jax.experimental.pallas import tpu as pltpu

# ----------------------------- config (scaled down) -----------------------------
VOCAB = 50
HIDDEN = 64
N_HEADS = 4
HEAD_DIM = HIDDEN // N_HEADS
INTER = 128
N_LAYERS = 2
MAX_POS = 32
LN_EPS = 1e-12
NEG_INF = -1e9


# ----------------------------- in-kernel helpers --------------------------------
def _layernorm_f32(x, gamma, beta, eps):
    # LayerNorm statistics always in f32 (LN_EPS underflows in bf16).
    mu = jnp.mean(x, axis=-1, keepdims=True)
    xc = x - mu
    var = jnp.mean(xc * xc, axis=-1, keepdims=True)
    return xc * jax.lax.rsqrt(var + eps) * gamma + beta


# ----------------------------- fused encoder kernel -----------------------------
def _encoder_kernel(x_ref, mask_ref, emb_g_ref, emb_b_ref,
                    wqkv_ref, bqkv_ref, wo_ref, bo_ref, ln1_g_ref, ln1_b_ref,
                    w1_ref, b1_ref, w2_ref, b2_ref, ln2_g_ref, ln2_b_ref,
                    out_ref, act_ref, ctx_ref,
                    *, batch, seq, n_heads, head_dim, hidden, scale, eps):
    """Grid axis = transformer layer. Activations stay resident in VMEM scratch."""
    l = pl.program_id(0)

    # ---- step 0: embedding LayerNorm into the resident activation slab ----
    @pl.when(l == 0)
    def _():
        act_ref[...] = _layernorm_f32(x_ref[...], emb_g_ref[...], emb_b_ref[...], eps)

    x = act_ref[...]                                       # (B*S, H) f32
    mask = mask_ref[...]                                   # (B, S)   0/1 f32

    # ---- fused QKV projection (bf16 on MXU, f32 accumulation) ----
    qkv = jnp.dot(x.astype(jnp.bfloat16), wqkv_ref[0],
                  preferred_element_type=jnp.float32) + bqkv_ref[0]      # (B*S, 3H)

    # ---- per (batch, head) attention; context streamed into VMEM scratch ----
    for b in range(batch):
        row = b * seq
        add_m = (1.0 - mask[b:b + 1, :]) * NEG_INF         # (1, S) additive mask
        for h in range(n_heads):
            lo = h * head_dim
            # scale folded into Q before the bf16 cast (rides the cast for free)
            qh = (qkv[row:row + seq, lo:lo + head_dim] * scale).astype(jnp.bfloat16)
            kh = qkv[row:row + seq, hidden + lo:hidden + lo + head_dim].astype(jnp.bfloat16)
            vh = qkv[row:row + seq, 2 * hidden + lo:2 * hidden + lo + head_dim].astype(jnp.bfloat16)
            # bf16 QK^T via dot_general contracting dim 1 of both (no explicit kh.T)
            s = jax.lax.dot_general(qh, kh, (((1,), (1,)), ((), ())),
                                    preferred_element_type=jnp.float32) + add_m
            s = s - jnp.max(s, axis=-1, keepdims=True)
            p = jnp.exp(s)
            p = p * pl.reciprocal(jnp.sum(p, axis=-1, keepdims=True), approx=True)
            ctx_ref[pl.ds(row, seq), pl.ds(lo, head_dim)] = jnp.dot(
                p.astype(jnp.bfloat16), vh, preferred_element_type=jnp.float32)

    # ---- attention output dense + residual + LayerNorm ----
    attn = jnp.dot(ctx_ref[...].astype(jnp.bfloat16), wo_ref[0],
                   preferred_element_type=jnp.float32) + bo_ref[0]
    x1 = _layernorm_f32(attn + x, ln1_g_ref[0], ln1_b_ref[0], eps)

    # ---- FFN w1 + GELU + w2 + residual + LayerNorm ----
    ff = jnp.dot(x1.astype(jnp.bfloat16), w1_ref[0],
                 preferred_element_type=jnp.float32) + b1_ref[0]
    # TODO(synk): HF BERT uses exact erf GELU; tanh approximation used (EUP-friendly).
    ff = jax.nn.gelu(ff, approximate=True)
    y = jnp.dot(ff.astype(jnp.bfloat16), w2_ref[0],
                preferred_element_type=jnp.float32) + b2_ref[0]
    x_out = _layernorm_f32(y + x1, ln2_g_ref[0], ln2_b_ref[0], eps)
    act_ref[...] = x_out

    # ---- last step: masked mean pooling fused into the same kernel ----
    @pl.when(l == pl.num_programs(0) - 1)
    def _():
        for b in range(batch):
            row = b * seq
            mb = mask[b:b + 1, :]                                          # (1, S)
            num = jnp.dot(mb, x_out[row:row + seq, :],
                          preferred_element_type=jnp.float32)              # (1, H)
            den = jnp.maximum(jnp.sum(mb, axis=-1, keepdims=True), 1e-9)   # clamp(min=1e-9)
            out_ref[pl.ds(b, 1), :] = num / den


def fused_encoder(x_sum, mask_f, params):
    """x_sum: (B*S, H) f32 summed embeddings; mask_f: (B, S) 0/1 f32."""
    BS, H = x_sum.shape
    B, S = mask_f.shape
    assert BS == B * S and S % 8 == 0
    L = params["wqkv"].shape[0]

    def layer_spec(arr):   # one layer's weights per grid step (streamed/prefetched)
        return pl.BlockSpec((1,) + arr.shape[1:], lambda l: (l, 0, 0))

    def full_spec(arr):    # small arrays resident across the whole grid
        return pl.BlockSpec(arr.shape, lambda l: (0, 0))

    layer_ws = (params["wqkv"], params["bqkv"], params["wo"], params["bo"],
                params["ln1_g"], params["ln1_b"],
                params["w1"], params["b1"], params["w2"], params["b2"],
                params["ln2_g"], params["ln2_b"])

    kernel = functools.partial(
        _encoder_kernel, batch=B, seq=S, n_heads=N_HEADS, head_dim=HEAD_DIM,
        hidden=H, scale=1.0 / (HEAD_DIM ** 0.5), eps=LN_EPS)

    return pl.pallas_call(
        kernel,
        grid=(L,),
        out_shape=jax.ShapeDtypeStruct((B, H), jnp.float32),
        in_specs=[full_spec(x_sum), full_spec(mask_f),
                  full_spec(params["emb_ln_g"]), full_spec(params["emb_ln_b"])]
                 + [layer_spec(w) for w in layer_ws],
        out_specs=pl.BlockSpec((B, H), lambda l: (0, 0)),
        scratch_shapes=[pltpu.VMEM((BS, H), jnp.float32),   # resident activations
                        pltpu.VMEM((BS, H), jnp.float32)],  # attention context staging
        compiler_params=pltpu.CompilerParams(
            dimension_semantics=("arbitrary",)),
    )(x_sum, mask_f, params["emb_ln_g"], params["emb_ln_b"], *layer_ws)


# ----------------------------- parameters ----------------------------------------
def init_params(key):
    def nrm(k, shape):
        return jax.random.normal(k, shape, dtype=jnp.float32) * 0.02

    keys = jax.random.split(key, 4 + N_LAYERS)
    params = {
        "word_emb": nrm(keys[0], (VOCAB, HIDDEN)),
        "pos_emb": nrm(keys[1], (MAX_POS, HIDDEN)),
        "type_emb": nrm(keys[2], (2, HIDDEN)),
        "emb_ln_g": jnp.ones((1, HIDDEN), jnp.float32),
        "emb_ln_b": jnp.zeros((1, HIDDEN), jnp.float32),
    }
    # Stacked (leading layer axis) weights; matmul weights stored bf16 for the MXU.
    wqkv, wo, w1, w2 = [], [], [], []
    for li in range(N_LAYERS):
        lk = jax.random.split(keys[4 + li], 6)
        wq = nrm(lk[0], (HIDDEN, HIDDEN))
        wk = nrm(lk[1], (HIDDEN, HIDDEN))
        wv = nrm(lk[2], (HIDDEN, HIDDEN))
        wqkv.append(jnp.concatenate([wq, wk, wv], axis=1))
        wo.append(nrm(lk[3], (HIDDEN, HIDDEN)))
        w1.append(nrm(lk[4], (HIDDEN, INTER)))
        w2.append(nrm(lk[5], (INTER, HIDDEN)))
    params.update({
        "wqkv": jnp.stack(wqkv).astype(jnp.bfloat16),            # (L, H, 3H)
        "bqkv": jnp.zeros((N_LAYERS, 1, 3 * HIDDEN), jnp.float32),
        "wo": jnp.stack(wo).astype(jnp.bfloat16),                 # (L, H, H)
        "bo": jnp.zeros((N_LAYERS, 1, HIDDEN), jnp.float32),
        "ln1_g": jnp.ones((N_LAYERS, 1, HIDDEN), jnp.float32),
        "ln1_b": jnp.zeros((N_LAYERS, 1, HIDDEN), jnp.float32),
        "w1": jnp.stack(w1).astype(jnp.bfloat16),                 # (L, H, INTER)
        "b1": jnp.zeros((N_LAYERS, 1, INTER), jnp.float32),
        "w2": jnp.stack(w2).astype(jnp.bfloat16),                 # (L, INTER, H)
        "b2": jnp.zeros((N_LAYERS, 1, HIDDEN), jnp.float32),
        "ln2_g": jnp.ones((N_LAYERS, 1, HIDDEN), jnp.float32),
        "ln2_b": jnp.zeros((N_LAYERS, 1, HIDDEN), jnp.float32),
    })
    return params


# ----------------------------- forward (glue in plain JAX) ------------------------
def encoder_forward(params, input_ids, attention_mask):
    B, S = input_ids.shape
    # TODO(synk): embedding-table gather kept in plain JAX (no clean Pallas gather at this scale).
    we = jnp.take(params["word_emb"], input_ids, axis=0)        # (B, S, H)
    pe = params["pos_emb"][:S][None]                            # (1, S, H)
    te = params["type_emb"][0][None, None]                      # (1, 1, H)  token_type_ids == 0
    x_sum = (we + pe + te).reshape(B * S, HIDDEN)

    mask_f = attention_mask.astype(jnp.float32)                 # (B, S)
    text_features = fused_encoder(x_sum, mask_f, params)        # (B, H) — single pallas_call
    return jnp.squeeze(text_features)                           # matches .squeeze() in the module


# ----------------------------- main ------------------------------------------------
if __name__ == "__main__":
    key = jax.random.PRNGKey(0)
    pkey, ikey = jax.random.split(key)
    params = init_params(pkey)

    B, S = 2, 16
    input_ids = jax.random.randint(ikey, (B, S), 0, VOCAB, dtype=jnp.int32)
    attention_mask = jnp.array(
        [[1] * 12 + [0] * 4,   # padded sequence
         [1] * 16],            # full sequence
        dtype=jnp.int32)

    fwd = jax.jit(functools.partial(encoder_forward, params))
    out = fwd(input_ids, attention_mask)
    out = jax.block_until_ready(out)
    assert out.shape == (B, HIDDEN) and out.dtype == jnp.float32
    assert bool(jnp.all(jnp.isfinite(out)))
    print("KERNEL_OK")
</pallas_src>

<mosaic_0001>
module attributes {stable_mosaic.version = 11 : i64} {
  func.func @_encoder_kernel(%arg0: i32, %arg1: memref<32x64xf32, #tpu.memory_space<vmem>>, %arg2: memref<2x16xf32, #tpu.memory_space<vmem>>, %arg3: memref<1x64xf32, #tpu.memory_space<vmem>>, %arg4: memref<1x64xf32, #tpu.memory_space<vmem>>, %arg5: memref<1x64x192xbf16, #tpu.memory_space<vmem>>, %arg6: memref<1x1x192xf32, #tpu.memory_space<vmem>>, %arg7: memref<1x64x64xbf16, #tpu.memory_space<vmem>>, %arg8: memref<1x1x64xf32, #tpu.memory_space<vmem>>, %arg9: memref<1x1x64xf32, #tpu.memory_space<vmem>>, %arg10: memref<1x1x64xf32, #tpu.memory_space<vmem>>, %arg11: memref<1x64x128xbf16, #tpu.memory_space<vmem>>, %arg12: memref<1x1x128xf32, #tpu.memory_space<vmem>>, %arg13: memref<1x128x64xbf16, #tpu.memory_space<vmem>>, %arg14: memref<1x1x64xf32, #tpu.memory_space<vmem>>, %arg15: memref<1x1x64xf32, #tpu.memory_space<vmem>>, %arg16: memref<1x1x64xf32, #tpu.memory_space<vmem>>, %arg17: memref<2x64xf32, #tpu.memory_space<vmem>>, %arg18: memref<32x64xf32, #tpu.memory_space<vmem>>, %arg19: memref<32x64xf32, #tpu.memory_space<vmem>>) attributes {dimension_semantics = [#tpu.dimension_semantics<arbitrary>], iteration_bounds = array<i64: 2>, scalar_prefetch = 0 : i64, scratch_operands = 2 : i64, tpu.core_type = #tpu.core_type<tc>, window_params = [{pipeline_mode = #tpu.pipeline_mode<synchronous>, transform_indices = @transform_0, window_bounds = array<i64: 32, 64>}, {pipeline_mode = #tpu.pipeline_mode<synchronous>, transform_indices = @transform_1, window_bounds = array<i64: 2, 16>}, {pipeline_mode = #tpu.pipeline_mode<synchronous>, transform_indices = @transform_2, window_bounds = array<i64: 1, 64>}, {pipeline_mode = #tpu.pipeline_mode<synchronous>, transform_indices = @transform_3, window_bounds = array<i64: 1, 64>}, {transform_indices = @transform_4, window_bounds = array<i64: 1, 64, 192>}, {transform_indices = @transform_5, window_bounds = array<i64: 1, 1, 192>}, {transform_indices = @transform_6, window_bounds = array<i64: 1, 64, 64>}, {transform_indices = @transform_7, window_bounds = array<i64: 1, 1, 64>}, {transform_indices = @transform_8, window_bounds = array<i64: 1, 1, 64>}, {transform_indices = @transform_9, window_bounds = array<i64: 1, 1, 64>}, {transform_indices = @transform_10, window_bounds = array<i64: 1, 64, 128>}, {transform_indices = @transform_11, window_bounds = array<i64: 1, 1, 128>}, {transform_indices = @transform_12, window_bounds = array<i64: 1, 128, 64>}, {transform_indices = @transform_13, window_bounds = array<i64: 1, 1, 64>}, {transform_indices = @transform_14, window_bounds = array<i64: 1, 1, 64>}, {transform_indices = @transform_15, window_bounds = array<i64: 1, 1, 64>}, {pipeline_mode = #tpu.pipeline_mode<synchronous>, transform_indices = @transform_16, window_bounds = array<i64: 2, 64>}]} {
    %c0_i32 = arith.constant 0 : i32
    %0 = arith.cmpi eq, %arg0, %c0_i32 : i32
    %1 = arith.extui %0 : i1 to i32
    %c0_i32_0 = arith.constant 0 : i32
    %2 = arith.cmpi ne, %1, %c0_i32_0 : i32
    scf.if %2 {
      %c0_119 = arith.constant 0 : index
      %c0_120 = arith.constant 0 : index
      %307 = vector.load %arg1[%c0_119, %c0_120] : memref<32x64xf32, #tpu.memory_space<vmem>>, vector<32x64xf32>
      %c0_121 = arith.constant 0 : index
      %c0_122 = arith.constant 0 : index
      %308 = vector.load %arg3[%c0_121, %c0_122] : memref<1x64xf32, #tpu.memory_space<vmem>>, vector<1x64xf32>
      %c0_123 = arith.constant 0 : index
      %c0_124 = arith.constant 0 : index
      %309 = vector.load %arg4[%c0_123, %c0_124] : memref<1x64xf32, #tpu.memory_space<vmem>>, vector<1x64xf32>
      %cst_125 = arith.constant dense<0.000000e+00> : vector<32xf32>
      %310 = vector.multi_reduction <add>, %307, %cst_125 [1] : vector<32x64xf32> to vector<32xf32>
      %311 = vector.shape_cast %310 : vector<32xf32> to vector<32x1xf32>
      %cst_126 = arith.constant 6.400000e+01 : f32
      %312 = vector.broadcast %cst_126 : f32 to vector<32x1xf32>
      %313 = arith.divf %311, %312 : vector<32x1xf32>
      %314 = vector.broadcast %313 : vector<32x1xf32> to vector<32x64xf32>
      %315 = arith.subf %307, %314 : vector<32x64xf32>
      %316 = arith.mulf %315, %315 : vector<32x64xf32>
      %cst_127 = arith.constant dense<0.000000e+00> : vector<32xf32>
      %317 = vector.multi_reduction <add>, %316, %cst_127 [1] : vector<32x64xf32> to vector<32xf32>
      %318 = vector.shape_cast %317 : vector<32xf32> to vector<32x1xf32>
      %cst_128 = arith.constant 6.400000e+01 : f32
      %319 = vector.broadcast %cst_128 : f32 to vector<32x1xf32>
      %320 = arith.divf %318, %319 : vector<32x1xf32>
      %cst_129 = arith.constant 9.99999996E-13 : f32
      %321 = vector.broadcast %cst_129 : f32 to vector<32x1xf32>
      %322 = arith.addf %320, %321 : vector<32x1xf32>
      %323 = math.rsqrt %322 : vector<32x1xf32>
      %324 = vector.broadcast %323 : vector<32x1xf32> to vector<32x64xf32>
      %325 = arith.mulf %315, %324 : vector<32x64xf32>
      %326 = vector.broadcast %308 : vector<1x64xf32> to vector<32x64xf32>
      %327 = arith.mulf %325, %326 : vector<32x64xf32>
      %328 = vector.broadcast %309 : vector<1x64xf32> to vector<32x64xf32>
      %329 = arith.addf %327, %328 : vector<32x64xf32>
      %c0_130 = arith.constant 0 : index
      %c0_131 = arith.constant 0 : index
      %330 = vector.load %arg18[%c0_130, %c0_131] : memref<32x64xf32, #tpu.memory_space<vmem>>, vector<32x64xf32>
      tpu.vector_store %arg18[%c0_130, %c0_131], %329 {strides = array<i32>} : memref<32x64xf32, #tpu.memory_space<vmem>>, vector<32x64xf32>,
    } else {
    }
    %c0 = arith.constant 0 : index
    %c0_1 = arith.constant 0 : index
    %3 = vector.load %arg18[%c0, %c0_1] : memref<32x64xf32, #tpu.memory_space<vmem>>, vector<32x64xf32>
    %c0_2 = arith.constant 0 : index
    %c0_3 = arith.constant 0 : index
    %4 = vector.load %arg2[%c0_2, %c0_3] : memref<2x16xf32, #tpu.memory_space<vmem>>, vector<2x16xf32>
    %5 = arith.truncf %3 : vector<32x64xf32> to vector<32x64xbf16>
    %c0_4 = arith.constant 0 : index
    %c0_5 = arith.constant 0 : index
    %c0_6 = arith.constant 0 : index
    %6 = vector.load %arg5[%c0_4, %c0_5, %c0_6] : memref<1x64x192xbf16, #tpu.memory_space<vmem>>, vector<1x64x192xbf16>
    %7 = vector.shape_cast %6 : vector<1x64x192xbf16> to vector<64x192xbf16>
    %cst = arith.constant dense<0.000000e+00> : vector<32x192xf32>
    %8 = tpu.matmul %5, %7, %cst {dimension_numbers = #tpu.dot_dimension_numbers<[1], [0], [0], [1], [0, 0, 1, 1], [], []>} : vector<32x64xbf16>, vector<64x192xbf16>, vector<32x192xf32> -> vector<32x192xf32>
    %c0_7 = arith.constant 0 : index
    %c0_8 = arith.constant 0 : index
    %c0_9 = arith.constant 0 : index
    %9 = vector.load %arg6[%c0_7, %c0_8, %c0_9] : memref<1x1x192xf32, #tpu.memory_space<vmem>>, vector<1x1x192xf32>
    %10 = vector.shape_cast %9 : vector<1x1x192xf32> to vector<1x192xf32>
    %11 = vector.broadcast %10 : vector<1x192xf32> to vector<32x192xf32>
    %12 = arith.addf %8, %11 : vector<32x192xf32>
    %13 = vector.extract_strided_slice %4 {offsets = [0, 0], sizes = [1, 16], strides = [1, 1]} : vector<2x16xf32> to vector<1x16xf32>
    %cst_10 = arith.constant 1.000000e+00 : f32
    %14 = vector.broadcast %cst_10 : f32 to vector<1x16xf32>
    %15 = arith.subf %14, %13 : vector<1x16xf32>
    %cst_11 = arith.constant -1.000000e+09 : f32
    %16 = vector.broadcast %cst_11 : f32 to vector<1x16xf32>
    %17 = arith.mulf %15, %16 : vector<1x16xf32>
    %18 = vector.extract_strided_slice %12 {offsets = [0, 0], sizes = [16, 16], strides = [1, 1]} : vector<32x192xf32> to vector<16x16xf32>
    %cst_12 = arith.constant 2.500000e-01 : f32
    %19 = vector.broadcast %cst_12 : f32 to vector<16x16xf32>
    %20 = arith.mulf %18, %19 : vector<16x16xf32>
    %21 = arith.truncf %20 : vector<16x16xf32> to vector<16x16xbf16>
    %22 = vector.extract_strided_slice %12 {offsets = [0, 64], sizes = [16, 16], strides = [1, 1]} : vector<32x192xf32> to vector<16x16xf32>
    %23 = arith.truncf %22 : vector<16x16xf32> to vector<16x16xbf16>
    %24 = vector.extract_strided_slice %12 {offsets = [0, 128], sizes = [16, 16], strides = [1, 1]} : vector<32x192xf32> to vector<16x16xf32>
    %25 = arith.truncf %24 : vector<16x16xf32> to vector<16x16xbf16>
    %cst_13 = arith.constant dense<0.000000e+00> : vector<16x16xf32>
    %26 = tpu.matmul %21, %23, %cst_13 {dimension_numbers = #tpu.dot_dimension_numbers<[1], [1], [0], [0], [0, 0, 1, 0], [], []>} : vector<16x16xbf16>, vector<16x16xbf16>, vector<16x16xf32> -> vector<16x16xf32>
    %27 = vector.broadcast %17 : vector<1x16xf32> to vector<16x16xf32>
    %28 = arith.addf %26, %27 : vector<16x16xf32>
    %cst_14 = arith.constant dense<0xFF800000> : vector<16xf32>
    %29 = vector.multi_reduction <maximumf>, %28, %cst_14 [1] : vector<16x16xf32> to vector<16xf32>
    %30 = vector.shape_cast %29 : vector<16xf32> to vector<16x1xf32>
    %31 = vector.broadcast %30 : vector<16x1xf32> to vector<16x16xf32>
    %32 = arith.subf %28, %31 : vector<16x16xf32>
    %33 = math.exp %32 : vector<16x16xf32>
    %cst_15 = arith.constant dense<0.000000e+00> : vector<16xf32>
    %34 = vector.multi_reduction <add>, %33, %cst_15 [1] : vector<16x16xf32> to vector<16xf32>
    %35 = vector.shape_cast %34 : vector<16xf32> to vector<16x1xf32>
    %36 = tpu.reciprocal %35 {approx = true} : vector<16x1xf32> -> vector<16x1xf32>
    %37 = vector.broadcast %36 : vector<16x1xf32> to vector<16x16xf32>
    %38 = arith.mulf %33, %37 : vector<16x16xf32>
    %39 = arith.truncf %38 : vector<16x16xf32> to vector<16x16xbf16>
    %cst_16 = arith.constant dense<0.000000e+00> : vector<16x16xf32>
    %40 = tpu.matmul %39, %25, %cst_16 {dimension_numbers = #tpu.dot_dimension_numbers<[1], [0], [0], [1], [0, 0, 1, 1], [], []>} : vector<16x16xbf16>, vector<16x16xbf16>, vector<16x16xf32> -> vector<16x16xf32>
    %c0_17 = arith.constant 0 : index
    %c0_18 = arith.constant 0 : index
    %41 = vector.load %arg19[%c0_17, %c0_18] : memref<32x64xf32, #tpu.memory_space<vmem>>, vector<16x16xf32>
    tpu.vector_store %arg19[%c0_17, %c0_18], %40 {strides = array<i32>} : memref<32x64xf32, #tpu.memory_space<vmem>>, vector<16x16xf32>,
    %42 = vector.extract_strided_slice %12 {offsets = [0, 16], sizes = [16, 16], strides = [1, 1]} : vector<32x192xf32> to vector<16x16xf32>
    %cst_19 = arith.constant 2.500000e-01 : f32
    %43 = vector.broadcast %cst_19 : f32 to vector<16x16xf32>
    %44 = arith.mulf %42, %43 : vector<16x16xf32>
    %45 = arith.truncf %44 : vector<16x16xf32> to vector<16x16xbf16>
    %46 = vector.extract_strided_slice %12 {offsets = [0, 80], sizes = [16, 16], strides = [1, 1]} : vector<32x192xf32> to vector<16x16xf32>
    %47 = arith.truncf %46 : vector<16x16xf32> to vector<16x16xbf16>
    %48 = vector.extract_strided_slice %12 {offsets = [0, 144], sizes = [16, 16], strides = [1, 1]} : vector<32x192xf32> to vector<16x16xf32>
    %49 = arith.truncf %48 : vector<16x16xf32> to vector<16x16xbf16>
    %cst_20 = arith.constant dense<0.000000e+00> : vector<16x16xf32>
    %50 = tpu.matmul %45, %47, %cst_20 {dimension_numbers = #tpu.dot_dimension_numbers<[1], [1], [0], [0], [0, 0, 1, 0], [], []>} : vector<16x16xbf16>, vector<16x16xbf16>, vector<16x16xf32> -> vector<16x16xf32>
    %51 = vector.broadcast %17 : vector<1x16xf32> to vector<16x16xf32>
    %52 = arith.addf %50, %51 : vector<16x16xf32>
    %cst_21 = arith.constant dense<0xFF800000> : vector<16xf32>
    %53 = vector.multi_reduction <maximumf>, %52, %cst_21 [1] : vector<16x16xf32> to vector<16xf32>
    %54 = vector.shape_cast %53 : vector<16xf32> to vector<16x1xf32>
    %55 = vector.broadcast %54 : vector<16x1xf32> to vector<16x16xf32>
    %56 = arith.subf %52, %55 : vector<16x16xf32>
    %57 = math.exp %56 : vector<16x16xf32>
    %cst_22 = arith.constant dense<0.000000e+00> : vector<16xf32>
    %58 = vector.multi_reduction <add>, %57, %cst_22 [1] : vector<16x16xf32> to vector<16xf32>
    %59 = vector.shape_cast %58 : vector<16xf32> to vector<16x1xf32>
    %60 = tpu.reciprocal %59 {approx = true} : vector<16x1xf32> -> vector<16x1xf32>
    %61 = vector.broadcast %60 : vector<16x1xf32> to vector<16x16xf32>
    %62 = arith.mulf %57, %61 : vector<16x16xf32>
    %63 = arith.truncf %62 : vector<16x16xf32> to vector<16x16xbf16>
    %cst_23 = arith.constant dense<0.000000e+00> : vector<16x16xf32>
    %64 = tpu.matmul %63, %49, %cst_23 {dimension_numbers = #tpu.dot_dimension_numbers<[1], [0], [0], [1], [0, 0, 1, 1], [], []>} : vector<16x16xbf16>, vector<16x16xbf16>, vector<16x16xf32> -> vector<16x16xf32>
    %c0_24 = arith.constant 0 : index
    %c16 = arith.constant 16 : index
    %65 = vector.load %arg19[%c0_24, %c16] : memref<32x64xf32, #tpu.memory_space<vmem>>, vector<16x16xf32>
    tpu.vector_store %arg19[%c0_24, %c16], %64 {strides = array<i32>} : memref<32x64xf32, #tpu.memory_space<vmem>>, vector<16x16xf32>,
    %66 = vector.extract_strided_slice %12 {offsets = [0, 32], sizes = [16, 16], strides = [1, 1]} : vector<32x192xf32> to vector<16x16xf32>
    %cst_25 = arith.constant 2.500000e-01 : f32
    %67 = vector.broadcast %cst_25 : f32 to vector<16x16xf32>
    %68 = arith.mulf %66, %67 : vector<16x16xf32>
    %69 = arith.truncf %68 : vector<16x16xf32> to vector<16x16xbf16>
    %70 = vector.extract_strided_slice %12 {offsets = [0, 96], sizes = [16, 16], strides = [1, 1]} : vector<32x192xf32> to vector<16x16xf32>
    %71 = arith.truncf %70 : vector<16x16xf32> to vector<16x16xbf16>
    %72 = vector.extract_strided_slice %12 {offsets = [0, 160], sizes = [16, 16], strides = [1, 1]} : vector<32x192xf32> to vector<16x16xf32>
    %73 = arith.truncf %72 : vector<16x16xf32> to vector<16x16xbf16>
    %cst_26 = arith.constant dense<0.000000e+00> : vector<16x16xf32>
    %74 = tpu.matmul %69, %71, %cst_26 {dimension_numbers = #tpu.dot_dimension_numbers<[1], [1], [0], [0], [0, 0, 1, 0], [], []>} : vector<16x16xbf16>, vector<16x16xbf16>, vector<16x16xf32> -> vector<16x16xf32>
    %75 = vector.broadcast %17 : vector<1x16xf32> to vector<16x16xf32>
    %76 = arith.addf %74, %75 : vector<16x16xf32>
    %cst_27 = arith.constant dense<0xFF800000> : vector<16xf32>
    %77 = vector.multi_reduction <maximumf>, %76, %cst_27 [1] : vector<16x16xf32> to vector<16xf32>
    %78 = vector.shape_cast %77 : vector<16xf32> to vector<16x1xf32>
    %79 = vector.broadcast %78 : vector<16x1xf32> to vector<16x16xf32>
    %80 = arith.subf %76, %79 : vector<16x16xf32>
    %81 = math.exp %80 : vector<16x16xf32>
    %cst_28 = arith.constant dense<0.000000e+00> : vector<16xf32>
    %82 = vector.multi_reduction <add>, %81, %cst_28 [1] : vector<16x16xf32> to vector<16xf32>
    %83 = vector.shape_cast %82 : vector<16xf32> to vector<16x1xf32>
    %84 = tpu.reciprocal %83 {approx = true} : vector<16x1xf32> -> vector<16x1xf32>
    %85 = vector.broadcast %84 : vector<16x1xf32> to vector<16x16xf32>
    %86 = arith.mulf %81, %85 : vector<16x16xf32>
    %87 = arith.truncf %86 : vector<16x16xf32> to vector<16x16xbf16>
    %cst_29 = arith.constant dense<0.000000e+00> : vector<16x16xf32>
    %88 = tpu.matmul %87, %73, %cst_29 {dimension_numbers = #tpu.dot_dimension_numbers<[1], [0], [0], [1], [0, 0, 1, 1], [], []>} : vector<16x16xbf16>, vector<16x16xbf16>, vector<16x16xf32> -> vector<16x16xf32>
    %c0_30 = arith.constant 0 : index
    %c32 = arith.constant 32 : index
    %89 = vector.load %arg19[%c0_30, %c32] : memref<32x64xf32, #tpu.memory_space<vmem>>, vector<16x16xf32>
    tpu.vector_store %arg19[%c0_30, %c32], %88 {strides = array<i32>} : memref<32x64xf32, #tpu.memory_space<vmem>>, vector<16x16xf32>,
    %90 = vector.extract_strided_slice %12 {offsets = [0, 48], sizes = [16, 16], strides = [1, 1]} : vector<32x192xf32> to vector<16x16xf32>
    %cst_31 = arith.constant 2.500000e-01 : f32
    %91 = vector.broadcast %cst_31 : f32 to vector<16x16xf32>
    %92 = arith.mulf %90, %91 : vector<16x16xf32>
    %93 = arith.truncf %92 : vector<16x16xf32> to vector<16x16xbf16>
    %94 = vector.extract_strided_slice %12 {offsets = [0, 112], sizes = [16, 16], strides = [1, 1]} : vector<32x192xf32> to vector<16x16xf32>
    %95 = arith.truncf %94 : vector<16x16xf32> to vector<16x16xbf16>
    %96 = vector.extract_strided_slice %12 {offsets = [0, 176], sizes = [16, 16], strides = [1, 1]} : vector<32x192xf32> to vector<16x16xf32>
    %97 = arith.truncf %96 : vector<16x16xf32> to vector<16x16xbf16>
    %cst_32 = arith.constant dense<0.000000e+00> : vector<16x16xf32>
    %98 = tpu.matmul %93, %95, %cst_32 {dimension_numbers = #tpu.dot_dimension_numbers<[1], [1], [0], [0], [0, 0, 1, 0], [], []>} : vector<16x16xbf16>, vector<16x16xbf16>, vector<16x16xf32> -> vector<16x16xf32>
    %99 = vector.broadcast %17 : vector<1x16xf32> to vector<16x16xf32>
    %100 = arith.addf %98, %99 : vector<16x16xf32>
    %cst_33 = arith.constant dense<0xFF800000> : vector<16xf32>
    %101 = vector.multi_reduction <maximumf>, %100, %cst_33 [1] : vector<16x16xf32> to vector<16xf32>
    %102 = vector.shape_cast %101 : vector<16xf32> to vector<16x1xf32>
    %103 = vector.broadcast %102 : vector<16x1xf32> to vector<16x16xf32>
    %104 = arith.subf %100, %103 : vector<16x16xf32>
    %105 = math.exp %104 : vector<16x16xf32>
    %cst_34 = arith.constant dense<0.000000e+00> : vector<16xf32>
    %106 = vector.multi_reduction <add>, %105, %cst_34 [1] : vector<16x16xf32> to vector<16xf32>
    %107 = vector.shape_cast %106 : vector<16xf32> to vector<16x1xf32>
    %108 = tpu.reciprocal %107 {approx = true} : vector<16x1xf32> -> vector<16x1xf32>
    %109 = vector.broadcast %108 : vector<16x1xf32> to vector<16x16xf32>
    %110 = arith.mulf %105, %109 : vector<16x16xf32>
    %111 = arith.truncf %110 : vector<16x16xf32> to vector<16x16xbf16>
    %cst_35 = arith.constant dense<0.000000e+00> : vector<16x16xf32>
    %112 = tpu.matmul %111, %97, %cst_35 {dimension_numbers = #tpu.dot_dimension_numbers<[1], [0], [0], [1], [0, 0, 1, 1], [], []>} : vector<16x16xbf16>, vector<16x16xbf16>, vector<16x16xf32> -> vector<16x16xf32>
    %c0_36 = arith.constant 0 : index
    %c48 = arith.constant 48 : index
    %113 = vector.load %arg19[%c0_36, %c48] : memref<32x64xf32, #tpu.memory_space<vmem>>, vector<16x16xf32>
    tpu.vector_store %arg19[%c0_36, %c48], %112 {strides = array<i32>} : memref<32x64xf32, #tpu.memory_space<vmem>>, vector<16x16xf32>,
    %114 = vector.extract_strided_slice %4 {offsets = [1, 0], sizes = [1, 16], strides = [1, 1]} : vector<2x16xf32> to vector<1x16xf32>
    %cst_37 = arith.constant 1.000000e+00 : f32
    %115 = vector.broadcast %cst_37 : f32 to vector<1x16xf32>
    %116 = arith.subf %115, %114 : vector<1x16xf32>
    %cst_38 = arith.constant -1.000000e+09 : f32
    %117 = vector.broadcast %cst_38 : f32 to vector<1x16xf32>
    %118 = arith.mulf %116, %117 : vector<1x16xf32>
    %119 = vector.extract_strided_slice %12 {offsets = [16, 0], sizes = [16, 16], strides = [1, 1]} : vector<32x192xf32> to vector<16x16xf32>
    %cst_39 = arith.constant 2.500000e-01 : f32
    %120 = vector.broadcast %cst_39 : f32 to vector<16x16xf32>
    %121 = arith.mulf %119, %120 : vector<16x16xf32>
    %122 = arith.truncf %121 : vector<16x16xf32> to vector<16x16xbf16>
    %123 = vector.extract_strided_slice %12 {offsets = [16, 64], sizes = [16, 16], strides = [1, 1]} : vector<32x192xf32> to vector<16x16xf32>
    %124 = arith.truncf %123 : vector<16x16xf32> to vector<16x16xbf16>
    %125 = vector.extract_strided_slice %12 {offsets = [16, 128], sizes = [16, 16], strides = [1, 1]} : vector<32x192xf32> to vector<16x16xf32>
    %126 = arith.truncf %125 : vector<16x16xf32> to vector<16x16xbf16>
    %cst_40 = arith.constant dense<0.000000e+00> : vector<16x16xf32>
    %127 = tpu.matmul %122, %124, %cst_40 {dimension_numbers = #tpu.dot_dimension_numbers<[1], [1], [0], [0], [0, 0, 1, 0], [], []>} : vector<16x16xbf16>, vector<16x16xbf16>, vector<16x16xf32> -> vector<16x16xf32>
    %128 = vector.broadcast %118 : vector<1x16xf32> to vector<16x16xf32>
    %129 = arith.addf %127, %128 : vector<16x16xf32>
    %cst_41 = arith.constant dense<0xFF800000> : vector<16xf32>
    %130 = vector.multi_reduction <maximumf>, %129, %cst_41 [1] : vector<16x16xf32> to vector<16xf32>
    %131 = vector.shape_cast %130 : vector<16xf32> to vector<16x1xf32>
    %132 = vector.broadcast %131 : vector<16x1xf32> to vector<16x16xf32>
    %133 = arith.subf %129, %132 : vector<16x16xf32>
    %134 = math.exp %133 : vector<16x16xf32>
    %cst_42 = arith.constant dense<0.000000e+00> : vector<16xf32>
    %135 = vector.multi_reduction <add>, %134, %cst_42 [1] : vector<16x16xf32> to vector<16xf32>
    %136 = vector.shape_cast %135 : vector<16xf32> to vector<16x1xf32>
    %137 = tpu.reciprocal %136 {approx = true} : vector<16x1xf32> -> vector<16x1xf32>
    %138 = vector.broadcast %137 : vector<16x1xf32> to vector<16x16xf32>
    %139 = arith.mulf %134, %138 : vector<16x16xf32>
    %140 = arith.truncf %139 : vector<16x16xf32> to vector<16x16xbf16>
    %cst_43 = arith.constant dense<0.000000e+00> : vector<16x16xf32>
    %141 = tpu.matmul %140, %126, %cst_43 {dimension_numbers = #tpu.dot_dimension_numbers<[1], [0], [0], [1], [0, 0, 1, 1], [], []>} : vector<16x16xbf16>, vector<16x16xbf16>, vector<16x16xf32> -> vector<16x16xf32>
    %c16_44 = arith.constant 16 : index
    %c0_45 = arith.constant 0 : index
    %142 = vector.load %arg19[%c16_44, %c0_45] : memref<32x64xf32, #tpu.memory_space<vmem>>, vector<16x16xf32>
    tpu.vector_store %arg19[%c16_44, %c0_45], %141 {strides = array<i32>} : memref<32x64xf32, #tpu.memory_space<vmem>>, vector<16x16xf32>,
    %143 = vector.extract_strided_slice %12 {offsets = [16, 16], sizes = [16, 16], strides = [1, 1]} : vector<32x192xf32> to vector<16x16xf32>
    %cst_46 = arith.constant 2.500000e-01 : f32
    %144 = vector.broadcast %cst_46 : f32 to vector<16x16xf32>
    %145 = arith.mulf %143, %144 : vector<16x16xf32>
    %146 = arith.truncf %145 : vector<16x16xf32> to vector<16x16xbf16>
    %147 = vector.extract_strided_slice %12 {offsets = [16, 80], sizes = [16, 16], strides = [1, 1]} : vector<32x192xf32> to vector<16x16xf32>
    %148 = arith.truncf %147 : vector<16x16xf32> to vector<16x16xbf16>
    %149 = vector.extract_strided_slice %12 {offsets = [16, 144], sizes = [16, 16], strides = [1, 1]} : vector<32x192xf32> to vector<16x16xf32>
    %150 = arith.truncf %149 : vector<16x16xf32> to vector<16x16xbf16>
    %cst_47 = arith.constant dense<0.000000e+00> : vector<16x16xf32>
    %151 = tpu.matmul %146, %148, %cst_47 {dimension_numbers = #tpu.dot_dimension_numbers<[1], [1], [0], [0], [0, 0, 1, 0], [], []>} : vector<16x16xbf16>, vector<16x16xbf16>, vector<16x16xf32> -> vector<16x16xf32>
    %152 = vector.broadcast %118 : vector<1x16xf32> to vector<16x16xf32>
    %153 = arith.addf %151, %152 : vector<16x16xf32>
    %cst_48 = arith.constant dense<0xFF800000> : vector<16xf32>
    %154 = vector.multi_reduction <maximumf>, %153, %cst_48 [1] : vector<16x16xf32> to vector<16xf32>
    %155 = vector.shape_cast %154 : vector<16xf32> to vector<16x1xf32>
    %156 = vector.broadcast %155 : vector<16x1xf32> to vector<16x16xf32>
    %157 = arith.subf %153, %156 : vector<16x16xf32>
    %158 = math.exp %157 : vector<16x16xf32>
    %cst_49 = arith.constant dense<0.000000e+00> : vector<16xf32>
    %159 = vector.multi_reduction <add>, %158, %cst_49 [1] : vector<16x16xf32> to vector<16xf32>
    %160 = vector.shape_cast %159 : vector<16xf32> to vector<16x1xf32>
    %161 = tpu.reciprocal %160 {approx = true} : vector<16x1xf32> -> vector<16x1xf32>
    %162 = vector.broadcast %161 : vector<16x1xf32> to vector<16x16xf32>
    %163 = arith.mulf %158, %162 : vector<16x16xf32>
    %164 = arith.truncf %163 : vector<16x16xf32> to vector<16x16xbf16>
    %cst_50 = arith.constant dense<0.000000e+00> : vector<16x16xf32>
    %165 = tpu.matmul %164, %150, %cst_50 {dimension_numbers = #tpu.dot_dimension_numbers<[1], [0], [0], [1], [0, 0, 1, 1], [], []>} : vector<16x16xbf16>, vector<16x16xbf16>, vector<16x16xf32> -> vector<16x16xf32>
    %c16_51 = arith.constant 16 : index
    %c16_52 = arith.constant 16 : index
    %166 = vector.load %arg19[%c16_51, %c16_52] : memref<32x64xf32, #tpu.memory_space<vmem>>, vector<16x16xf32>
    tpu.vector_store %arg19[%c16_51, %c16_52], %165 {strides = array<i32>} : memref<32x64xf32, #tpu.memory_space<vmem>>, vector<16x16xf32>,
    %167 = vector.extract_strided_slice %12 {offsets = [16, 32], sizes = [16, 16], strides = [1, 1]} : vector<32x192xf32> to vector<16x16xf32>
    %cst_53 = arith.constant 2.500000e-01 : f32
    %168 = vector.broadcast %cst_53 : f32 to vector<16x16xf32>
    %169 = arith.mulf %167, %168 : vector<16x16xf32>
    %170 = arith.truncf %169 : vector<16x16xf32> to vector<16x16xbf16>
    %171 = vector.extract_strided_slice %12 {offsets = [16, 96], sizes = [16, 16], strides = [1, 1]} : vector<32x192xf32> to vector<16x16xf32>
    %172 = arith.truncf %171 : vector<16x16xf32> to vector<16x16xbf16>
    %173 = vector.extract_strided_slice %12 {offsets = [16, 160], sizes = [16, 16], strides = [1, 1]} : vector<32x192xf32> to vector<16x16xf32>
    %174 = arith.truncf %173 : vector<16x16xf32> to vector<16x16xbf16>
    %cst_54 = arith.constant dense<0.000000e+00> : vector<16x16xf32>
    %175 = tpu.matmul %170, %172, %cst_54 {dimension_numbers = #tpu.dot_dimension_numbers<[1], [1], [0], [0], [0, 0, 1, 0], [], []>} : vector<16x16xbf16>, vector<16x16xbf16>, vector<16x16xf32> -> vector<16x16xf32>
    %176 = vector.broadcast %118 : vector<1x16xf32> to vector<16x16xf32>
    %177 = arith.addf %175, %176 : vector<16x16xf32>
    %cst_55 = arith.constant dense<0xFF800000> : vector<16xf32>
    %178 = vector.multi_reduction <maximumf>, %177, %cst_55 [1] : vector<16x16xf32> to vector<16xf32>
    %179 = vector.shape_cast %178 : vector<16xf32> to vector<16x1xf32>
    %180 = vector.broadcast %179 : vector<16x1xf32> to vector<16x16xf32>
    %181 = arith.subf %177, %180 : vector<16x16xf32>
    %182 = math.exp %181 : vector<16x16xf32>
    %cst_56 = arith.constant dense<0.000000e+00> : vector<16xf32>
    %183 = vector.multi_reduction <add>, %182, %cst_56 [1] : vector<16x16xf32> to vector<16xf32>
    %184 = vector.shape_cast %183 : vector<16xf32> to vector<16x1xf32>
    %185 = tpu.reciprocal %184 {approx = true} : vector<16x1xf32> -> vector<16x1xf32>
    %186 = vector.broadcast %185 : vector<16x1xf32> to vector<16x16xf32>
    %187 = arith.mulf %182, %186 : vector<16x16xf32>
    %188 = arith.truncf %187 : vector<16x16xf32> to vector<16x16xbf16>
    %cst_57 = arith.constant dense<0.000000e+00> : vector<16x16xf32>
    %189 = tpu.matmul %188, %174, %cst_57 {dimension_numbers = #tpu.dot_dimension_numbers<[1], [0], [0], [1], [0, 0, 1, 1], [], []>} : vector<16x16xbf16>, vector<16x16xbf16>, vector<16x16xf32> -> vector<16x16xf32>
    %c16_58 = arith.constant 16 : index
    %c32_59 = arith.constant 32 : index
    %190 = vector.load %arg19[%c16_58, %c32_59] : memref<32x64xf32, #tpu.memory_space<vmem>>, vector<16x16xf32>
    tpu.vector_store %arg19[%c16_58, %c32_59], %189 {strides = array<i32>} : memref<32x64xf32, #tpu.memory_space<vmem>>, vector<16x16xf32>,
    %191 = vector.extract_strided_slice %12 {offsets = [16, 48], sizes = [16, 16], strides = [1, 1]} : vector<32x192xf32> to vector<16x16xf32>
    %cst_60 = arith.constant 2.500000e-01 : f32
    %192 = vector.broadcast %cst_60 : f32 to vector<16x16xf32>
    %193 = arith.mulf %191, %192 : vector<16x16xf32>
    %194 = arith.truncf %193 : vector<16x16xf32> to vector<16x16xbf16>
    %195 = vector.extract_strided_slice %12 {offsets = [16, 112], sizes = [16, 16], strides = [1, 1]} : vector<32x192xf32> to vector<16x16xf32>
    %196 = arith.truncf %195 : vector<16x16xf32> to vector<16x16xbf16>
    %197 = vector.extract_strided_slice %12 {offsets = [16, 176], sizes = [16, 16], strides = [1, 1]} : vector<32x192xf32> to vector<16x16xf32>
    %198 = arith.truncf %197 : vector<16x16xf32> to vector<16x16xbf16>
    %cst_61 = arith.constant dense<0.000000e+00> : vector<16x16xf32>
    %199 = tpu.matmul %194, %196, %cst_61 {dimension_numbers = #tpu.dot_dimension_numbers<[1], [1], [0], [0], [0, 0, 1, 0], [], []>} : vector<16x16xbf16>, vector<16x16xbf16>, vector<16x16xf32> -> vector<16x16xf32>
    %200 = vector.broadcast %118 : vector<1x16xf32> to vector<16x16xf32>
    %201 = arith.addf %199, %200 : vector<16x16xf32>
    %cst_62 = arith.constant dense<0xFF800000> : vector<16xf32>
    %202 = vector.multi_reduction <maximumf>, %201, %cst_62 [1] : vector<16x16xf32> to vector<16xf32>
    %203 = vector.shape_cast %202 : vector<16xf32> to vector<16x1xf32>
    %204 = vector.broadcast %203 : vector<16x1xf32> to vector<16x16xf32>
    %205 = arith.subf %201, %204 : vector<16x16xf32>
    %206 = math.exp %205 : vector<16x16xf32>
    %cst_63 = arith.constant dense<0.000000e+00> : vector<16xf32>
    %207 = vector.multi_reduction <add>, %206, %cst_63 [1] : vector<16x16xf32> to vector<16xf32>
    %208 = vector.shape_cast %207 : vector<16xf32> to vector<16x1xf32>
    %209 = tpu.reciprocal %208 {approx = true} : vector<16x1xf32> -> vector<16x1xf32>
    %210 = vector.broadcast %209 : vector<16x1xf32> to vector<16x16xf32>
    %211 = arith.mulf %206, %210 : vector<16x16xf32>
    %212 = arith.truncf %211 : vector<16x16xf32> to vector<16x16xbf16>
    %cst_64 = arith.constant dense<0.000000e+00> : vector<16x16xf32>
    %213 = tpu.matmul %212, %198, %cst_64 {dimension_numbers = #tpu.dot_dimension_numbers<[1], [0], [0], [1], [0, 0, 1, 1], [], []>} : vector<16x16xbf16>, vector<16x16xbf16>, vector<16x16xf32> -> vector<16x16xf32>
    %c16_65 = arith.constant 16 : index
    %c48_66 = arith.constant 48 : index
    %214 = vector.load %arg19[%c16_65, %c48_66] : memref<32x64xf32, #tpu.memory_space<vmem>>, vector<16x16xf32>
    tpu.vector_store %arg19[%c16_65, %c48_66], %213 {strides = array<i32>} : memref<32x64xf32, #tpu.memory_space<vmem>>, vector<16x16xf32>,
    %c0_67 = arith.constant 0 : index
    %c0_68 = arith.constant 0 : index
    %215 = vector.load %arg19[%c0_67, %c0_68] : memref<32x64xf32, #tpu.memory_space<vmem>>, vector<32x64xf32>
    %216 = arith.truncf %215 : vector<32x64xf32> to vector<32x64xbf16>
    %c0_69 = arith.constant 0 : index
    %c0_70 = arith.constant 0 : index
    %c0_71 = arith.constant 0 : index
    %217 = vector.load %arg7[%c0_69, %c0_70, %c0_71] : memref<1x64x64xbf16, #tpu.memory_space<vmem>>, vector<1x64x64xbf16>
    %218 = vector.shape_cast %217 : vector<1x64x64xbf16> to vector<64x64xbf16>
    %cst_72 = arith.constant dense<0.000000e+00> : vector<32x64xf32>
    %219 = tpu.matmul %216, %218, %cst_72 {dimension_numbers = #tpu.dot_dimension_numbers<[1], [0], [0], [1], [0, 0, 1, 1], [], []>} : vector<32x64xbf16>, vector<64x64xbf16>, vector<32x64xf32> -> vector<32x64xf32>
    %c0_73 = arith.constant 0 : index
    %c0_74 = arith.constant 0 : index
    %c0_75 = arith.constant 0 : index
    %220 = vector.load %arg8[%c0_73, %c0_74, %c0_75] : memref<1x1x64xf32, #tpu.memory_space<vmem>>, vector<1x1x64xf32>
    %221 = vector.shape_cast %220 : vector<1x1x64xf32> to vector<1x64xf32>
    %222 = vector.broadcast %221 : vector<1x64xf32> to vector<32x64xf32>
    %223 = arith.addf %219, %222 : vector<32x64xf32>
    %224 = arith.addf %223, %3 : vector<32x64xf32>
    %c0_76 = arith.constant 0 : index
    %c0_77 = arith.constant 0 : index
    %c0_78 = arith.constant 0 : index
    %225 = vector.load %arg9[%c0_76, %c0_77, %c0_78] : memref<1x1x64xf32, #tpu.memory_space<vmem>>, vector<1x1x64xf32>
    %226 = vector.shape_cast %225 : vector<1x1x64xf32> to vector<1x64xf32>
    %c0_79 = arith.constant 0 : index
    %c0_80 = arith.constant 0 : index
    %c0_81 = arith.constant 0 : index
    %227 = vector.load %arg10[%c0_79, %c0_80, %c0_81] : memref<1x1x64xf32, #tpu.memory_space<vmem>>, vector<1x1x64xf32>
    %228 = vector.shape_cast %227 : vector<1x1x64xf32> to vector<1x64xf32>
    %cst_82 = arith.constant dense<0.000000e+00> : vector<32xf32>
    %229 = vector.multi_reduction <add>, %224, %cst_82 [1] : vector<32x64xf32> to vector<32xf32>
    %230 = vector.shape_cast %229 : vector<32xf32> to vector<32x1xf32>
    %cst_83 = arith.constant 6.400000e+01 : f32
    %231 = vector.broadcast %cst_83 : f32 to vector<32x1xf32>
    %232 = arith.divf %230, %231 : vector<32x1xf32>
    %233 = vector.broadcast %232 : vector<32x1xf32> to vector<32x64xf32>
    %234 = arith.subf %224, %233 : vector<32x64xf32>
    %235 = arith.mulf %234, %234 : vector<32x64xf32>
    %cst_84 = arith.constant dense<0.000000e+00> : vector<32xf32>
    %236 = vector.multi_reduction <add>, %235, %cst_84 [1] : vector<32x64xf32> to vector<32xf32>
    %237 = vector.shape_cast %236 : vector<32xf32> to vector<32x1xf32>
    %cst_85 = arith.constant 6.400000e+01 : f32
    %238 = vector.broadcast %cst_85 : f32 to vector<32x1xf32>
    %239 = arith.divf %237, %238 : vector<32x1xf32>
    %cst_86 = arith.constant 9.99999996E-13 : f32
    %240 = vector.broadcast %cst_86 : f32 to vector<32x1xf32>
    %241 = arith.addf %239, %240 : vector<32x1xf32>
    %242 = math.rsqrt %241 : vector<32x1xf32>
    %243 = vector.broadcast %242 : vector<32x1xf32> to vector<32x64xf32>
    %244 = arith.mulf %234, %243 : vector<32x64xf32>
    %245 = vector.broadcast %226 : vector<1x64xf32> to vector<32x64xf32>
    %246 = arith.mulf %244, %245 : vector<32x64xf32>
    %247 = vector.broadcast %228 : vector<1x64xf32> to vector<32x64xf32>
    %248 = arith.addf %246, %247 : vector<32x64xf32>
    %249 = arith.truncf %248 : vector<32x64xf32> to vector<32x64xbf16>
    %c0_87 = arith.constant 0 : index
    %c0_88 = arith.constant 0 : index
    %c0_89 = arith.constant 0 : index
    %250 = vector.load %arg11[%c0_87, %c0_88, %c0_89] : memref<1x64x128xbf16, #tpu.memory_space<vmem>>, vector<1x64x128xbf16>
    %251 = vector.shape_cast %250 : vector<1x64x128xbf16> to vector<64x128xbf16>
    %cst_90 = arith.constant dense<0.000000e+00> : vector<32x128xf32>
    %252 = tpu.matmul %249, %251, %cst_90 {dimension_numbers = #tpu.dot_dimension_numbers<[1], [0], [0], [1], [0, 0, 1, 1], [], []>} : vector<32x64xbf16>, vector<64x128xbf16>, vector<32x128xf32> -> vector<32x128xf32>
    %c0_91 = arith.constant 0 : index
    %c0_92 = arith.constant 0 : index
    %c0_93 = arith.constant 0 : index
    %253 = vector.load %arg12[%c0_91, %c0_92, %c0_93] : memref<1x1x128xf32, #tpu.memory_space<vmem>>, vector<1x1x128xf32>
    %254 = vector.shape_cast %253 : vector<1x1x128xf32> to vector<1x128xf32>
    %255 = vector.broadcast %254 : vector<1x128xf32> to vector<32x128xf32>
    %256 = arith.addf %252, %255 : vector<32x128xf32>
    %257 = arith.mulf %256, %256 : vector<32x128xf32>
    %258 = arith.mulf %256, %257 : vector<32x128xf32>
    %cst_94 = arith.constant 4.471500e-02 : f32
    %259 = vector.broadcast %cst_94 : f32 to vector<32x128xf32>
    %260 = arith.mulf %259, %258 : vector<32x128xf32>
    %261 = arith.addf %256, %260 : vector<32x128xf32>
    %cst_95 = arith.constant 0.797884583 : f32
    %262 = vector.broadcast %cst_95 : f32 to vector<32x128xf32>
    %263 = arith.mulf %262, %261 : vector<32x128xf32>
    %264 = math.tanh %263 : vector<32x128xf32>
    %cst_96 = arith.constant 1.000000e+00 : f32
    %265 = vector.broadcast %cst_96 : f32 to vector<32x128xf32>
    %266 = arith.addf %265, %264 : vector<32x128xf32>
    %cst_97 = arith.constant 5.000000e-01 : f32
    %267 = vector.broadcast %cst_97 : f32 to vector<32x128xf32>
    %268 = arith.mulf %267, %266 : vector<32x128xf32>
    %269 = arith.mulf %256, %268 : vector<32x128xf32>
    %270 = arith.truncf %269 : vector<32x128xf32> to vector<32x128xbf16>
    %c0_98 = arith.constant 0 : index
    %c0_99 = arith.constant 0 : index
    %c0_100 = arith.constant 0 : index
    %271 = vector.load %arg13[%c0_98, %c0_99, %c0_100] : memref<1x128x64xbf16, #tpu.memory_space<vmem>>, vector<1x128x64xbf16>
    %272 = vector.shape_cast %271 : vector<1x128x64xbf16> to vector<128x64xbf16>
    %cst_101 = arith.constant dense<0.000000e+00> : vector<32x64xf32>
    %273 = tpu.matmul %270, %272, %cst_101 {dimension_numbers = #tpu.dot_dimension_numbers<[1], [0], [0], [1], [0, 0, 1, 1], [], []>} : vector<32x128xbf16>, vector<128x64xbf16>, vector<32x64xf32> -> vector<32x64xf32>
    %c0_102 = arith.constant 0 : index
    %c0_103 = arith.constant 0 : index
    %c0_104 = arith.constant 0 : index
    %274 = vector.load %arg14[%c0_102, %c0_103, %c0_104] : memref<1x1x64xf32, #tpu.memory_space<vmem>>, vector<1x1x64xf32>
    %275 = vector.shape_cast %274 : vector<1x1x64xf32> to vector<1x64xf32>
    %276 = vector.broadcast %275 : vector<1x64xf32> to vector<32x64xf32>
    %277 = arith.addf %273, %276 : vector<32x64xf32>
    %278 = arith.addf %277, %248 : vector<32x64xf32>
    %c0_105 = arith.constant 0 : index
    %c0_106 = arith.constant 0 : index
    %c0_107 = arith.constant 0 : index
    %279 = vector.load %arg15[%c0_105, %c0_106, %c0_107] : memref<1x1x64xf32, #tpu.memory_space<vmem>>, vector<1x1x64xf32>
    %280 = vector.shape_cast %279 : vector<1x1x64xf32> to vector<1x64xf32>
    %c0_108 = arith.constant 0 : index
    %c0_109 = arith.constant 0 : index
    %c0_110 = arith.constant 0 : index
    %281 = vector.load %arg16[%c0_108, %c0_109, %c0_110] : memref<1x1x64xf32, #tpu.memory_space<vmem>>, vector<1x1x64xf32>
    %282 = vector.shape_cast %281 : vector<1x1x64xf32> to vector<1x64xf32>
    %cst_111 = arith.constant dense<0.000000e+00> : vector<32xf32>
    %283 = vector.multi_reduction <add>, %278, %cst_111 [1] : vector<32x64xf32> to vector<32xf32>
    %284 = vector.shape_cast %283 : vector<32xf32> to vector<32x1xf32>
    %cst_112 = arith.constant 6.400000e+01 : f32
    %285 = vector.broadcast %cst_112 : f32 to vector<32x1xf32>
    %286 = arith.divf %284, %285 : vector<32x1xf32>
    %287 = vector.broadcast %286 : vector<32x1xf32> to vector<32x64xf32>
    %288 = arith.subf %278, %287 : vector<32x64xf32>
    %289 = arith.mulf %288, %288 : vector<32x64xf32>
    %cst_113 = arith.constant dense<0.000000e+00> : vector<32xf32>
    %290 = vector.multi_reduction <add>, %289, %cst_113 [1] : vector<32x64xf32> to vector<32xf32>
    %291 = vector.shape_cast %290 : vector<32xf32> to vector<32x1xf32>
    %cst_114 = arith.constant 6.400000e+01 : f32
    %292 = vector.broadcast %cst_114 : f32 to vector<32x1xf32>
    %293 = arith.divf %291, %292 : vector<32x1xf32>
    %cst_115 = arith.constant 9.99999996E-13 : f32
    %294 = vector.broadcast %cst_115 : f32 to vector<32x1xf32>
    %295 = arith.addf %293, %294 : vector<32x1xf32>
    %296 = math.rsqrt %295 : vector<32x1xf32>
    %297 = vector.broadcast %296 : vector<32x1xf32> to vector<32x64xf32>
    %298 = arith.mulf %288, %297 : vector<32x64xf32>
    %299 = vector.broadcast %280 : vector<1x64xf32> to vector<32x64xf32>
    %300 = arith.mulf %298, %299 : vector<32x64xf32>
    %301 = vector.broadcast %282 : vector<1x64xf32> to vector<32x64xf32>
    %302 = arith.addf %300, %301 : vector<32x64xf32>
    %c0_116 = arith.constant 0 : index
    %c0_117 = arith.constant 0 : index
    %303 = vector.load %arg18[%c0_116, %c0_117] : memref<32x64xf32, #tpu.memory_space<vmem>>, vector<32x64xf32>
    tpu.vector_store %arg18[%c0_116, %c0_117], %302 {strides = array<i32>} : memref<32x64xf32, #tpu.memory_space<vmem>>, vector<32x64xf32>,
    %c1_i32 = arith.constant 1 : i32
    %304 = arith.cmpi eq, %arg0, %c1_i32 : i32
    %305 = arith.extui %304 : i1 to i32
    %c0_i32_118 = arith.constant 0 : i32
    %306 = arith.cmpi ne, %305, %c0_i32_118 : i32
    scf.if %306 {
      %307 = vector.extract_strided_slice %4 {offsets = [0, 0], sizes = [1, 16], strides = [1, 1]} : vector<2x16xf32> to vector<1x16xf32>
      %308 = vector.extract_strided_slice %302 {offsets = [0, 0], sizes = [16, 64], strides = [1, 1]} : vector<32x64xf32> to vector<16x64xf32>
      %cst_119 = arith.constant dense<0.000000e+00> : vector<1x64xf32>
      %309 = tpu.matmul %307, %308, %cst_119 {dimension_numbers = #tpu.dot_dimension_numbers<[1], [0], [0], [1], [0, 0, 1, 1], [], []>} : vector<1x16xf32>, vector<16x64xf32>, vector<1x64xf32> -> vector<1x64xf32>
      %cst_120 = arith.constant dense<0.000000e+00> : vector<1xf32>
      %310 = vector.multi_reduction <add>, %307, %cst_120 [1] : vector<1x16xf32> to vector<1xf32>
      %311 = vector.shape_cast %310 : vector<1xf32> to vector<1x1xf32>
      %cst_121 = arith.constant 9.99999971E-10 : f32
      %312 = vector.broadcast %cst_121 : f32 to vector<1x1xf32>
      %313 = arith.maximumf %311, %312 : vector<1x1xf32>
      %314 = vector.broadcast %313 : vector<1x1xf32> to vector<1x64xf32>
      %315 = arith.divf %309, %314 : vector<1x64xf32>
      %c0_122 = arith.constant 0 : index
      %c0_123 = arith.constant 0 : index
      %316 = vector.load %arg17[%c0_122, %c0_123] : memref<2x64xf32, #tpu.memory_space<vmem>>, vector<1x64xf32>
      tpu.vector_store %arg17[%c0_122, %c0_123], %315 {strides = array<i32>} : memref<2x64xf32, #tpu.memory_space<vmem>>, vector<1x64xf32>,
      %317 = vector.extract_strided_slice %4 {offsets = [1, 0], sizes = [1, 16], strides = [1, 1]} : vector<2x16xf32> to vector<1x16xf32>
      %318 = vector.extract_strided_slice %302 {offsets = [16, 0], sizes = [16, 64], strides = [1, 1]} : vector<32x64xf32> to vector<16x64xf32>
      %cst_124 = arith.constant dense<0.000000e+00> : vector<1x64xf32>
      %319 = tpu.matmul %317, %318, %cst_124 {dimension_numbers = #tpu.dot_dimension_numbers<[1], [0], [0], [1], [0, 0, 1, 1], [], []>} : vector<1x16xf32>, vector<16x64xf32>, vector<1x64xf32> -> vector<1x64xf32>
      %cst_125 = arith.constant dense<0.000000e+00> : vector<1xf32>
      %320 = vector.multi_reduction <add>, %317, %cst_125 [1] : vector<1x16xf32> to vector<1xf32>
      %321 = vector.shape_cast %320 : vector<1xf32> to vector<1x1xf32>
      %cst_126 = arith.constant 9.99999971E-10 : f32
      %322 = vector.broadcast %cst_126 : f32 to vector<1x1xf32>
      %323 = arith.maximumf %321, %322 : vector<1x1xf32>
      %324 = vector.broadcast %323 : vector<1x1xf32> to vector<1x64xf32>
      %325 = arith.divf %319, %324 : vector<1x64xf32>
      %c1 = arith.constant 1 : index
      %c0_127 = arith.constant 0 : index
      %326 = vector.load %arg17[%c1, %c0_127] : memref<2x64xf32, #tpu.memory_space<vmem>>, vector<1x64xf32>
      tpu.vector_store %arg17[%c1, %c0_127], %325 {strides = array<i32>} : memref<2x64xf32, #tpu.memory_space<vmem>>, vector<1x64xf32>,
    } else {
    }
    return
  }
  func.func @transform_0(%arg0: i32) -> (i32, i32) {
    %c0_i32 = arith.constant 0 : i32
    %c0_i32_0 = arith.constant 0 : i32
    %c0_i32_1 = arith.constant 0 : i32
    return %c0_i32, %c0_i32_0 : i32, i32
  }
  func.func @transform_1(%arg0: i32) -> (i32, i32) {
    %c0_i32 = arith.constant 0 : i32
    %c0_i32_0 = arith.constant 0 : i32
    %c0_i32_1 = arith.constant 0 : i32
    return %c0_i32, %c0_i32_0 : i32, i32
  }
  func.func @transform_2(%arg0: i32) -> (i32, i32) {
    %c0_i32 = arith.constant 0 : i32
    %c0_i32_0 = arith.constant 0 : i32
    %c0_i32_1 = arith.constant 0 : i32
    return %c0_i32, %c0_i32_0 : i32, i32
  }
  func.func @transform_3(%arg0: i32) -> (i32, i32) {
    %c0_i32 = arith.constant 0 : i32
    %c0_i32_0 = arith.constant 0 : i32
    %c0_i32_1 = arith.constant 0 : i32
    return %c0_i32, %c0_i32_0 : i32, i32
  }
  func.func @transform_4(%arg0: i32) -> (i32, i32, i32) {
    %c0_i32 = arith.constant 0 : i32
    %c0_i32_0 = arith.constant 0 : i32
    %c0_i32_1 = arith.constant 0 : i32
    return %arg0, %c0_i32, %c0_i32_0 : i32, i32, i32
  }
  func.func @transform_5(%arg0: i32) -> (i32, i32, i32) {
    %c0_i32 = arith.constant 0 : i32
    %c0_i32_0 = arith.constant 0 : i32
    %c0_i32_1 = arith.constant 0 : i32
    return %arg0, %c0_i32, %c0_i32_0 : i32, i32, i32
  }
  func.func @transform_6(%arg0: i32) -> (i32, i32, i32) {
    %c0_i32 = arith.constant 0 : i32
    %c0_i32_0 = arith.constant 0 : i32
    %c0_i32_1 = arith.constant 0 : i32
    return %arg0, %c0_i32, %c0_i32_0 : i32, i32, i32
  }
  func.func @transform_7(%arg0: i32) -> (i32, i32, i32) {
    %c0_i32 = arith.constant 0 : i32
    %c0_i32_0 = arith.constant 0 : i32
    %c0_i32_1 = arith.constant 0 : i32
    return %arg0, %c0_i32, %c0_i32_0 : i32, i32, i32
  }
  func.func @transform_8(%arg0: i32) -> (i32, i32, i32) {
    %c0_i32 = arith.constant 0 : i32
    %c0_i32_0 = arith.constant 0 : i32
    %c0_i32_1 = arith.constant 0 : i32
    return %arg0, %c0_i32, %c0_i32_0 : i32, i32, i32
  }
  func.func @transform_9(%arg0: i32) -> (i32, i32, i32) {
    %c0_i32 = arith.constant 0 : i32
    %c0_i32_0 = arith.constant 0 : i32
    %c0_i32_1 = arith.constant 0 : i32
    return %arg0, %c0_i32, %c0_i32_0 : i32, i32, i32
  }
  func.func @transform_10(%arg0: i32) -> (i32, i32, i32) {
    %c0_i32 = arith.constant 0 : i32
    %c0_i32_0 = arith.constant 0 : i32
    %c0_i32_1 = arith.constant 0 : i32
    return %arg0, %c0_i32, %c0_i32_0 : i32, i32, i32
  }
  func.func @transform_11(%arg0: i32) -> (i32, i32, i32) {
    %c0_i32 = arith.constant 0 : i32
    %c0_i32_0 = arith.constant 0 : i32
    %c0_i32_1 = arith.constant 0 : i32
    return %arg0, %c0_i32, %c0_i32_0 : i32, i32, i32
  }
  func.func @transform_12(%arg0: i32) -> (i32, i32, i32) {
    %c0_i32 = arith.constant 0 : i32
    %c0_i32_0 = arith.constant 0 : i32
    %c0_i32_1 = arith.constant 0 : i32
    return %arg0, %c0_i32, %c0_i32_0 : i32, i32, i32
  }
  func.func @transform_13(%arg0: i32) -> (i32, i32, i32) {
    %c0_i32 = arith.constant 0 : i32
    %c0_i32_0 = arith.constant 0 : i32
    %c0_i32_1 = arith.constant 0 : i32
    return %arg0, %c0_i32, %c0_i32_0 : i32, i32, i32
  }
  func.func @transform_14(%arg0: i32) -> (i32, i32, i32) {
    %c0_i32 = arith.constant 0 : i32
    %c0_i32_0 = arith.constant 0 : i32
    %c0_i32_1 = arith.constant 0 : i32
    return %arg0, %c0_i32, %c0_i32_0 : i32, i32, i32
  }
  func.func @transform_15(%arg0: i32) -> (i32, i32, i32) {
    %c0_i32 = arith.constant 0 : i32
    %c0_i32_0 = arith.constant 0 : i32
    %c0_i32_1 = arith.constant 0 : i32
    return %arg0, %c0_i32, %c0_i32_0 : i32, i32, i32
  }
  func.func @transform_16(%arg0: i32) -> (i32, i32) {
    %c0_i32 = arith.constant 0 : i32
    %c0_i32_0 = arith.constant 0 : i32
    %c0_i32_1 = arith.constant 0 : i32
    return %c0_i32, %c0_i32_0 : i32, i32
  }
}

</mosaic_0001>

<llo_original>
// kernel: encoder_forward.1
$region0: #{encoder_forward.1}
  #allocation0 [shape = 'u32[]', space=smem, size = 0x4, offset = 0x4, fixed_abs, tag = 'smem constant byte address 0x4 - core index']
  #allocation1 [shape = 'u32[144,128]{1,0:T(1,128)}', space=vmem, size = 0x12000, scoped, tag = 'internal scratch']
  #allocation2 [shape = 'f32[32,64]{1,0:T(8,128)}', space=vmem, size = 0x4000, scoped, tag = 'scratch operand']
  #allocation3 [shape = 'f32[32,64]{1,0:T(8,128)}', space=vmem, size = 0x4000, scoped, tag = 'scratch operand']
  %s0 = inlined_call_operand.vmem [shape: f32[32,64], index: 0, kind: input, shape index: {}]
  %s1 = inlined_call_operand.vmem [shape: f32[2,16], index: 1, kind: input, shape index: {}]
  %s2 = inlined_call_operand.vmem [shape: f32[1,64], index: 2, kind: input, shape index: {}]
  %s3 = inlined_call_operand.vmem [shape: f32[1,64], index: 3, kind: input, shape index: {}]
  %s4 = inlined_call_operand.vmem [shape: bf16[2,64,192], index: 4, kind: input, shape index: {}]
  %s5 = inlined_call_operand.vmem [shape: f32[2,1,192], index: 5, kind: input, shape index: {}]
  %s6 = inlined_call_operand.vmem [shape: bf16[2,64,64], index: 6, kind: input, shape index: {}]
  %s7 = inlined_call_operand.vmem [shape: f32[2,1,64], index: 7, kind: input, shape index: {}, may-alias: {7,9,13,15}]
  %s8 = inlined_call_operand.vmem [shape: f32[2,1,64], index: 8, kind: input, shape index: {}, may-alias: {8,14}]
  %s9 = inlined_call_operand.vmem [shape: f32[2,1,64], index: 9, kind: input, shape index: {}, may-alias: {7,9,13,15}]
  %s10 = inlined_call_operand.vmem [shape: bf16[2,64,128], index: 10, kind: input, shape index: {}]
  %s11 = inlined_call_operand.vmem [shape: f32[2,1,128], index: 11, kind: input, shape index: {}]
  %s12 = inlined_call_operand.vmem [shape: bf16[2,128,64], index: 12, kind: input, shape index: {}]
  %s13 = inlined_call_operand.vmem [shape: f32[2,1,64], index: 13, kind: input, shape index: {}, may-alias: {7,9,13,15}]
  %s14 = inlined_call_operand.vmem [shape: f32[2,1,64], index: 14, kind: input, shape index: {}, may-alias: {8,14}]
  %s15 = inlined_call_operand.vmem [shape: f32[2,1,64], index: 15, kind: input, shape index: {}, may-alias: {7,9,13,15}]
  %s16 = inlined_call_operand.hbm [shape: f32[2,64], index: 16, kind: output, shape index: {}]
  %s17 = sld [smem:[#allocation0]]
  $region105: #{encoder_forward.1} parent=0
    _
  %s19 = ssub.s32 1, %s17
  %s20 = scalar_select 0, %s19, %s17
  $region1: #{encoder_forward.1} parent=0
    #allocation4 [shape = 'u8[1024]{0}', space=vmem, size = 0x400, scoped, tag = 'output window, operand 0, single buffered']
    #allocation5 [shape = 's32[2]{0}', space=sflag, size = 0x8, scoped, tag = 'scoped memory for encoder_forward.1']
    %21 = vsyncpa [#allocation5], 0
    loop: start=0, step=1, limit=4
    $region2: #{encoder_forward.1} parent=1 // loop_pre_header
      _
    $region3: #{encoder_forward.1} parent=1 // loop_header
      %s23 = sphi 0, %s27
      %p24 = scmp.ge.s32.totalorder %s23, 4
      %s31 = sphi 0, %s31
      %s33 = sphi 0, %s31
      %s34 = sphi 0, %s33
      %s48 = sphi 0, %s34
      %s52 = sphi 0, %s52
      %s54 = sphi 0, %s52
      %s55 = sphi 0, %s54
      %s69 = sphi 0, %s55
      %s73 = sphi 0, %s73
      %s75 = sphi 0, %s73
      %s76 = sphi 0, %s75
      %s90 = sphi 0, %s76
      %s94 = sphi 0, %s94
      %s96 = sphi 0, %s94
      %s97 = sphi 0, %s96
      %s111 = sphi 0, %s97
      %s117 = sphi 0, %s119
      %s120 = sphi 0, %s117
      %s121 = sphi 0, %s120
      %s137 = sphi 0, %s121
      %s143 = sphi 0, %s145
      %s146 = sphi 0, %s143
      %s147 = sphi 0, %s146
      %s163 = sphi 0, %s147
      %s169 = sphi 0, %s171
      %s172 = sphi 0, %s169
      %s173 = sphi 0, %s172
      %s189 = sphi 0, %s173
      %s195 = sphi 0, %s197
      %s198 = sphi 0, %s195
      %s199 = sphi 0, %s198
      %s215 = sphi 0, %s199
      %s221 = sphi 0, %s223
      %s224 = sphi 0, %s221
      %s225 = sphi 0, %s224
      %s241 = sphi 0, %s225
      %s247 = sphi 0, %s249
      %s250 = sphi 0, %s247
      %s251 = sphi 0, %s250
      %s267 = sphi 0, %s251
      %s273 = sphi 0, %s275
      %s276 = sphi 0, %s273
      %s277 = sphi 0, %s276
      %s293 = sphi 0, %s277
      %s299 = sphi 0, %s301
      %s302 = sphi 0, %s299
      %s303 = sphi 0, %s302
      %s319 = sphi 0, %s303
      %s325 = sphi 0, %s327
      %s328 = sphi 0, %s325
      %s329 = sphi 0, %s328
      %s345 = sphi 0, %s329
      %s351 = sphi 0, %s353
      %s354 = sphi 0, %s351
      %s355 = sphi 0, %s354
      %s371 = sphi 0, %s355
      %s377 = sphi 0, %s379
      %s380 = sphi 0, %s377
      %s381 = sphi 0, %s380
      %s397 = sphi 0, %s381
      %s403 = sphi 0, %s405
      %s406 = sphi 0, %s403
      %s407 = sphi 0, %s406
      %s423 = sphi 0, %s407
      %s427 = sphi 0, %s427
      %s429 = sphi 0, %s427
      %s430 = sphi 0, %s429
      %s444 = sphi 0, %s430
    $region4: #{encoder_forward.1} parent=1 // loop_header_branch
      %26 = sbr.rel (%p24) target = $region8
    $region5: #{encoder_forward.1} parent=1 // loop_body
      %s28 = ssub.s32 %s23, 1
      %s29 = ssub.s32 %s23, 2
      %s30 = sadd.s32 %s23, 1
      %s32 = sadd.s32 %s31, 1
      %p35 = scmp.eq.s32.totalorder %s23, 1
      %p36 = scmp.ne.s32.totalorder %s31, %s33
      %p37 = scmp.eq.s32.totalorder %s23, 0
      %p38 = por %p36, %p37
      %p39 = scmp.ne.s32.totalorder %s31, %s33
      %p40 = scmp.eq.s32.totalorder %s28, 1
      %p41 = por %p39, %p40
      %p42 = scmp.ne.s32.totalorder %s33, %s34
      %p43 = scmp.eq.s32.totalorder %s28, 0
      %p44 = por %p42, %p43
      %p45 = scmp.ne.s32.totalorder %s33, %s34
      %p46 = scmp.eq.s32.totalorder %s29, 1
      %p47 = por %p45, %p46
      %p49 = scmp.ne.s32.totalorder %s34, %s48
      %p50 = scmp.eq.s32.totalorder %s29, 0
      %p51 = por %p49, %p50
      %s53 = sadd.s32 %s52, 1
      %p56 = scmp.eq.s32.totalorder %s23, 1
      %p57 = scmp.ne.s32.totalorder %s52, %s54
      %p58 = scmp.eq.s32.totalorder %s23, 0
      %p59 = por %p57, %p58
      %p60 = scmp.ne.s32.totalorder %s52, %s54
      %p61 = scmp.eq.s32.totalorder %s28, 1
      %p62 = por %p60, %p61
      %p63 = scmp.ne.s32.totalorder %s54, %s55
      %p64 = scmp.eq.s32.totalorder %s28, 0
      %p65 = por %p63, %p64
      %p66 = scmp.ne.s32.totalorder %s54, %s55
      %p67 = scmp.eq.s32.totalorder %s29, 1
      %p68 = por %p66, %p67
      %p70 = scmp.ne.s32.totalorder %s55, %s69
      %p71 = scmp.eq.s32.totalorder %s29, 0
      %p72 = por %p70, %p71
      %s74 = sadd.s32 %s73, 1
      %p77 = scmp.eq.s32.totalorder %s23, 1
      %p78 = scmp.ne.s32.totalorder %s73, %s75
      %p79 = scmp.eq.s32.totalorder %s23, 0
      %p80 = por %p78, %p79
      %p81 = scmp.ne.s32.totalorder %s73, %s75
      %p82 = scmp.eq.s32.totalorder %s28, 1
      %p83 = por %p81, %p82
      %p84 = scmp.ne.s32.totalorder %s75, %s76
      %p85 = scmp.eq.s32.totalorder %s28, 0
      %p86 = por %p84, %p85
      %p87 = scmp.ne.s32.totalorder %s75, %s76
      %p88 = scmp.eq.s32.totalorder %s29, 1
      %p89 = por %p87, %p88
      %p91 = scmp.ne.s32.totalorder %s76, %s90
      %p92 = scmp.eq.s32.totalorder %s29, 0
      %p93 = por %p91, %p92
      %s95 = sadd.s32 %s94, 1
      %p98 = scmp.eq.s32.totalorder %s23, 1
      %p99 = scmp.ne.s32.totalorder %s94, %s96
      %p100 = scmp.eq.s32.totalorder %s23, 0
      %p101 = por %p99, %p100
      %p102 = scmp.ne.s32.totalorder %s94, %s96
      %p103 = scmp.eq.s32.totalorder %s28, 1
      %p104 = por %p102, %p103
      %p105 = scmp.ne.s32.totalorder %s96, %s97
      %p106 = scmp.eq.s32.totalorder %s28, 0
      %p107 = por %p105, %p106
      %p108 = scmp.ne.s32.totalorder %s96, %s97
      %p109 = scmp.eq.s32.totalorder %s29, 1
      %p110 = por %p108, %p109
      %p112 = scmp.ne.s32.totalorder %s97, %s111
      %p113 = scmp.eq.s32.totalorder %s29, 0
      %p114 = por %p112, %p113
      %s115 = ssub.s32 %s23, %s30
      %p116 = scmp.eq.s32.totalorder %s115, 0
      %s118 = sadd.s32 %s117, 1
      %s119 = scalar_select %p116, %s117, %s118
      %p122 = pneg %p116
      %p123 = scmp.eq.s32.totalorder %s23, 1
      %p124 = por %p122, %p123
      %p125 = scmp.ne.s32.totalorder %s117, %s120
      %p126 = scmp.eq.s32.totalorder %s23, 0
      %p127 = por %p125, %p126
      %p128 = scmp.ne.s32.totalorder %s117, %s120
      %p129 = scmp.eq.s32.totalorder %s28, 1
      %p130 = por %p128, %p129
      %p131 = scmp.ne.s32.totalorder %s120, %s121
      %p132 = scmp.eq.s32.totalorder %s28, 0
      %p133 = por %p131, %p132
      %p134 = scmp.ne.s32.totalorder %s120, %s121
      %p135 = scmp.eq.s32.totalorder %s29, 1
      %p136 = por %p134, %p135
      %p138 = scmp.ne.s32.totalorder %s121, %s137
      %p139 = scmp.eq.s32.totalorder %s29, 0
      %p140 = por %p138, %p139
      %s141 = ssub.s32 %s23, %s30
      %p142 = scmp.eq.s32.totalorder %s141, 0
      %s144 = sadd.s32 %s143, 1
      %s145 = scalar_select %p142, %s143, %s144
      %p148 = pneg %p142
      %p149 = scmp.eq.s32.totalorder %s23, 1
      %p150 = por %p148, %p149
      %p151 = scmp.ne.s32.totalorder %s143, %s146
      %p152 = scmp.eq.s32.totalorder %s23, 0
      %p153 = por %p151, %p152
      %p154 = scmp.ne.s32.totalorder %s143, %s146
      %p155 = scmp.eq.s32.totalorder %s28, 1
      %p156 = por %p154, %p155
      %p157 = scmp.ne.s32.totalorder %s146, %s147
      %p158 = scmp.eq.s32.totalorder %s28, 0
      %p159 = por %p157, %p158
      %p160 = scmp.ne.s32.totalorder %s146, %s147
      %p161 = scmp.eq.s32.totalorder %s29, 1
      %p162 = por %p160, %p161
      %p164 = scmp.ne.s32.totalorder %s147, %s163
      %p165 = scmp.eq.s32.totalorder %s29, 0
      %p166 = por %p164, %p165
      %s167 = ssub.s32 %s23, %s30
      %p168 = scmp.eq.s32.totalorder %s167, 0
      %s170 = sadd.s32 %s169, 1
      %s171 = scalar_select %p168, %s169, %s170
      %p174 = pneg %p168
      %p175 = scmp.eq.s32.totalorder %s23, 1
      %p176 = por %p174, %p175
      %p177 = scmp.ne.s32.totalorder %s169, %s172
      %p178 = scmp.eq.s32.totalorder %s23, 0
      %p179 = por %p177, %p178
      %p180 = scmp.ne.s32.totalorder %s169, %s172
      %p181 = scmp.eq.s32.totalorder %s28, 1
      %p182 = por %p180, %p181
      %p183 = scmp.ne.s32.totalorder %s172, %s173
      %p184 = scmp.eq.s32.totalorder %s28, 0
      %p185 = por %p183, %p184
      %p186 = scmp.ne.s32.totalorder %s172, %s173
      %p187 = scmp.eq.s32.totalorder %s29, 1
      %p188 = por %p186, %p187
      %p190 = scmp.ne.s32.totalorder %s173, %s189
      %p191 = scmp.eq.s32.totalorder %s29, 0
      %p192 = por %p190, %p191
      %s193 = ssub.s32 %s23, %s30
      %p194 = scmp.eq.s32.totalorder %s193, 0
      %s196 = sadd.s32 %s195, 1
      %s197 = scalar_select %p194, %s195, %s196
      %p200 = pneg %p194
      %p201 = scmp.eq.s32.totalorder %s23, 1
      %p202 = por %p200, %p201
      %p203 = scmp.ne.s32.totalorder %s195, %s198
      %p204 = scmp.eq.s32.totalorder %s23, 0
      %p205 = por %p203, %p204
      %p206 = scmp.ne.s32.totalorder %s195, %s198
      %p207 = scmp.eq.s32.totalorder %s28, 1
      %p208 = por %p206, %p207
      %p209 = scmp.ne.s32.totalorder %s198, %s199
      %p210 = scmp.eq.s32.totalorder %s28, 0
      %p211 = por %p209, %p210
      %p212 = scmp.ne.s32.totalorder %s198, %s199
      %p213 = scmp.eq.s32.totalorder %s29, 1
      %p214 = por %p212, %p213
      %p216 = scmp.ne.s32.totalorder %s199, %s215
      %p217 = scmp.eq.s32.totalorder %s29, 0
      %p218 = por %p216, %p217
      %s219 = ssub.s32 %s23, %s30
      %p220 = scmp.eq.s32.totalorder %s219, 0
      %s222 = sadd.s32 %s221, 1
      %s223 = scalar_select %p220, %s221, %s222
      %p226 = pneg %p220
      %p227 = scmp.eq.s32.totalorder %s23, 1
      %p228 = por %p226, %p227
      %p229 = scmp.ne.s32.totalorder %s221, %s224
      %p230 = scmp.eq.s32.totalorder %s23, 0
      %p231 = por %p229, %p230
      %p232 = scmp.ne.s32.totalorder %s221, %s224
      %p233 = scmp.eq.s32.totalorder %s28, 1
      %p234 = por %p232, %p233
      %p235 = scmp.ne.s32.totalorder %s224, %s225
      %p236 = scmp.eq.s32.totalorder %s28, 0
      %p237 = por %p235, %p236
      %p238 = scmp.ne.s32.totalorder %s224, %s225
      %p239 = scmp.eq.s32.totalorder %s29, 1
      %p240 = por %p238, %p239
      %p242 = scmp.ne.s32.totalorder %s225, %s241
      %p243 = scmp.eq.s32.totalorder %s29, 0
      %p244 = por %p242, %p243
      %s245 = ssub.s32 %s23, %s30
      %p246 = scmp.eq.s32.totalorder %s245, 0
      %s248 = sadd.s32 %s247, 1
      %s249 = scalar_select %p246, %s247, %s248
      %p252 = pneg %p246
      %p253 = scmp.eq.s32.totalorder %s23, 1
      %p254 = por %p252, %p253
      %p255 = scmp.ne.s32.totalorder %s247, %s250
      %p256 = scmp.eq.s32.totalorder %s23, 0
      %p257 = por %p255, %p256
      %p258 = scmp.ne.s32.totalorder %s247, %s250
      %p259 = scmp.eq.s32.totalorder %s28, 1
      %p260 = por %p258, %p259
      %p261 = scmp.ne.s32.totalorder %s250, %s251
      %p262 = scmp.eq.s32.totalorder %s28, 0
      %p263 = por %p261, %p262
      %p264 = scmp.ne.s32.totalorder %s250, %s251
      %p265 = scmp.eq.s32.totalorder %s29, 1
      %p266 = por %p264, %p265
      %p268 = scmp.ne.s32.totalorder %s251, %s267
      %p269 = scmp.eq.s32.totalorder %s29, 0
      %p270 = por %p268, %p269
      %s271 = ssub.s32 %s23, %s30
      %p272 = scmp.eq.s32.totalorder %s271, 0
      %s274 = sadd.s32 %s273, 1
      %s275 = scalar_select %p272, %s273, %s274
      %p278 = pneg %p272
      %p279 = scmp.eq.s32.totalorder %s23, 1
      %p280 = por %p278, %p279
      %p281 = scmp.ne.s32.totalorder %s273, %s276
      %p282 = scmp.eq.s32.totalorder %s23, 0
      %p283 = por %p281, %p282
      %p284 = scmp.ne.s32.totalorder %s273, %s276
      %p285 = scmp.eq.s32.totalorder %s28, 1
      %p286 = por %p284, %p285
      %p287 = scmp.ne.s32.totalorder %s276, %s277
      %p288 = scmp.eq.s32.totalorder %s28, 0
      %p289 = por %p287, %p288
      %p290 = scmp.ne.s32.totalorder %s276, %s277
      %p291 = scmp.eq.s32.totalorder %s29, 1
      %p292 = por %p290, %p291
      %p294 = scmp.ne.s32.totalorder %s277, %s293
      %p295 = scmp.eq.s32.totalorder %s29, 0
      %p296 = por %p294, %p295
      %s297 = ssub.s32 %s23, %s30
      %p298 = scmp.eq.s32.totalorder %s297, 0
      %s300 = sadd.s32 %s299, 1
      %s301 = scalar_select %p298, %s299, %s300
      %p304 = pneg %p298
      %p305 = scmp.eq.s32.totalorder %s23, 1
      %p306 = por %p304, %p305
      %p307 = scmp.ne.s32.totalorder %s299, %s302
      %p308 = scmp.eq.s32.totalorder %s23, 0
      %p309 = por %p307, %p308
      %p310 = scmp.ne.s32.totalorder %s299, %s302
      %p311 = scmp.eq.s32.totalorder %s28, 1
      %p312 = por %p310, %p311
      %p313 = scmp.ne.s32.totalorder %s302, %s303
      %p314 = scmp.eq.s32.totalorder %s28, 0
      %p315 = por %p313, %p314
      %p316 = scmp.ne.s32.totalorder %s302, %s303
      %p317 = scmp.eq.s32.totalorder %s29, 1
      %p318 = por %p316, %p317
      %p320 = scmp.ne.s32.totalorder %s303, %s319
      %p321 = scmp.eq.s32.totalorder %s29, 0
      %p322 = por %p320, %p321
      %s323 = ssub.s32 %s23, %s30
      %p324 = scmp.eq.s32.totalorder %s323, 0
      %s326 = sadd.s32 %s325, 1
      %s327 = scalar_select %p324, %s325, %s326
      %p330 = pneg %p324
      %p331 = scmp.eq.s32.totalorder %s23, 1
      %p332 = por %p330, %p331
      %p333 = scmp.ne.s32.totalorder %s325, %s328
      %p334 = scmp.eq.s32.totalorder %s23, 0
      %p335 = por %p333, %p334
      %p336 = scmp.ne.s32.totalorder %s325, %s328
      %p337 = scmp.eq.s32.totalorder %s28, 1
      %p338 = por %p336, %p337
      %p339 = scmp.ne.s32.totalorder %s328, %s329
      %p340 = scmp.eq.s32.totalorder %s28, 0
      %p341 = por %p339, %p340
      %p342 = scmp.ne.s32.totalorder %s328, %s329
      %p343 = scmp.eq.s32.totalorder %s29, 1
      %p344 = por %p342, %p343
      %p346 = scmp.ne.s32.totalorder %s329, %s345
      %p347 = scmp.eq.s32.totalorder %s29, 0
      %p348 = por %p346, %p347
      %s349 = ssub.s32 %s23, %s30
      %p350 = scmp.eq.s32.totalorder %s349, 0
      %s352 = sadd.s32 %s351, 1
      %s353 = scalar_select %p350, %s351, %s352
      %p356 = pneg %p350
      %p357 = scmp.eq.s32.totalorder %s23, 1
      %p358 = por %p356, %p357
      %p359 = scmp.ne.s32.totalorder %s351, %s354
      %p360 = scmp.eq.s32.totalorder %s23, 0
      %p361 = por %p359, %p360
      %p362 = scmp.ne.s32.totalorder %s351, %s354
      %p363 = scmp.eq.s32.totalorder %s28, 1
      %p364 = por %p362, %p363
      %p365 = scmp.ne.s32.totalorder %s354, %s355
      %p366 = scmp.eq.s32.totalorder %s28, 0
      %p367 = por %p365, %p366
      %p368 = scmp.ne.s32.totalorder %s354, %s355
      %p369 = scmp.eq.s32.totalorder %s29, 1
      %p370 = por %p368, %p369
      %p372 = scmp.ne.s32.totalorder %s355, %s371
      %p373 = scmp.eq.s32.totalorder %s29, 0
      %p374 = por %p372, %p373
      %s375 = ssub.s32 %s23, %s30
      %p376 = scmp.eq.s32.totalorder %s375, 0
      %s378 = sadd.s32 %s377, 1
      %s379 = scalar_select %p376, %s377, %s378
      %p382 = pneg %p376
      %p383 = scmp.eq.s32.totalorder %s23, 1
      %p384 = por %p382, %p383
      %p385 = scmp.ne.s32.totalorder %s377, %s380
      %p386 = scmp.eq.s32.totalorder %s23, 0
      %p387 = por %p385, %p386
      %p388 = scmp.ne.s32.totalorder %s377, %s380
      %p389 = scmp.eq.s32.totalorder %s28, 1
      %p390 = por %p388, %p389
      %p391 = scmp.ne.s32.totalorder %s380, %s381
      %p392 = scmp.eq.s32.totalorder %s28, 0
      %p393 = por %p391, %p392
      %p394 = scmp.ne.s32.totalorder %s380, %s381
      %p395 = scmp.eq.s32.totalorder %s29, 1
      %p396 = por %p394, %p395
      %p398 = scmp.ne.s32.totalorder %s381, %s397
      %p399 = scmp.eq.s32.totalorder %s29, 0
      %p400 = por %p398, %p399
      %s401 = ssub.s32 %s23, %s30
      %p402 = scmp.eq.s32.totalorder %s401, 0
      %s404 = sadd.s32 %s403, 1
      %s405 = scalar_select %p402, %s403, %s404
      %p408 = pneg %p402
      %p409 = scmp.eq.s32.totalorder %s23, 1
      %p410 = por %p408, %p409
      %p411 = scmp.ne.s32.totalorder %s403, %s406
      %p412 = scmp.eq.s32.totalorder %s23, 0
      %p413 = por %p411, %p412
      %p414 = scmp.ne.s32.totalorder %s403, %s406
      %p415 = scmp.eq.s32.totalorder %s28, 1
      %p416 = por %p414, %p415
      %p417 = scmp.ne.s32.totalorder %s406, %s407
      %p418 = scmp.eq.s32.totalorder %s28, 0
      %p419 = por %p417, %p418
      %p420 = scmp.ne.s32.totalorder %s406, %s407
      %p421 = scmp.eq.s32.totalorder %s29, 1
      %p422 = por %p420, %p421
      %p424 = scmp.ne.s32.totalorder %s407, %s423
      %p425 = scmp.eq.s32.totalorder %s29, 0
      %p426 = por %p424, %p425
      %s428 = sadd.s32 %s427, 1
      %p431 = scmp.eq.s32.totalorder %s23, 1
      %p432 = scmp.ne.s32.totalorder %s427, %s429
      %p433 = scmp.eq.s32.totalorder %s23, 0
      %p434 = por %p432, %p433
      %p435 = scmp.ne.s32.totalorder %s427, %s429
      %p436 = scmp.eq.s32.totalorder %s28, 1
      %p437 = por %p435, %p436
      %p438 = scmp.ne.s32.totalorder %s429, %s430
      %p439 = scmp.eq.s32.totalorder %s28, 0
      %p440 = por %p438, %p439
      %p441 = scmp.ne.s32.totalorder %s429, %s430
      %p442 = scmp.eq.s32.totalorder %s29, 1
      %p443 = por %p441, %p442
      %p445 = scmp.ne.s32.totalorder %s430, %s444
      %p446 = scmp.eq.s32.totalorder %s29, 0
      %p447 = por %p445, %p446
      %p448 = scmp.le.s32.totalorder 1, %s23
      %p449 = scmp.lt.s32.totalorder %s23, 3
      %p450 = pnand %p448, %p449
      %p451 = pneg %p450
      // Predicated region
      $region9: #{encoder_forward.1} parent=5 // pred_check
        _
      $region10: #{encoder_forward.1} parent=5 // pred_check_branch
        %453 = sbr.rel (%p450) target = $region12
      $region11: #{encoder_forward.1} parent=5 // pred_region
        %s454 = ssub.s32 %s23, 1
        // Predicated region
        $region13: #{encoder_forward.1} parent=11 // pred_check
          %p455 = pneg %p44
        $region14: #{encoder_forward.1} parent=11 // pred_check_branch
          %457 = sbr.rel (%p455) target = $region16
        $region15: #{encoder_forward.1} parent=11 // pred_region
          _
        $region16: #{encoder_forward.1} parent=11 // pred_fallthru
          _
        // Predicated region
        $region17: #{encoder_forward.1} parent=11 // pred_check
          %p458 = pneg %p65
        $region18: #{encoder_forward.1} parent=11 // pred_check_branch
          %460 = sbr.rel (%p458) target = $region20
        $region19: #{encoder_forward.1} parent=11 // pred_region
          _
        $region20: #{encoder_forward.1} parent=11 // pred_fallthru
          _
        // Predicated region
        $region21: #{encoder_forward.1} parent=11 // pred_check
          %p461 = pneg %p86
        $region22: #{encoder_forward.1} parent=11 // pred_check_branch
          %463 = sbr.rel (%p461) target = $region24
        $region23: #{encoder_forward.1} parent=11 // pred_region
          _
        $region24: #{encoder_forward.1} parent=11 // pred_fallthru
          _
        // Predicated region
        $region25: #{encoder_forward.1} parent=11 // pred_check
          %p464 = pneg %p107
        $region26: #{encoder_forward.1} parent=11 // pred_check_branch
          %466 = sbr.rel (%p464) target = $region28
        $region27: #{encoder_forward.1} parent=11 // pred_region
          _
        $region28: #{encoder_forward.1} parent=11 // pred_fallthru
          _
      $region12: #{encoder_forward.1} parent=5 // pred_fallthru
        _
      %p467 = scmp.lt.s32.totalorder %s23, 2
      // Predicated region
      $region29: #{encoder_forward.1} parent=5 // pred_check
        %p468 = pneg %p467
      $region30: #{encoder_forward.1} parent=5 // pred_check_branch
        %470 = sbr.rel (%p468) target = $region32
      $region31: #{encoder_forward.1} parent=5 // pred_region
        // Predicated region
        $region33: #{encoder_forward.1} parent=31 // pred_check
          %p471 = pneg %p127
        $region34: #{encoder_forward.1} parent=31 // pred_check_branch
          %473 = sbr.rel (%p471) target = $region36
        $region35: #{encoder_forward.1} parent=31 // pred_region
          %p474 = scmp.lt.s32.totalorder %s23, 1
          %s475 = scalar_select %p474, %s23, 1
          %s476 = smul.addr %s475, 16
          %s477 = smul.addr %s476, 4
          %s478 = scalar_lea.vmem %s4, %s477
        $region36: #{encoder_forward.1} parent=31 // pred_fallthru
          _
        // Predicated region
        $region37: #{encoder_forward.1} parent=31 // pred_check
          %p479 = pneg %p153
        $region38: #{encoder_forward.1} parent=31 // pred_check_branch
          %481 = sbr.rel (%p479) target = $region40
        $region39: #{encoder_forward.1} parent=31 // pred_region
          %p482 = scmp.lt.s32.totalorder %s23, 1
          %s483 = scalar_select %p482, %s23, 1
          %s484 = smul.addr %s483, 2
          %s485 = scalar_lea.vmem %s5, %s484
        $region40: #{encoder_forward.1} parent=31 // pred_fallthru
          _
        // Predicated region
        $region41: #{encoder_forward.1} parent=31 // pred_check
          %p486 = pneg %p179
        $region42: #{encoder_forward.1} parent=31 // pred_check_branch
          %488 = sbr.rel (%p486) target = $region44
        $region43: #{encoder_forward.1} parent=31 // pred_region
          %p489 = scmp.lt.s32.totalorder %s23, 1
          %s490 = scalar_select %p489, %s23, 1
          %s491 = smul.addr %s490, 8
          %s492 = smul.addr %s491, 4
          %s493 = scalar_lea.vmem %s6, %s492
        $region44: #{encoder_forward.1} parent=31 // pred_fallthru
          _
        // Predicated region
        $region45: #{encoder_forward.1} parent=31 // pred_check
          %p494 = pneg %p205
        $region46: #{encoder_forward.1} parent=31 // pred_check_branch
          %496 = sbr.rel (%p494) target = $region48
        $region47: #{encoder_forward.1} parent=31 // pred_region
          %p497 = scmp.lt.s32.totalorder %s23, 1
          %s498 = scalar_select %p497, %s23, 1
          %s499 = scalar_lea.vmem %s7, %s498
        $region48: #{encoder_forward.1} parent=31 // pred_fallthru
          _
        // Predicated region
        $region49: #{encoder_forward.1} parent=31 // pred_check
          %p500 = pneg %p231
        $region50: #{encoder_forward.1} parent=31 // pred_check_branch
          %502 = sbr.rel (%p500) target = $region52
        $region51: #{encoder_forward.1} parent=31 // pred_region
          %p503 = scmp.lt.s32.totalorder %s23, 1
          %s504 = scalar_select %p503, %s23, 1
          %s505 = scalar_lea.vmem %s8, %s504
        $region52: #{encoder_forward.1} parent=31 // pred_fallthru
          _
        // Predicated region
        $region53: #{encoder_forward.1} parent=31 // pred_check
          %p506 = pneg %p257
        $region54: #{encoder_forward.1} parent=31 // pred_check_branch
          %508 = sbr.rel (%p506) target = $region56
        $region55: #{encoder_forward.1} parent=31 // pred_region
          %p509 = scmp.lt.s32.totalorder %s23, 1
          %s510 = scalar_select %p509, %s23, 1
          %s511 = scalar_lea.vmem %s9, %s510
        $region56: #{encoder_forward.1} parent=31 // pred_fallthru
          _
        // Predicated region
        $region57: #{encoder_forward.1} parent=31 // pred_check
          %p512 = pneg %p283
        $region58: #{encoder_forward.1} parent=31 // pred_check_branch
          %514 = sbr.rel (%p512) target = $region60
        $region59: #{encoder_forward.1} parent=31 // pred_region
          %p515 = scmp.lt.s32.totalorder %s23, 1
          %s516 = scalar_select %p515, %s23, 1
          %s517 = smul.addr %s516, 8
          %s518 = smul.addr %s517, 4
          %s519 = scalar_lea.vmem %s10, %s518
        $region60: #{encoder_forward.1} parent=31 // pred_fallthru
          _
        // Predicated region
        $region61: #{encoder_forward.1} parent=31 // pred_check
          %p520 = pneg %p309
        $region62: #{encoder_forward.1} parent=31 // pred_check_branch
          %522 = sbr.rel (%p520) target = $region64
        $region63: #{encoder_forward.1} parent=31 // pred_region
          %p523 = scmp.lt.s32.totalorder %s23, 1
          %s524 = scalar_select %p523, %s23, 1
          %s525 = scalar_lea.vmem %s11, %s524
        $region64: #{encoder_forward.1} parent=31 // pred_fallthru
          _
        // Predicated region
        $region65: #{encoder_forward.1} parent=31 // pred_check
          %p526 = pneg %p335
        $region66: #{encoder_forward.1} parent=31 // pred_check_branch
          %528 = sbr.rel (%p526) target = $region68
        $region67: #{encoder_forward.1} parent=31 // pred_region
          %p529 = scmp.lt.s32.totalorder %s23, 1
          %s530 = scalar_select %p529, %s23, 1
          %s531 = smul.addr %s530, 16
          %s532 = smul.addr %s531, 4
          %s533 = scalar_lea.vmem %s12, %s532
        $region68: #{encoder_forward.1} parent=31 // pred_fallthru
          _
        // Predicated region
        $region69: #{encoder_forward.1} parent=31 // pred_check
          %p534 = pneg %p361
        $region70: #{encoder_forward.1} parent=31 // pred_check_branch
          %536 = sbr.rel (%p534) target = $region72
        $region71: #{encoder_forward.1} parent=31 // pred_region
          %p537 = scmp.lt.s32.totalorder %s23, 1
          %s538 = scalar_select %p537, %s23, 1
          %s539 = scalar_lea.vmem %s13, %s538
        $region72: #{encoder_forward.1} parent=31 // pred_fallthru
          _
        // Predicated region
        $region73: #{encoder_forward.1} parent=31 // pred_check
          %p540 = pneg %p387
        $region74: #{encoder_forward.1} parent=31 // pred_check_branch
          %542 = sbr.rel (%p540) target = $region76
        $region75: #{encoder_forward.1} parent=31 // pred_region
          %p543 = scmp.lt.s32.totalorder %s23, 1
          %s544 = scalar_select %p543, %s23, 1
          %s545 = scalar_lea.vmem %s14, %s544
        $region76: #{encoder_forward.1} parent=31 // pred_fallthru
          _
        // Predicated region
        $region77: #{encoder_forward.1} parent=31 // pred_check
          %p546 = pneg %p413
        $region78: #{encoder_forward.1} parent=31 // pred_check_branch
          %548 = sbr.rel (%p546) target = $region80
        $region79: #{encoder_forward.1} parent=31 // pred_region
          %p549 = scmp.lt.s32.totalorder %s23, 1
          %s550 = scalar_select %p549, %s23, 1
          %s551 = scalar_lea.vmem %s15, %s550
        $region80: #{encoder_forward.1} parent=31 // pred_fallthru
          _
      $region32: #{encoder_forward.1} parent=5 // pred_fallthru
        _
      %p552 = scmp.le.s32.totalorder 1, %s23
      %p553 = scmp.lt.s32.totalorder %s23, 3
      %p554 = pnand %p552, %p553
      %p555 = pneg %p554
      // Predicated region
      $region81: #{encoder_forward.1} parent=5 // pred_check
        _
      $region82: #{encoder_forward.1} parent=5 // pred_check_branch
        %557 = sbr.rel (%p554) target = $region84
      $region83: #{encoder_forward.1} parent=5 // pred_region
        %s558 = ssub.s32 %s23, 1
        %p559 = pneg %p44
        %p560 = pneg %p41
        %p561 = pneg %p65
        %p562 = pneg %p62
        %p563 = pneg %p86
        %p564 = pneg %p83
        %p565 = pneg %p107
        %p566 = pneg %p104
        %p567 = scmp.lt.s32.totalorder %s28, 1
        %s568 = scalar_select %p567, %s28, 1
        %s569 = smul.addr %s568, 16
        %s570 = smul.addr %s569, 4
        %s571 = scalar_lea.vmem %s4, %s570
        %p572 = pneg %p133
        %p573 = pneg %p130
        %p574 = scmp.lt.s32.totalorder %s28, 1
        %s575 = scalar_select %p574, %s28, 1
        %s576 = smul.addr %s575, 2
        %s577 = scalar_lea.vmem %s5, %s576
        %p578 = pneg %p159
        %p579 = pneg %p156
        %p580 = scmp.lt.s32.totalorder %s28, 1
        %s581 = scalar_select %p580, %s28, 1
        %s582 = smul.addr %s581, 8
        %s583 = smul.addr %s582, 4
        %s584 = scalar_lea.vmem %s6, %s583
        %p585 = pneg %p185
        %p586 = pneg %p182
        %p587 = scmp.lt.s32.totalorder %s28, 1
        %s588 = scalar_select %p587, %s28, 1
        %s589 = scalar_lea.vmem %s7, %s588
        %p590 = pneg %p211
        %p591 = pneg %p208
        %p592 = scmp.lt.s32.totalorder %s28, 1
        %s593 = scalar_select %p592, %s28, 1
        %s594 = scalar_lea.vmem %s8, %s593
        %p595 = pneg %p237
        %p596 = pneg %p234
        %p597 = scmp.lt.s32.totalorder %s28, 1
        %s598 = scalar_select %p597, %s28, 1
        %s599 = scalar_lea.vmem %s9, %s598
        %p600 = pneg %p263
        %p601 = pneg %p260
        %p602 = scmp.lt.s32.totalorder %s28, 1
        %s603 = scalar_select %p602, %s28, 1
        %s604 = smul.addr %s603, 8
        %s605 = smul.addr %s604, 4
        %s606 = scalar_lea.vmem %s10, %s605
        %p607 = pneg %p289
        %p608 = pneg %p286
        %p609 = scmp.lt.s32.totalorder %s28, 1
        %s610 = scalar_select %p609, %s28, 1
        %s611 = scalar_lea.vmem %s11, %s610
        %p612 = pneg %p315
        %p613 = pneg %p312
        %p614 = scmp.lt.s32.totalorder %s28, 1
        %s615 = scalar_select %p614, %s28, 1
        %s616 = smul.addr %s615, 16
        %s617 = smul.addr %s616, 4
        %s618 = scalar_lea.vmem %s12, %s617
        %p619 = pneg %p341
        %p620 = pneg %p338
        %p621 = scmp.lt.s32.totalorder %s28, 1
        %s622 = scalar_select %p621, %s28, 1
        %s623 = scalar_lea.vmem %s13, %s622
        %p624 = pneg %p367
        %p625 = pneg %p364
        %p626 = scmp.lt.s32.totalorder %s28, 1
        %s627 = scalar_select %p626, %s28, 1
        %s628 = scalar_lea.vmem %s14, %s627
        %p629 = pneg %p393
        %p630 = pneg %p390
        %p631 = scmp.lt.s32.totalorder %s28, 1
        %s632 = scalar_select %p631, %s28, 1
        %s633 = scalar_lea.vmem %s15, %s632
        %p634 = pneg %p419
        %p635 = pneg %p416
        %p636 = pneg %p440
        %p637 = pneg %p437
        %p638 = scmp.lt.s32.totalorder %s28, 1
        %s639 = scalar_select %p638, %s28, 1
        %s640 = smul.addr %s639, 16
        %s641 = smul.addr %s640, 4
        %s642 = scalar_lea.vmem %s4, %s641
        %p643 = scmp.lt.s32.totalorder %s28, 1
        %s644 = scalar_select %p643, %s28, 1
        %s645 = smul.addr %s644, 2
        %s646 = scalar_lea.vmem %s5, %s645
        %p647 = scmp.lt.s32.totalorder %s28, 1
        %s648 = scalar_select %p647, %s28, 1
        %s649 = smul.addr %s648, 8
        %s650 = smul.addr %s649, 4
        %s651 = scalar_lea.vmem %s6, %s650
        %p652 = scmp.lt.s32.totalorder %s28, 1
        %s653 = scalar_select %p652, %s28, 1
        %s654 = scalar_lea.vmem %s7, %s653
        %p655 = scmp.lt.s32.totalorder %s28, 1
        %s656 = scalar_select %p655, %s28, 1
        %s657 = scalar_lea.vmem %s8, %s656
        %p658 = scmp.lt.s32.totalorder %s28, 1
        %s659 = scalar_select %p658, %s28, 1
        %s660 = scalar_lea.vmem %s9, %s659
        %p661 = scmp.lt.s32.totalorder %s28, 1
        %s662 = scalar_select %p661, %s28, 1
        %s663 = smul.addr %s662, 8
        %s664 = smul.addr %s663, 4
        %s665 = scalar_lea.vmem %s10, %s664
        %p666 = scmp.lt.s32.totalorder %s28, 1
        %s667 = scalar_select %p666, %s28, 1
        %s668 = scalar_lea.vmem %s11, %s667
        %p669 = scmp.lt.s32.totalorder %s28, 1
        %s670 = scalar_select %p669, %s28, 1
        %s671 = smul.addr %s670, 16
        %s672 = smul.addr %s671, 4
        %s673 = scalar_lea.vmem %s12, %s672
        %p674 = scmp.lt.s32.totalorder %s28, 1
        %s675 = scalar_select %p674, %s28, 1
        %s676 = scalar_lea.vmem %s13, %s675
        %p677 = scmp.lt.s32.totalorder %s28, 1
        %s678 = scalar_select %p677, %s28, 1
        %s679 = scalar_lea.vmem %s14, %s678
        %p680 = scmp.lt.s32.totalorder %s28, 1
        %s681 = scalar_select %p680, %s28, 1
        %s682 = scalar_lea.vmem %s15, %s681
        %p684 = scmp.eq.s32.totalorder %s28, 0
        // Predicated region
        $region85: #{encoder_forward.1} parent=83 // pred_check
          %p685 = pneg %p684
        $region86: #{encoder_forward.1} parent=83 // pred_check_branch
          %687 = sbr.rel (%p685) target = $region88
        $region87: #{encoder_forward.1} parent=83 // pred_region
          %v688 = vld [vmem:[%s0] sm:$0xff]
          %v689 = vld [vmem:[%s0 + $0x8] sm:$0xff]
          %v690 = vld [vmem:[%s0 + $0x10] sm:$0xff]
          %v691 = vld [vmem:[%s0 + $0x18] sm:$0xff]
          %v692 = vld [vmem:[%s2] sm:$0x1]
          %v693 = vld [vmem:[%s3] sm:$0x1]
          %vm694 = vcmask 523264
          %v695 = vsel %vm694, %v688, 0.0
          %696 = vadd.xlane.f32.xlu0 %v695
          %v697 = vpop.xlane.xlu0 %696
          %v698 = vsel %vm694, %v689, 0.0
          %699 = vadd.xlane.f32.xlu0 %v698
          %v700 = vpop.xlane.xlu0 %699
          %v701 = vsel %vm694, %v690, 0.0
          %702 = vadd.xlane.f32.xlu0 %v701
          %v703 = vpop.xlane.xlu0 %702
          %v704 = vsel %vm694, %v691, 0.0
          %705 = vadd.xlane.f32.xlu0 %v704
          %v706 = vpop.xlane.xlu0 %705
          %v707 = vrcp.pop 64.0
          %v708 = vmul.f32 %v697, %v707
          %v709 = vmul.f32 %v700, %v707
          %v710 = vmul.f32 %v703, %v707
          %v711 = vmul.f32 %v706, %v707
          %v712 = vsub.f32 %v688, %v708
          %v713 = vsub.f32 %v689, %v709
          %v714 = vsub.f32 %v690, %v710
          %v715 = vsub.f32 %v691, %v711
          %v716 = vmul.f32 %v712, %v712
          %v717 = vmul.f32 %v713, %v713
          %v718 = vmul.f32 %v714, %v714
          %v719 = vmul.f32 %v715, %v715
          %v720 = vsel %vm694, %v716, 0.0
          %721 = vadd.xlane.f32.xlu0 %v720
          %v722 = vpop.xlane.xlu0 %721
          %v723 = vsel %vm694, %v717, 0.0
          %724 = vadd.xlane.f32.xlu0 %v723
          %v725 = vpop.xlane.xlu0 %724
          %v726 = vsel %vm694, %v718, 0.0
          %727 = vadd.xlane.f32.xlu0 %v726
          %v728 = vpop.xlane.xlu0 %727
          %v729 = vsel %vm694, %v719, 0.0
          %730 = vadd.xlane.f32.xlu0 %v729
          %v731 = vpop.xlane.xlu0 %730
          %v732 = vmul.f32 %v722, %v707
          %v733 = vmul.f32 %v725, %v707
          %v734 = vmul.f32 %v728, %v707
          %v735 = vmul.f32 %v731, %v707
          %v736 = vadd.f32 %v732, 1e-12
          %v737 = vadd.f32 %v733, 1e-12
          %v738 = vadd.f32 %v734, 1e-12
          %v739 = vadd.f32 %v735, 1e-12
          %v740 = vrsqrt.pop %v736
          %v741 = vrsqrt.pop %v737
          %v742 = vrsqrt.pop %v738
          %v743 = vrsqrt.pop %v739
          %v744 = vmul.f32 %v712, %v740
          %v745 = vmul.f32 %v713, %v741
          %v746 = vmul.f32 %v714, %v742
          %v747 = vmul.f32 %v715, %v743
          %v749 = vlaneseq
          %v750 = vshrl.u32 %v749, 7
          %v751 = vsub.s32 0, %v750
          %v752 = vrot.slane %v692, %v751
          %v754 = vmul.f32 %v744, %v752
          %v755 = vmul.f32 %v745, %v752
          %v756 = vmul.f32 %v746, %v752
          %v757 = vmul.f32 %v747, %v752
          %v759 = vlaneseq
          %v760 = vshrl.u32 %v759, 7
          %v761 = vsub.s32 0, %v760
          %v762 = vrot.slane %v693, %v761
          %v764 = vadd.f32 %v754, %v762
          %v765 = vadd.f32 %v755, %v762
          %v766 = vadd.f32 %v756, %v762
          %v767 = vadd.f32 %v757, %v762
          %768 = vst.msk [vmem:[#allocation2] sm:$0xff] %vm694, %v764
          %769 = vst.msk [vmem:[#allocation2 + $0x8] sm:$0xff] %vm694, %v765
          %770 = vst.msk [vmem:[#allocation2 + $0x10] sm:$0xff] %vm694, %v766
          %771 = vst.msk [vmem:[#allocation2 + $0x18] sm:$0xff] %vm694, %v767
        $region88: #{encoder_forward.1} parent=83 // pred_fallthru
          _
        %v772 = vld [vmem:[#allocation2] sm:$0xff]
        %v773 = vld [vmem:[#allocation2 + $0x8] sm:$0xff]
        %v774 = vld [vmem:[#allocation2 + $0x10] sm:$0xff]
        %v775 = vld [vmem:[#allocation2 + $0x18] sm:$0xff]
        %v776 = vld [vmem:[%s1] sm:$0x3]
        %v777 = vpack.c.bf16 %v773, %v772
        %v778 = vpack.c.bf16 %v775, %v774
        %v779 = vld [vmem:[%s642] sm:$0xff]
        %v780 = vld [vmem:[%s642 + $0x8] sm:$0xff]
        %v781 = vld [vmem:[%s642 + $0x10] sm:$0xff]
        %v782 = vld [vmem:[%s642 + $0x18] sm:$0xff]
        %v783 = vld [vmem:[%s642 + $0x20] sm:$0xff]
        %v784 = vld [vmem:[%s642 + $0x28] sm:$0xff]
        %v785 = vld [vmem:[%s642 + $0x30] sm:$0xff]
        %v786 = vld [vmem:[%s642 + $0x38] sm:$0xff]
        %v787 = vld [vmem:[%s646] sm:$0x3]
        %v789 = vlaneseq
        %v790 = vshrl.u32 %v789, 7
        %v791 = vsub.s32 0, %v790
        %v792 = vrot.slane %v787, %v791
        %v793 = vlaneseq
        %v794 = vshrl.u32 %v793, 7
        %v795 = vsub.s32 1, %v794
        %v796 = vrot.slane %v787, %v795
        %v807 = vunpack.c.l.b16 %v779
        %v808 = vunpack.c.h.b16 %v779
        %v809 = vunpack.c.l.b16 %v780
        %v810 = vunpack.c.h.b16 %v780
        %v811 = vunpack.c.l.b16 %v781
        %v812 = vunpack.c.h.b16 %v781
        %v813 = vunpack.c.l.b16 %v782
        %v814 = vunpack.c.h.b16 %v782
        %v815 = vunpack.c.l.b16 %v783
        %v816 = vunpack.c.h.b16 %v783
        %v817 = vunpack.c.l.b16 %v784
        %v818 = vunpack.c.h.b16 %v784
        %v819 = vunpack.c.l.b16 %v785
        %v820 = vunpack.c.h.b16 %v785
        %v821 = vunpack.c.l.b16 %v786
        %v822 = vunpack.c.h.b16 %v786
        %v823 = vpack.c.b16 %v809, %v807
        %v824 = vpack.c.b16 %v810, %v808
        %v825 = vpack.c.b16 %v813, %v811
        %v826 = vpack.c.b16 %v814, %v812
        %v827 = vpack.c.b16 %v817, %v815
        %v828 = vpack.c.b16 %v818, %v816
        %v829 = vpack.c.b16 %v821, %v819
        %v830 = vpack.c.b16 %v822, %v820
        %vm839 = vcmask 523264
        %v841 = vsel %vm839, %v777, 0
        %v844 = vsel %vm839, %v778, 0
        %846 = vmatprep.subr.bf16.mxu0 0
        %847 = vmatpush1.bf16.msra.mxu0 0
        %848 = vmatprep.subr.bf16.mxu0 0
        %849 = vmatpush1.bf16.msra.mxu0 0
        %850 = vmatprep.subr.bf16.mxu0 0
        %851 = vmatpush1.bf16.msra.mxu0 0
        %852 = vmatprep.subr.bf16.mxu0 0
        %853 = vmatpush1.bf16.msra.mxu0 0
        %854 = vmatprep.subr.bf16.mxu0 %v830
        %855 = vmatpush1.bf16.msra.mxu0 %v829
        %856 = vmatprep.subr.bf16.mxu0 %v828
        %857 = vmatpush1.bf16.msra.mxu0 %v827
        %858 = vmatprep.subr.bf16.mxu0 %v826
        %859 = vmatpush1.bf16.msra.mxu0 %v825
        %860 = vmatprep.subr.bf16.mxu0 %v824
        %861 = vmatpush1.bf16.msra.mxu0 %v823
        %862 = vmatprep.subr.bf16.mxu0 0
        %863 = vmatpush2.bf16.msra.mxu0 0
        %864 = vmatprep.subr.bf16.mxu0 0
        %865 = vmatpush2.bf16.msra.mxu0 0
        %866 = vmatprep.subr.bf16.mxu0 0
        %867 = vmatpush2.bf16.msra.mxu0 0
        %868 = vmatprep.subr.bf16.mxu0 0
        %869 = vmatpush2.bf16.msra.mxu0 0
        %870 = vmatprep.subr.bf16.mxu0 0
        %871 = vmatpush2.bf16.msra.mxu0 0
        %872 = vmatprep.subr.bf16.mxu0 0
        %873 = vmatpush2.bf16.msra.mxu0 0
        %874 = vmatprep.subr.bf16.mxu0 0
        %875 = vmatpush2.bf16.msra.mxu0 0
        %876 = vmatprep.subr.bf16.mxu0 0
        %877 = vmatpush2.bf16.msra.mxu0 0
        %878 = vmatprep.mubr.bf16.mxu0 0
        %879 = vmatmul.mubr.bf16.gmra.mxu0 %v841
        %v880 = vpop.f32.mrf.mxu0
        %v881 = vadd.f32 %v792, %v880
        %v882 = vpop.f32.mrf.mxu0
        %v883 = vadd.f32 %v796, %v882
        %v884 = vpop.f32.mrf.mxu0
        %v885 = vadd.f32 %v792, %v884
        %v886 = vpop.f32.mrf.mxu0
        %v887 = vadd.f32 %v796, %v886
        %888 = vmatprep.mubr.bf16.mxu0 0
        %889 = vmatmul.mubr.bf16.gmra.mxu0 %v844
        %v890 = vpop.f32.mrf.mxu0
        %v891 = vadd.f32 %v792, %v890
        %v892 = vpop.f32.mrf.mxu0
        %v893 = vadd.f32 %v796, %v892
        %v894 = vpop.f32.mrf.mxu0
        %v895 = vadd.f32 %v792, %v894
        %v896 = vpop.f32.mrf.mxu0
        %v897 = vadd.f32 %v796, %v896
        %898 = vdwg.mxu0
        %v899 = vsub.f32 1.0, %v776
        %v900 = vmul.f32 %v899, -1e+09
        %v901 = vmul.f32 %v881, 0.25
        %v902 = vmul.f32 %v885, 0.25
        %v903 = vpack.c.bf16 %v902, %v901
        %v904 = vpack.c.bf16 %v885, %v881
        %v905 = vpack.c.bf16 %v887, %v883
        %v906 = vlaneseq
        %v907 = vshrl.u32 %v906, 7
        %v908 = vsub.s32 0, %v907
        %v909 = vrot.slane %v900, %v908
        %911 = vrot.lane.b32.xlu0 %v904, 64
        %v912 = vpop.permute.xlu0 %911
        %vm913 = vcmask 130048
        %v915 = vsel %vm913, %v903, 0
        %v918 = vsel %vm913, %v912, 0
        %920 = vmatprep.subr.bf16.mxu0 0
        %921 = vmatpush1.bf16.xpose.msra.mxu0 0
        %922 = vmatprep.subr.bf16.mxu0 0
        %923 = vmatpush1.bf16.xpose.msra.mxu0 0
        %924 = vmatprep.subr.bf16.mxu0 0
        %925 = vmatpush1.bf16.xpose.msra.mxu0 0
        %926 = vmatprep.subr.bf16.mxu0 0
        %927 = vmatpush1.bf16.xpose.msra.mxu0 0
        %928 = vmatprep.subr.bf16.mxu0 0
        %929 = vmatpush1.bf16.xpose.msra.mxu0 0
        %930 = vmatprep.subr.bf16.mxu0 0
        %931 = vmatpush1.bf16.xpose.msra.mxu0 0
        %932 = vmatprep.subr.bf16.mxu0 0
        %933 = vmatpush1.bf16.xpose.msra.mxu0 0
        %934 = vmatprep.subr.bf16.mxu0 0
        %935 = vmatpush1.bf16.xpose.msra.mxu0 %v918
        %936 = vmatprep.subr.bf16.mxu0 0
        %937 = vmatpush2.bf16.xpose.msra.mxu0 0
        %938 = vmatprep.subr.bf16.mxu0 0
        %939 = vmatpush2.bf16.xpose.msra.mxu0 0
        %940 = vmatprep.subr.bf16.mxu0 0
        %941 = vmatpush2.bf16.xpose.msra.mxu0 0
        %942 = vmatprep.subr.bf16.mxu0 0
        %943 = vmatpush2.bf16.xpose.msra.mxu0 0
        %944 = vmatprep.subr.bf16.mxu0 0
        %945 = vmatpush2.bf16.xpose.msra.mxu0 0
        %946 = vmatprep.subr.bf16.mxu0 0
        %947 = vmatpush2.bf16.xpose.msra.mxu0 0
        %948 = vmatprep.subr.bf16.mxu0 0
        %949 = vmatpush2.bf16.xpose.msra.mxu0 0
        %950 = vmatprep.subr.bf16.mxu0 0
        %951 = vmatpush2.bf16.xpose.msra.mxu0 0
        %952 = vmatprep.mubr.bf16.mxu0 0
        %953 = vmatmul.mubr.bf16.gmra.mxu0 %v915
        %v954 = vpop.f32.mrf.mxu0
        %v955 = vadd.f32 %v909, %v954
        %v956 = vpop.f32.mrf.mxu0
        %v957 = vpop.f32.mrf.mxu0
        %v958 = vadd.f32 %v909, %v957
        %v959 = vpop.f32.mrf.mxu0
        %960 = vdwg.mxu0
        %v961 = vsel %vm913, %v955, -inf
        %962 = vmax.xlane.f32.xlu0 %v961
        %v963 = vpop.xlane.xlu0 %962
        %v964 = vsel %vm913, %v958, -inf
        %965 = vmax.xlane.f32.xlu0 %v964
        %v966 = vpop.xlane.xlu0 %965
        %v967 = vsub.f32 %v955, %v963
        %v968 = vsub.f32 %v958, %v966
        %v969 = vmul.f32 %v967, 1.442695
        %v970 = vpow.pop %v969
        %v971 = vmul.f32 %v968, 1.442695
        %v972 = vpow.pop %v971
        %v973 = vsel %vm913, %v970, 0.0
        %974 = vadd.xlane.f32.xlu0 %v973
        %v975 = vpop.xlane.xlu0 %974
        %v976 = vsel %vm913, %v972, 0.0
        %977 = vadd.xlane.f32.xlu0 %v976
        %v978 = vpop.xlane.xlu0 %977
        %v979 = vrcp.pop %v975
        %v980 = vrcp.pop %v978
        %v981 = vmul.f32 %v970, %v979
        %v982 = vmul.f32 %v972, %v980
        %v983 = vpack.c.bf16 %v982, %v981
        %v985 = vsel %vm913, %v983, 0
        %987 = vmatprep.subr.bf16.mxu0 0
        %988 = vmatpush1.bf16.msra.mxu0 0
        %989 = vmatprep.subr.bf16.mxu0 0
        %990 = vmatpush1.bf16.msra.mxu0 0
        %991 = vmatprep.subr.bf16.mxu0 0
        %992 = vmatpush1.bf16.msra.mxu0 0
        %993 = vmatprep.subr.bf16.mxu0 0
        %994 = vmatpush1.bf16.msra.mxu0 0
        %995 = vmatprep.subr.bf16.mxu0 0
        %996 = vmatpush1.bf16.msra.mxu0 0
        %997 = vmatprep.subr.bf16.mxu0 0
        %998 = vmatpush1.bf16.msra.mxu0 0
        %999 = vmatprep.subr.bf16.mxu0 0
        %1000 = vmatpush1.bf16.msra.mxu0 0
        %1001 = vmatprep.subr.bf16.mxu0 0
        %1002 = vmatpush1.bf16.msra.mxu0 %v905
        %1003 = vmatprep.subr.bf16.mxu0 0
        %1004 = vmatpush2.bf16.msra.mxu0 0
        %1005 = vmatprep.subr.bf16.mxu0 0
        %1006 = vmatpush2.bf16.msra.mxu0 0
        %1007 = vmatprep.subr.bf16.mxu0 0
        %1008 = vmatpush2.bf16.msra.mxu0 0
        %1009 = vmatprep.subr.bf16.mxu0 0
        %1010 = vmatpush2.bf16.msra.mxu0 0
        %1011 = vmatprep.subr.bf16.mxu0 0
        %1012 = vmatpush2.bf16.msra.mxu0 0
        %1013 = vmatprep.subr.bf16.mxu0 0
        %1014 = vmatpush2.bf16.msra.mxu0 0
        %1015 = vmatprep.subr.bf16.mxu0 0
        %1016 = vmatpush2.bf16.msra.mxu0 0
        %1017 = vmatprep.subr.bf16.mxu0 0
        %1018 = vmatpush2.bf16.msra.mxu0 0
        %1019 = vmatprep.mubr.bf16.mxu0 0
        %1020 = vmatmul.mubr.bf16.gmra.mxu0 %v985
        %v1021 = vpop.f32.mrf.mxu0
        %v1022 = vadd.f32 0.0, %v1021
        %v1023 = vpop.f32.mrf.mxu0
        %v1024 = vpop.f32.mrf.mxu0
        %v1025 = vadd.f32 0.0, %v1024
        %v1026 = vpop.f32.mrf.mxu0
        %1027 = vdwg.mxu0
        %1028 = vst.msk [vmem:[#allocation3] sm:$0xff] %vm913, %v1022
        %1029 = vst.msk [vmem:[#allocation3 + $0x8] sm:$0xff] %vm913, %v1025
        %1031 = vrot.lane.b32.xlu0 %v903, 112
        %v1032 = vpop.permute.xlu0 %1031
        %1033 = vrot.lane.b32.xlu0 %v904, 48
        %v1034 = vpop.permute.xlu0 %1033
        %v1036 = vsel %vm913, %v1032, 0
        %v1039 = vsel %vm913, %v1034, 0
        %1041 = vmatprep.subr.bf16.mxu0 0
        %1042 = vmatpush1.bf16.xpose.msra.mxu0 0
        %1043 = vmatprep.subr.bf16.mxu0 0
        %1044 = vmatpush1.bf16.xpose.msra.mxu0 0
        %1045 = vmatprep.subr.bf16.mxu0 0
        %1046 = vmatpush1.bf16.xpose.msra.mxu0 0
        %1047 = vmatprep.subr.bf16.mxu0 0
        %1048 = vmatpush1.bf16.xpose.msra.mxu0 0
        %1049 = vmatprep.subr.bf16.mxu0 0
        %1050 = vmatpush1.bf16.xpose.msra.mxu0 0
        %1051 = vmatprep.subr.bf16.mxu0 0
        %1052 = vmatpush1.bf16.xpose.msra.mxu0 0
        %1053 = vmatprep.subr.bf16.mxu0 0
        %1054 = vmatpush1.bf16.xpose.msra.mxu0 0
        %1055 = vmatprep.subr.bf16.mxu0 0
        %1056 = vmatpush1.bf16.xpose.msra.mxu0 %v1039
        %1057 = vmatprep.subr.bf16.mxu0 0
        %1058 = vmatpush2.bf16.xpose.msra.mxu0 0
        %1059 = vmatprep.subr.bf16.mxu0 0
        %1060 = vmatpush2.bf16.xpose.msra.mxu0 0
        %1061 = vmatprep.subr.bf16.mxu0 0
        %1062 = vmatpush2.bf16.xpose.msra.mxu0 0
        %1063 = vmatprep.subr.bf16.mxu0 0
        %1064 = vmatpush2.bf16.xpose.msra.mxu0 0
        %1065 = vmatprep.subr.bf16.mxu0 0
        %1066 = vmatpush2.bf16.xpose.msra.mxu0 0
        %1067 = vmatprep.subr.bf16.mxu0 0
        %1068 = vmatpush2.bf16.xpose.msra.mxu0 0
        %1069 = vmatprep.subr.bf16.mxu0 0
        %1070 = vmatpush2.bf16.xpose.msra.mxu0 0
        %1071 = vmatprep.subr.bf16.mxu0 0
        %1072 = vmatpush2.bf16.xpose.msra.mxu0 0
        %1073 = vmatprep.mubr.bf16.mxu0 0
        %1074 = vmatmul.mubr.bf16.gmra.mxu0 %v1036
        %v1075 = vpop.f32.mrf.mxu0
        %v1076 = vadd.f32 %v909, %v1075
        %v1077 = vpop.f32.mrf.mxu0
        %v1078 = vpop.f32.mrf.mxu0
        %v1079 = vadd.f32 %v909, %v1078
        %v1080 = vpop.f32.mrf.mxu0
        %1081 = vdwg.mxu0
        %v1082 = vsel %vm913, %v1076, -inf
        %1083 = vmax.xlane.f32.xlu0 %v1082
        %v1084 = vpop.xlane.xlu0 %1083
        %v1085 = vsel %vm913, %v1079, -inf
        %1086 = vmax.xlane.f32.xlu0 %v1085
        %v1087 = vpop.xlane.xlu0 %1086
        %v1088 = vsub.f32 %v1076, %v1084
        %v1089 = vsub.f32 %v1079, %v1087
        %v1090 = vmul.f32 %v1088, 1.442695
        %v1091 = vpow.pop %v1090
        %v1092 = vmul.f32 %v1089, 1.442695
        %v1093 = vpow.pop %v1092
        %v1094 = vsel %vm913, %v1091, 0.0
        %1095 = vadd.xlane.f32.xlu0 %v1094
        %v1096 = vpop.xlane.xlu0 %1095
        %v1097 = vsel %vm913, %v1093, 0.0
        %1098 = vadd.xlane.f32.xlu0 %v1097
        %v1099 = vpop.xlane.xlu0 %1098
        %v1100 = vrcp.pop %v1096
        %v1101 = vrcp.pop %v1099
        %v1102 = vmul.f32 %v1091, %v1100
        %v1103 = vmul.f32 %v1093, %v1101
        %v1104 = vpack.c.bf16 %v1103, %v1102
        %1106 = vrot.lane.b32.xlu0 %v905, 112
        %v1107 = vpop.permute.xlu0 %1106
        %v1110 = vsel %vm913, %v1104, 0
        %1112 = vmatprep.subr.bf16.mxu0 0
        %1113 = vmatpush1.bf16.msra.mxu0 0
        %1114 = vmatprep.subr.bf16.mxu0 0
        %1115 = vmatpush1.bf16.msra.mxu0 0
        %1116 = vmatprep.subr.bf16.mxu0 0
        %1117 = vmatpush1.bf16.msra.mxu0 0
        %1118 = vmatprep.subr.bf16.mxu0 0
        %1119 = vmatpush1.bf16.msra.mxu0 0
        %1120 = vmatprep.subr.bf16.mxu0 0
        %1121 = vmatpush1.bf16.msra.mxu0 0
        %1122 = vmatprep.subr.bf16.mxu0 0
        %1123 = vmatpush1.bf16.msra.mxu0 0
        %1124 = vmatprep.subr.bf16.mxu0 0
        %1125 = vmatpush1.bf16.msra.mxu0 0
        %1126 = vmatprep.subr.bf16.mxu0 0
        %1127 = vmatpush1.bf16.msra.mxu0 %v1107
        %1128 = vmatprep.subr.bf16.mxu0 0
        %1129 = vmatpush2.bf16.msra.mxu0 0
        %1130 = vmatprep.subr.bf16.mxu0 0
        %1131 = vmatpush2.bf16.msra.mxu0 0
        %1132 = vmatprep.subr.bf16.mxu0 0
        %1133 = vmatpush2.bf16.msra.mxu0 0
        %1134 = vmatprep.subr.bf16.mxu0 0
        %1135 = vmatpush2.bf16.msra.mxu0 0
        %1136 = vmatprep.subr.bf16.mxu0 0
        %1137 = vmatpush2.bf16.msra.mxu0 0
        %1138 = vmatprep.subr.bf16.mxu0 0
        %1139 = vmatpush2.bf16.msra.mxu0 0
        %1140 = vmatprep.subr.bf16.mxu0 0
        %1141 = vmatpush2.bf16.msra.mxu0 0
        %1142 = vmatprep.subr.bf16.mxu0 0
        %1143 = vmatpush2.bf16.msra.mxu0 0
        %1144 = vmatprep.mubr.bf16.mxu0 0
        %1145 = vmatmul.mubr.bf16.gmra.mxu0 %v1110
        %v1146 = vpop.f32.mrf.mxu0
        %v1147 = vadd.f32 0.0, %v1146
        %v1148 = vpop.f32.mrf.mxu0
        %v1149 = vpop.f32.mrf.mxu0
        %v1150 = vadd.f32 0.0, %v1149
        %v1151 = vpop.f32.mrf.mxu0
        %1152 = vdwg.mxu0
        %1155 = vrot.lane.b32.xlu0 %v1147, 16
        %v1156 = vpop.permute.xlu0 %1155
        %1157 = vrot.lane.b32.xlu0 %v1150, 16
        %v1158 = vpop.permute.xlu0 %1157
        %vm1161 = vcmask 261248
        %1162 = vst.msk [vmem:[#allocation3] sm:$0xff] %vm1161, %v1156
        %1163 = vst.msk [vmem:[#allocation3 + $0x8] sm:$0xff] %vm1161, %v1158
        %1164 = vrot.lane.b32.xlu0 %v903, 96
        %v1165 = vpop.permute.xlu0 %1164
        %1166 = vrot.lane.b32.xlu0 %v904, 32
        %v1167 = vpop.permute.xlu0 %1166
        %v1169 = vsel %vm913, %v1165, 0
        %v1172 = vsel %vm913, %v1167, 0
        %1174 = vmatprep.subr.bf16.mxu0 0
        %1175 = vmatpush1.bf16.xpose.msra.mxu0 0
        %1176 = vmatprep.subr.bf16.mxu0 0
        %1177 = vmatpush1.bf16.xpose.msra.mxu0 0
        %1178 = vmatprep.subr.bf16.mxu0 0
        %1179 = vmatpush1.bf16.xpose.msra.mxu0 0
        %1180 = vmatprep.subr.bf16.mxu0 0
        %1181 = vmatpush1.bf16.xpose.msra.mxu0 0
        %1182 = vmatprep.subr.bf16.mxu0 0
        %1183 = vmatpush1.bf16.xpose.msra.mxu0 0
        %1184 = vmatprep.subr.bf16.mxu0 0
        %1185 = vmatpush1.bf16.xpose.msra.mxu0 0
        %1186 = vmatprep.subr.bf16.mxu0 0
        %1187 = vmatpush1.bf16.xpose.msra.mxu0 0
        %1188 = vmatprep.subr.bf16.mxu0 0
        %1189 = vmatpush1.bf16.xpose.msra.mxu0 %v1172
        %1190 = vmatprep.subr.bf16.mxu0 0
        %1191 = vmatpush2.bf16.xpose.msra.mxu0 0
        %1192 = vmatprep.subr.bf16.mxu0 0
        %1193 = vmatpush2.bf16.xpose.msra.mxu0 0
        %1194 = vmatprep.subr.bf16.mxu0 0
        %1195 = vmatpush2.bf16.xpose.msra.mxu0 0
        %1196 = vmatprep.subr.bf16.mxu0 0
        %1197 = vmatpush2.bf16.xpose.msra.mxu0 0
        %1198 = vmatprep.subr.bf16.mxu0 0
        %1199 = vmatpush2.bf16.xpose.msra.mxu0 0
        %1200 = vmatprep.subr.bf16.mxu0 0
        %1201 = vmatpush2.bf16.xpose.msra.mxu0 0
        %1202 = vmatprep.subr.bf16.mxu0 0
        %1203 = vmatpush2.bf16.xpose.msra.mxu0 0
        %1204 = vmatprep.subr.bf16.mxu0 0
        %1205 = vmatpush2.bf16.xpose.msra.mxu0 0
        %1206 = vmatprep.mubr.bf16.mxu0 0
        %1207 = vmatmul.mubr.bf16.gmra.mxu0 %v1169
        %v1208 = vpop.f32.mrf.mxu0
        %v1209 = vadd.f32 %v909, %v1208
        %v1210 = vpop.f32.mrf.mxu0
        %v1211 = vpop.f32.mrf.mxu0
        %v1212 = vadd.f32 %v909, %v1211
        %v1213 = vpop.f32.mrf.mxu0
        %1214 = vdwg.mxu0
        %v1215 = vsel %vm913, %v1209, -inf
        %1216 = vmax.xlane.f32.xlu0 %v1215
        %v1217 = vpop.xlane.xlu0 %1216
        %v1218 = vsel %vm913, %v1212, -inf
        %1219 = vmax.xlane.f32.xlu0 %v1218
        %v1220 = vpop.xlane.xlu0 %1219
        %v1221 = vsub.f32 %v1209, %v1217
        %v1222 = vsub.f32 %v1212, %v1220
        %v1223 = vmul.f32 %v1221, 1.442695
        %v1224 = vpow.pop %v1223
        %v1225 = vmul.f32 %v1222, 1.442695
        %v1226 = vpow.pop %v1225
        %v1227 = vsel %vm913, %v1224, 0.0
        %1228 = vadd.xlane.f32.xlu0 %v1227
        %v1229 = vpop.xlane.xlu0 %1228
        %v1230 = vsel %vm913, %v1226, 0.0
        %1231 = vadd.xlane.f32.xlu0 %v1230
        %v1232 = vpop.xlane.xlu0 %1231
        %v1233 = vrcp.pop %v1229
        %v1234 = vrcp.pop %v1232
        %v1235 = vmul.f32 %v1224, %v1233
        %v1236 = vmul.f32 %v1226, %v1234
        %v1237 = vpack.c.bf16 %v1236, %v1235
        %1238 = vrot.lane.b32.xlu0 %v905, 96
        %v1239 = vpop.permute.xlu0 %1238
        %v1242 = vsel %vm913, %v1237, 0
        %1244 = vmatprep.subr.bf16.mxu0 0
        %1245 = vmatpush1.bf16.msra.mxu0 0
        %1246 = vmatprep.subr.bf16.mxu0 0
        %1247 = vmatpush1.bf16.msra.mxu0 0
        %1248 = vmatprep.subr.bf16.mxu0 0
        %1249 = vmatpush1.bf16.msra.mxu0 0
        %1250 = vmatprep.subr.bf16.mxu0 0
        %1251 = vmatpush1.bf16.msra.mxu0 0
        %1252 = vmatprep.subr.bf16.mxu0 0
        %1253 = vmatpush1.bf16.msra.mxu0 0
        %1254 = vmatprep.subr.bf16.mxu0 0
        %1255 = vmatpush1.bf16.msra.mxu0 0
        %1256 = vmatprep.subr.bf16.mxu0 0
        %1257 = vmatpush1.bf16.msra.mxu0 0
        %1258 = vmatprep.subr.bf16.mxu0 0
        %1259 = vmatpush1.bf16.msra.mxu0 %v1239
        %1260 = vmatprep.subr.bf16.mxu0 0
        %1261 = vmatpush2.bf16.msra.mxu0 0
        %1262 = vmatprep.subr.bf16.mxu0 0
        %1263 = vmatpush2.bf16.msra.mxu0 0
        %1264 = vmatprep.subr.bf16.mxu0 0
        %1265 = vmatpush2.bf16.msra.mxu0 0
        %1266 = vmatprep.subr.bf16.mxu0 0
        %1267 = vmatpush2.bf16.msra.mxu0 0
        %1268 = vmatprep.subr.bf16.mxu0 0
        %1269 = vmatpush2.bf16.msra.mxu0 0
        %1270 = vmatprep.subr.bf16.mxu0 0
        %1271 = vmatpush2.bf16.msra.mxu0 0
        %1272 = vmatprep.subr.bf16.mxu0 0
        %1273 = vmatpush2.bf16.msra.mxu0 0
        %1274 = vmatprep.subr.bf16.mxu0 0
        %1275 = vmatpush2.bf16.msra.mxu0 0
        %1276 = vmatprep.mubr.bf16.mxu0 0
        %1277 = vmatmul.mubr.bf16.gmra.mxu0 %v1242
        %v1278 = vpop.f32.mrf.mxu0
        %v1279 = vadd.f32 0.0, %v1278
        %v1280 = vpop.f32.mrf.mxu0
        %v1281 = vpop.f32.mrf.mxu0
        %v1282 = vadd.f32 0.0, %v1281
        %v1283 = vpop.f32.mrf.mxu0
        %1284 = vdwg.mxu0
        %1287 = vrot.lane.b32.xlu0 %v1279, 32
        %v1288 = vpop.permute.xlu0 %1287
        %1289 = vrot.lane.b32.xlu0 %v1282, 32
        %v1290 = vpop.permute.xlu0 %1289
        %vm1293 = vcmask 392448
        %1294 = vst.msk [vmem:[#allocation3] sm:$0xff] %vm1293, %v1288
        %1295 = vst.msk [vmem:[#allocation3 + $0x8] sm:$0xff] %vm1293, %v1290
        %1296 = vrot.lane.b32.xlu0 %v903, 80
        %v1297 = vpop.permute.xlu0 %1296
        %1298 = vrot.lane.b32.xlu0 %v904, 16
        %v1299 = vpop.permute.xlu0 %1298
        %v1301 = vsel %vm913, %v1297, 0
        %v1304 = vsel %vm913, %v1299, 0
        %1306 = vmatprep.subr.bf16.mxu0 0
        %1307 = vmatpush1.bf16.xpose.msra.mxu0 0
        %1308 = vmatprep.subr.bf16.mxu0 0
        %1309 = vmatpush1.bf16.xpose.msra.mxu0 0
        %1310 = vmatprep.subr.bf16.mxu0 0
        %1311 = vmatpush1.bf16.xpose.msra.mxu0 0
        %1312 = vmatprep.subr.bf16.mxu0 0
        %1313 = vmatpush1.bf16.xpose.msra.mxu0 0
        %1314 = vmatprep.subr.bf16.mxu0 0
        %1315 = vmatpush1.bf16.xpose.msra.mxu0 0
        %1316 = vmatprep.subr.bf16.mxu0 0
        %1317 = vmatpush1.bf16.xpose.msra.mxu0 0
        %1318 = vmatprep.subr.bf16.mxu0 0
        %1319 = vmatpush1.bf16.xpose.msra.mxu0 0
        %1320 = vmatprep.subr.bf16.mxu0 0
        %1321 = vmatpush1.bf16.xpose.msra.mxu0 %v1304
        %1322 = vmatprep.subr.bf16.mxu0 0
        %1323 = vmatpush2.bf16.xpose.msra.mxu0 0
        %1324 = vmatprep.subr.bf16.mxu0 0
        %1325 = vmatpush2.bf16.xpose.msra.mxu0 0
        %1326 = vmatprep.subr.bf16.mxu0 0
        %1327 = vmatpush2.bf16.xpose.msra.mxu0 0
        %1328 = vmatprep.subr.bf16.mxu0 0
        %1329 = vmatpush2.bf16.xpose.msra.mxu0 0
        %1330 = vmatprep.subr.bf16.mxu0 0
        %1331 = vmatpush2.bf16.xpose.msra.mxu0 0
        %1332 = vmatprep.subr.bf16.mxu0 0
        %1333 = vmatpush2.bf16.xpose.msra.mxu0 0
        %1334 = vmatprep.subr.bf16.mxu0 0
        %1335 = vmatpush2.bf16.xpose.msra.mxu0 0
        %1336 = vmatprep.subr.bf16.mxu0 0
        %1337 = vmatpush2.bf16.xpose.msra.mxu0 0
        %1338 = vmatprep.mubr.bf16.mxu0 0
        %1339 = vmatmul.mubr.bf16.gmra.mxu0 %v1301
        %v1340 = vpop.f32.mrf.mxu0
        %v1341 = vadd.f32 %v909, %v1340
        %v1342 = vpop.f32.mrf.mxu0
        %v1343 = vpop.f32.mrf.mxu0
        %v1344 = vadd.f32 %v909, %v1343
        %v1345 = vpop.f32.mrf.mxu0
        %1346 = vdwg.mxu0
        %v1347 = vsel %vm913, %v1341, -inf
        %1348 = vmax.xlane.f32.xlu0 %v1347
        %v1349 = vpop.xlane.xlu0 %1348
        %v1350 = vsel %vm913, %v1344, -inf
        %1351 = vmax.xlane.f32.xlu0 %v1350
        %v1352 = vpop.xlane.xlu0 %1351
        %v1353 = vsub.f32 %v1341, %v1349
        %v1354 = vsub.f32 %v1344, %v1352
        %v1355 = vmul.f32 %v1353, 1.442695
        %v1356 = vpow.pop %v1355
        %v1357 = vmul.f32 %v1354, 1.442695
        %v1358 = vpow.pop %v1357
        %v1359 = vsel %vm913, %v1356, 0.0
        %1360 = vadd.xlane.f32.xlu0 %v1359
        %v1361 = vpop.xlane.xlu0 %1360
        %v1362 = vsel %vm913, %v1358, 0.0
        %1363 = vadd.xlane.f32.xlu0 %v1362
        %v1364 = vpop.xlane.xlu0 %1363
        %v1365 = vrcp.pop %v1361
        %v1366 = vrcp.pop %v1364
        %v1367 = vmul.f32 %v1356, %v1365
        %v1368 = vmul.f32 %v1358, %v1366
        %v1369 = vpack.c.bf16 %v1368, %v1367
        %1370 = vrot.lane.b32.xlu0 %v905, 80
        %v1371 = vpop.permute.xlu0 %1370
        %v1374 = vsel %vm913, %v1369, 0
        %1376 = vmatprep.subr.bf16.mxu0 0
        %1377 = vmatpush1.bf16.msra.mxu0 0
        %1378 = vmatprep.subr.bf16.mxu0 0
        %1379 = vmatpush1.bf16.msra.mxu0 0
        %1380 = vmatprep.subr.bf16.mxu0 0
        %1381 = vmatpush1.bf16.msra.mxu0 0
        %1382 = vmatprep.subr.bf16.mxu0 0
        %1383 = vmatpush1.bf16.msra.mxu0 0
        %1384 = vmatprep.subr.bf16.mxu0 0
        %1385 = vmatpush1.bf16.msra.mxu0 0
        %1386 = vmatprep.subr.bf16.mxu0 0
        %1387 = vmatpush1.bf16.msra.mxu0 0
        %1388 = vmatprep.subr.bf16.mxu0 0
        %1389 = vmatpush1.bf16.msra.mxu0 0
        %1390 = vmatprep.subr.bf16.mxu0 0
        %1391 = vmatpush1.bf16.msra.mxu0 %v1371
        %1392 = vmatprep.subr.bf16.mxu0 0
        %1393 = vmatpush2.bf16.msra.mxu0 0
        %1394 = vmatprep.subr.bf16.mxu0 0
        %1395 = vmatpush2.bf16.msra.mxu0 0
        %1396 = vmatprep.subr.bf16.mxu0 0
        %1397 = vmatpush2.bf16.msra.mxu0 0
        %1398 = vmatprep.subr.bf16.mxu0 0
        %1399 = vmatpush2.bf16.msra.mxu0 0
        %1400 = vmatprep.subr.bf16.mxu0 0
        %1401 = vmatpush2.bf16.msra.mxu0 0
        %1402 = vmatprep.subr.bf16.mxu0 0
        %1403 = vmatpush2.bf16.msra.mxu0 0
        %1404 = vmatprep.subr.bf16.mxu0 0
        %1405 = vmatpush2.bf16.msra.mxu0 0
        %1406 = vmatprep.subr.bf16.mxu0 0
        %1407 = vmatpush2.bf16.msra.mxu0 0
        %1408 = vmatprep.mubr.bf16.mxu0 0
        %1409 = vmatmul.mubr.bf16.gmra.mxu0 %v1374
        %v1410 = vpop.f32.mrf.mxu0
        %v1411 = vadd.f32 0.0, %v1410
        %v1412 = vpop.f32.mrf.mxu0
        %v1413 = vpop.f32.mrf.mxu0
        %v1414 = vadd.f32 0.0, %v1413
        %v1415 = vpop.f32.mrf.mxu0
        %1416 = vdwg.mxu0
        %1419 = vrot.lane.b32.xlu0 %v1411, 48
        %v1420 = vpop.permute.xlu0 %1419
        %1421 = vrot.lane.b32.xlu0 %v1414, 48
        %v1422 = vpop.permute.xlu0 %1421
        %vm1425 = vcmask 523648
        %1426 = vst.msk [vmem:[#allocation3] sm:$0xff] %vm1425, %v1420
        %1427 = vst.msk [vmem:[#allocation3 + $0x8] sm:$0xff] %vm1425, %v1422
        %v1428 = vmul.f32 %v891, 0.25
        %v1429 = vmul.f32 %v895, 0.25
        %v1430 = vpack.c.bf16 %v1429, %v1428
        %v1431 = vpack.c.bf16 %v895, %v891
        %v1432 = vpack.c.bf16 %v897, %v893
        %v1433 = vlaneseq
        %v1434 = vshrl.u32 %v1433, 7
        %v1435 = vsub.s32 1, %v1434
        %v1436 = vrot.slane %v900, %v1435
        %1438 = vrot.lane.b32.xlu0 %v1431, 64
        %v1439 = vpop.permute.xlu0 %1438
        %v1441 = vsel %vm913, %v1430, 0
        %v1444 = vsel %vm913, %v1439, 0
        %1446 = vmatprep.subr.bf16.mxu0 0
        %1447 = vmatpush1.bf16.xpose.msra.mxu0 0
        %1448 = vmatprep.subr.bf16.mxu0 0
        %1449 = vmatpush1.bf16.xpose.msra.mxu0 0
        %1450 = vmatprep.subr.bf16.mxu0 0
        %1451 = vmatpush1.bf16.xpose.msra.mxu0 0
        %1452 = vmatprep.subr.bf16.mxu0 0
        %1453 = vmatpush1.bf16.xpose.msra.mxu0 0
        %1454 = vmatprep.subr.bf16.mxu0 0
        %1455 = vmatpush1.bf16.xpose.msra.mxu0 0
        %1456 = vmatprep.subr.bf16.mxu0 0
        %1457 = vmatpush1.bf16.xpose.msra.mxu0 0
        %1458 = vmatprep.subr.bf16.mxu0 0
        %1459 = vmatpush1.bf16.xpose.msra.mxu0 0
        %1460 = vmatprep.subr.bf16.mxu0 0
        %1461 = vmatpush1.bf16.xpose.msra.mxu0 %v1444
        %1462 = vmatprep.subr.bf16.mxu0 0
        %1463 = vmatpush2.bf16.xpose.msra.mxu0 0
        %1464 = vmatprep.subr.bf16.mxu0 0
        %1465 = vmatpush2.bf16.xpose.msra.mxu0 0
        %1466 = vmatprep.subr.bf16.mxu0 0
        %1467 = vmatpush2.bf16.xpose.msra.mxu0 0
        %1468 = vmatprep.subr.bf16.mxu0 0
        %1469 = vmatpush2.bf16.xpose.msra.mxu0 0
        %1470 = vmatprep.subr.bf16.mxu0 0
        %1471 = vmatpush2.bf16.xpose.msra.mxu0 0
        %1472 = vmatprep.subr.bf16.mxu0 0
        %1473 = vmatpush2.bf16.xpose.msra.mxu0 0
        %1474 = vmatprep.subr.bf16.mxu0 0
        %1475 = vmatpush2.bf16.xpose.msra.mxu0 0
        %1476 = vmatprep.subr.bf16.mxu0 0
        %1477 = vmatpush2.bf16.xpose.msra.mxu0 0
        %1478 = vmatprep.mubr.bf16.mxu0 0
        %1479 = vmatmul.mubr.bf16.gmra.mxu0 %v1441
        %v1480 = vpop.f32.mrf.mxu0
        %v1481 = vadd.f32 %v1436, %v1480
        %v1482 = vpop.f32.mrf.mxu0
        %v1483 = vpop.f32.mrf.mxu0
        %v1484 = vadd.f32 %v1436, %v1483
        %v1485 = vpop.f32.mrf.mxu0
        %1486 = vdwg.mxu0
        %v1487 = vsel %vm913, %v1481, -inf
        %1488 = vmax.xlane.f32.xlu0 %v1487
        %v1489 = vpop.xlane.xlu0 %1488
        %v1490 = vsel %vm913, %v1484, -inf
        %1491 = vmax.xlane.f32.xlu0 %v1490
        %v1492 = vpop.xlane.xlu0 %1491
        %v1493 = vsub.f32 %v1481, %v1489
        %v1494 = vsub.f32 %v1484, %v1492
        %v1495 = vmul.f32 %v1493, 1.442695
        %v1496 = vpow.pop %v1495
        %v1497 = vmul.f32 %v1494, 1.442695
        %v1498 = vpow.pop %v1497
        %v1499 = vsel %vm913, %v1496, 0.0
        %1500 = vadd.xlane.f32.xlu0 %v1499
        %v1501 = vpop.xlane.xlu0 %1500
        %v1502 = vsel %vm913, %v1498, 0.0
        %1503 = vadd.xlane.f32.xlu0 %v1502
        %v1504 = vpop.xlane.xlu0 %1503
        %v1505 = vrcp.pop %v1501
        %v1506 = vrcp.pop %v1504
        %v1507 = vmul.f32 %v1496, %v1505
        %v1508 = vmul.f32 %v1498, %v1506
        %v1509 = vpack.c.bf16 %v1508, %v1507
        %v1511 = vsel %vm913, %v1509, 0
        %1513 = vmatprep.subr.bf16.mxu0 0
        %1514 = vmatpush1.bf16.msra.mxu0 0
        %1515 = vmatprep.subr.bf16.mxu0 0
        %1516 = vmatpush1.bf16.msra.mxu0 0
        %1517 = vmatprep.subr.bf16.mxu0 0
        %1518 = vmatpush1.bf16.msra.mxu0 0
        %1519 = vmatprep.subr.bf16.mxu0 0
        %1520 = vmatpush1.bf16.msra.mxu0 0
        %1521 = vmatprep.subr.bf16.mxu0 0
        %1522 = vmatpush1.bf16.msra.mxu0 0
        %1523 = vmatprep.subr.bf16.mxu0 0
        %1524 = vmatpush1.bf16.msra.mxu0 0
        %1525 = vmatprep.subr.bf16.mxu0 0
        %1526 = vmatpush1.bf16.msra.mxu0 0
        %1527 = vmatprep.subr.bf16.mxu0 0
        %1528 = vmatpush1.bf16.msra.mxu0 %v1432
        %1529 = vmatprep.subr.bf16.mxu0 0
        %1530 = vmatpush2.bf16.msra.mxu0 0
        %1531 = vmatprep.subr.bf16.mxu0 0
        %1532 = vmatpush2.bf16.msra.mxu0 0
        %1533 = vmatprep.subr.bf16.mxu0 0
        %1534 = vmatpush2.bf16.msra.mxu0 0
        %1535 = vmatprep.subr.bf16.mxu0 0
        %1536 = vmatpush2.bf16.msra.mxu0 0
        %1537 = vmatprep.subr.bf16.mxu0 0
        %1538 = vmatpush2.bf16.msra.mxu0 0
        %1539 = vmatprep.subr.bf16.mxu0 0
        %1540 = vmatpush2.bf16.msra.mxu0 0
        %1541 = vmatprep.subr.bf16.mxu0 0
        %1542 = vmatpush2.bf16.msra.mxu0 0
        %1543 = vmatprep.subr.bf16.mxu0 0
        %1544 = vmatpush2.bf16.msra.mxu0 0
        %1545 = vmatprep.mubr.bf16.mxu0 0
        %1546 = vmatmul.mubr.bf16.gmra.mxu0 %v1511
        %v1547 = vpop.f32.mrf.mxu0
        %v1548 = vadd.f32 0.0, %v1547
        %v1549 = vpop.f32.mrf.mxu0
        %v1550 = vpop.f32.mrf.mxu0
        %v1551 = vadd.f32 0.0, %v1550
        %v1552 = vpop.f32.mrf.mxu0
        %1553 = vdwg.mxu0
        %1554 = vst.msk [vmem:[#allocation3 + $0x10] sm:$0xff] %vm913, %v1548
        %1555 = vst.msk [vmem:[#allocation3 + $0x18] sm:$0xff] %vm913, %v1551
        %1557 = vrot.lane.b32.xlu0 %v1430, 112
        %v1558 = vpop.permute.xlu0 %1557
        %1559 = vrot.lane.b32.xlu0 %v1431, 48
        %v1560 = vpop.permute.xlu0 %1559
        %v1562 = vsel %vm913, %v1558, 0
        %v1565 = vsel %vm913, %v1560, 0
        %1567 = vmatprep.subr.bf16.mxu0 0
        %1568 = vmatpush1.bf16.xpose.msra.mxu0 0
        %1569 = vmatprep.subr.bf16.mxu0 0
        %1570 = vmatpush1.bf16.xpose.msra.mxu0 0
        %1571 = vmatprep.subr.bf16.mxu0 0
        %1572 = vmatpush1.bf16.xpose.msra.mxu0 0
        %1573 = vmatprep.subr.bf16.mxu0 0
        %1574 = vmatpush1.bf16.xpose.msra.mxu0 0
        %1575 = vmatprep.subr.bf16.mxu0 0
        %1576 = vmatpush1.bf16.xpose.msra.mxu0 0
        %1577 = vmatprep.subr.bf16.mxu0 0
        %1578 = vmatpush1.bf16.xpose.msra.mxu0 0
        %1579 = vmatprep.subr.bf16.mxu0 0
        %1580 = vmatpush1.bf16.xpose.msra.mxu0 0
        %1581 = vmatprep.subr.bf16.mxu0 0
        %1582 = vmatpush1.bf16.xpose.msra.mxu0 %v1565
        %1583 = vmatprep.subr.bf16.mxu0 0
        %1584 = vmatpush2.bf16.xpose.msra.mxu0 0
        %1585 = vmatprep.subr.bf16.mxu0 0
        %1586 = vmatpush2.bf16.xpose.msra.mxu0 0
        %1587 = vmatprep.subr.bf16.mxu0 0
        %1588 = vmatpush2.bf16.xpose.msra.mxu0 0
        %1589 = vmatprep.subr.bf16.mxu0 0
        %1590 = vmatpush2.bf16.xpose.msra.mxu0 0
        %1591 = vmatprep.subr.bf16.mxu0 0
        %1592 = vmatpush2.bf16.xpose.msra.mxu0 0
        %1593 = vmatprep.subr.bf16.mxu0 0
        %1594 = vmatpush2.bf16.xpose.msra.mxu0 0
        %1595 = vmatprep.subr.bf16.mxu0 0
        %1596 = vmatpush2.bf16.xpose.msra.mxu0 0
        %1597 = vmatprep.subr.bf16.mxu0 0
        %1598 = vmatpush2.bf16.xpose.msra.mxu0 0
        %1599 = vmatprep.mubr.bf16.mxu0 0
        %1600 = vmatmul.mubr.bf16.gmra.mxu0 %v1562
        %v1601 = vpop.f32.mrf.mxu0
        %v1602 = vadd.f32 %v1436, %v1601
        %v1603 = vpop.f32.mrf.mxu0
        %v1604 = vpop.f32.mrf.mxu0
        %v1605 = vadd.f32 %v1436, %v1604
        %v1606 = vpop.f32.mrf.mxu0
        %1607 = vdwg.mxu0
        %v1608 = vsel %vm913, %v1602, -inf
        %1609 = vmax.xlane.f32.xlu0 %v1608
        %v1610 = vpop.xlane.xlu0 %1609
        %v1611 = vsel %vm913, %v1605, -inf
        %1612 = vmax.xlane.f32.xlu0 %v1611
        %v1613 = vpop.xlane.xlu0 %1612
        %v1614 = vsub.f32 %v1602, %v1610
        %v1615 = vsub.f32 %v1605, %v1613
        %v1616 = vmul.f32 %v1614, 1.442695
        %v1617 = vpow.pop %v1616
        %v1618 = vmul.f32 %v1615, 1.442695
        %v1619 = vpow.pop %v1618
        %v1620 = vsel %vm913, %v1617, 0.0
        %1621 = vadd.xlane.f32.xlu0 %v1620
        %v1622 = vpop.xlane.xlu0 %1621
        %v1623 = vsel %vm913, %v1619, 0.0
        %1624 = vadd.xlane.f32.xlu0 %v1623
        %v1625 = vpop.xlane.xlu0 %1624
        %v1626 = vrcp.pop %v1622
        %v1627 = vrcp.pop %v1625
        %v1628 = vmul.f32 %v1617, %v1626
        %v1629 = vmul.f32 %v1619, %v1627
        %v1630 = vpack.c.bf16 %v1629, %v1628
        %1632 = vrot.lane.b32.xlu0 %v1432, 112
        %v1633 = vpop.permute.xlu0 %1632
        %v1636 = vsel %vm913, %v1630, 0
        %1638 = vmatprep.subr.bf16.mxu0 0
        %1639 = vmatpush1.bf16.msra.mxu0 0
        %1640 = vmatprep.subr.bf16.mxu0 0
        %1641 = vmatpush1.bf16.msra.mxu0 0
        %1642 = vmatprep.subr.bf16.mxu0 0
        %1643 = vmatpush1.bf16.msra.mxu0 0
        %1644 = vmatprep.subr.bf16.mxu0 0
        %1645 = vmatpush1.bf16.msra.mxu0 0
        %1646 = vmatprep.subr.bf16.mxu0 0
        %1647 = vmatpush1.bf16.msra.mxu0 0
        %1648 = vmatprep.subr.bf16.mxu0 0
        %1649 = vmatpush1.bf16.msra.mxu0 0
        %1650 = vmatprep.subr.bf16.mxu0 0
        %1651 = vmatpush1.bf16.msra.mxu0 0
        %1652 = vmatprep.subr.bf16.mxu0 0
        %1653 = vmatpush1.bf16.msra.mxu0 %v1633
        %1654 = vmatprep.subr.bf16.mxu0 0
        %1655 = vmatpush2.bf16.msra.mxu0 0
        %1656 = vmatprep.subr.bf16.mxu0 0
        %1657 = vmatpush2.bf16.msra.mxu0 0
        %1658 = vmatprep.subr.bf16.mxu0 0
        %1659 = vmatpush2.bf16.msra.mxu0 0
        %1660 = vmatprep.subr.bf16.mxu0 0
        %1661 = vmatpush2.bf16.msra.mxu0 0
        %1662 = vmatprep.subr.bf16.mxu0 0
        %1663 = vmatpush2.bf16.msra.mxu0 0
        %1664 = vmatprep.subr.bf16.mxu0 0
        %1665 = vmatpush2.bf16.msra.mxu0 0
        %1666 = vmatprep.subr.bf16.mxu0 0
        %1667 = vmatpush2.bf16.msra.mxu0 0
        %1668 = vmatprep.subr.bf16.mxu0 0
        %1669 = vmatpush2.bf16.msra.mxu0 0
        %1670 = vmatprep.mubr.bf16.mxu0 0
        %1671 = vmatmul.mubr.bf16.gmra.mxu0 %v1636
        %v1672 = vpop.f32.mrf.mxu0
        %v1673 = vadd.f32 0.0, %v1672
        %v1674 = vpop.f32.mrf.mxu0
        %v1675 = vpop.f32.mrf.mxu0
        %v1676 = vadd.f32 0.0, %v1675
        %v1677 = vpop.f32.mrf.mxu0
        %1678 = vdwg.mxu0
        %1681 = vrot.lane.b32.xlu0 %v1673, 16
        %v1682 = vpop.permute.xlu0 %1681
        %1683 = vrot.lane.b32.xlu0 %v1676, 16
        %v1684 = vpop.permute.xlu0 %1683
        %1687 = vst.msk [vmem:[#allocation3 + $0x10] sm:$0xff] %vm1161, %v1682
        %1688 = vst.msk [vmem:[#allocation3 + $0x18] sm:$0xff] %vm1161, %v1684
        %1689 = vrot.lane.b32.xlu0 %v1430, 96
        %v1690 = vpop.permute.xlu0 %1689
        %1691 = vrot.lane.b32.xlu0 %v1431, 32
        %v1692 = vpop.permute.xlu0 %1691
        %v1694 = vsel %vm913, %v1690, 0
        %v1697 = vsel %vm913, %v1692, 0
        %1699 = vmatprep.subr.bf16.mxu0 0
        %1700 = vmatpush1.bf16.xpose.msra.mxu0 0
        %1701 = vmatprep.subr.bf16.mxu0 0
        %1702 = vmatpush1.bf16.xpose.msra.mxu0 0
        %1703 = vmatprep.subr.bf16.mxu0 0
        %1704 = vmatpush1.bf16.xpose.msra.mxu0 0
        %1705 = vmatprep.subr.bf16.mxu0 0
        %1706 = vmatpush1.bf16.xpose.msra.mxu0 0
        %1707 = vmatprep.subr.bf16.mxu0 0
        %1708 = vmatpush1.bf16.xpose.msra.mxu0 0
        %1709 = vmatprep.subr.bf16.mxu0 0
        %1710 = vmatpush1.bf16.xpose.msra.mxu0 0
        %1711 = vmatprep.subr.bf16.mxu0 0
        %1712 = vmatpush1.bf16.xpose.msra.mxu0 0
        %1713 = vmatprep.subr.bf16.mxu0 0
        %1714 = vmatpush1.bf16.xpose.msra.mxu0 %v1697
        %1715 = vmatprep.subr.bf16.mxu0 0
        %1716 = vmatpush2.bf16.xpose.msra.mxu0 0
        %1717 = vmatprep.subr.bf16.mxu0 0
        %1718 = vmatpush2.bf16.xpose.msra.mxu0 0
        %1719 = vmatprep.subr.bf16.mxu0 0
        %1720 = vmatpush2.bf16.xpose.msra.mxu0 0
        %1721 = vmatprep.subr.bf16.mxu0 0
        %1722 = vmatpush2.bf16.xpose.msra.mxu0 0
        %1723 = vmatprep.subr.bf16.mxu0 0
        %1724 = vmatpush2.bf16.xpose.msra.mxu0 0
        %1725 = vmatprep.subr.bf16.mxu0 0
        %1726 = vmatpush2.bf16.xpose.msra.mxu0 0
        %1727 = vmatprep.subr.bf16.mxu0 0
        %1728 = vmatpush2.bf16.xpose.msra.mxu0 0
        %1729 = vmatprep.subr.bf16.mxu0 0
        %1730 = vmatpush2.bf16.xpose.msra.mxu0 0
        %1731 = vmatprep.mubr.bf16.mxu0 0
        %1732 = vmatmul.mubr.bf16.gmra.mxu0 %v1694
        %v1733 = vpop.f32.mrf.mxu0
        %v1734 = vadd.f32 %v1436, %v1733
        %v1735 = vpop.f32.mrf.mxu0
        %v1736 = vpop.f32.mrf.mxu0
        %v1737 = vadd.f32 %v1436, %v1736
        %v1738 = vpop.f32.mrf.mxu0
        %1739 = vdwg.mxu0
        %v1740 = vsel %vm913, %v1734, -inf
        %1741 = vmax.xlane.f32.xlu0 %v1740
        %v1742 = vpop.xlane.xlu0 %1741
        %v1743 = vsel %vm913, %v1737, -inf
        %1744 = vmax.xlane.f32.xlu0 %v1743
        %v1745 = vpop.xlane.xlu0 %1744
        %v1746 = vsub.f32 %v1734, %v1742
        %v1747 = vsub.f32 %v1737, %v1745
        %v1748 = vmul.f32 %v1746, 1.442695
        %v1749 = vpow.pop %v1748
        %v1750 = vmul.f32 %v1747, 1.442695
        %v1751 = vpow.pop %v1750
        %v1752 = vsel %vm913, %v1749, 0.0
        %1753 = vadd.xlane.f32.xlu0 %v1752
        %v1754 = vpop.xlane.xlu0 %1753
        %v1755 = vsel %vm913, %v1751, 0.0
        %1756 = vadd.xlane.f32.xlu0 %v1755
        %v1757 = vpop.xlane.xlu0 %1756
        %v1758 = vrcp.pop %v1754
        %v1759 = vrcp.pop %v1757
        %v1760 = vmul.f32 %v1749, %v1758
        %v1761 = vmul.f32 %v1751, %v1759
        %v1762 = vpack.c.bf16 %v1761, %v1760
        %1763 = vrot.lane.b32.xlu0 %v1432, 96
        %v1764 = vpop.permute.xlu0 %1763
        %v1767 = vsel %vm913, %v1762, 0
        %1769 = vmatprep.subr.bf16.mxu0 0
        %1770 = vmatpush1.bf16.msra.mxu0 0
        %1771 = vmatprep.subr.bf16.mxu0 0
        %1772 = vmatpush1.bf16.msra.mxu0 0
        %1773 = vmatprep.subr.bf16.mxu0 0
        %1774 = vmatpush1.bf16.msra.mxu0 0
        %1775 = vmatprep.subr.bf16.mxu0 0
        %1776 = vmatpush1.bf16.msra.mxu0 0
        %1777 = vmatprep.subr.bf16.mxu0 0
        %1778 = vmatpush1.bf16.msra.mxu0 0
        %1779 = vmatprep.subr.bf16.mxu0 0
        %1780 = vmatpush1.bf16.msra.mxu0 0
        %1781 = vmatprep.subr.bf16.mxu0 0
        %1782 = vmatpush1.bf16.msra.mxu0 0
        %1783 = vmatprep.subr.bf16.mxu0 0
        %1784 = vmatpush1.bf16.msra.mxu0 %v1764
        %1785 = vmatprep.subr.bf16.mxu0 0
        %1786 = vmatpush2.bf16.msra.mxu0 0
        %1787 = vmatprep.subr.bf16.mxu0 0
        %1788 = vmatpush2.bf16.msra.mxu0 0
        %1789 = vmatprep.subr.bf16.mxu0 0
        %1790 = vmatpush2.bf16.msra.mxu0 0
        %1791 = vmatprep.subr.bf16.mxu0 0
        %1792 = vmatpush2.bf16.msra.mxu0 0
        %1793 = vmatprep.subr.bf16.mxu0 0
        %1794 = vmatpush2.bf16.msra.mxu0 0
        %1795 = vmatprep.subr.bf16.mxu0 0
        %1796 = vmatpush2.bf16.msra.mxu0 0
        %1797 = vmatprep.subr.bf16.mxu0 0
        %1798 = vmatpush2.bf16.msra.mxu0 0
        %1799 = vmatprep.subr.bf16.mxu0 0
        %1800 = vmatpush2.bf16.msra.mxu0 0
        %1801 = vmatprep.mubr.bf16.mxu0 0
        %1802 = vmatmul.mubr.bf16.gmra.mxu0 %v1767
        %v1803 = vpop.f32.mrf.mxu0
        %v1804 = vadd.f32 0.0, %v1803
        %v1805 = vpop.f32.mrf.mxu0
        %v1806 = vpop.f32.mrf.mxu0
        %v1807 = vadd.f32 0.0, %v1806
        %v1808 = vpop.f32.mrf.mxu0
        %1809 = vdwg.mxu0
        %1812 = vrot.lane.b32.xlu0 %v1804, 32
        %v1813 = vpop.permute.xlu0 %1812
        %1814 = vrot.lane.b32.xlu0 %v1807, 32
        %v1815 = vpop.permute.xlu0 %1814
        %1818 = vst.msk [vmem:[#allocation3 + $0x10] sm:$0xff] %vm1293, %v1813
        %1819 = vst.msk [vmem:[#allocation3 + $0x18] sm:$0xff] %vm1293, %v1815
        %1820 = vrot.lane.b32.xlu0 %v1430, 80
        %v1821 = vpop.permute.xlu0 %1820
        %1822 = vrot.lane.b32.xlu0 %v1431, 16
        %v1823 = vpop.permute.xlu0 %1822
        %v1825 = vsel %vm913, %v1821, 0
        %v1828 = vsel %vm913, %v1823, 0
        %1830 = vmatprep.subr.bf16.mxu0 0
        %1831 = vmatpush1.bf16.xpose.msra.mxu0 0
        %1832 = vmatprep.subr.bf16.mxu0 0
        %1833 = vmatpush1.bf16.xpose.msra.mxu0 0
        %1834 = vmatprep.subr.bf16.mxu0 0
        %1835 = vmatpush1.bf16.xpose.msra.mxu0 0
        %1836 = vmatprep.subr.bf16.mxu0 0
        %1837 = vmatpush1.bf16.xpose.msra.mxu0 0
        %1838 = vmatprep.subr.bf16.mxu0 0
        %1839 = vmatpush1.bf16.xpose.msra.mxu0 0
        %1840 = vmatprep.subr.bf16.mxu0 0
        %1841 = vmatpush1.bf16.xpose.msra.mxu0 0
        %1842 = vmatprep.subr.bf16.mxu0 0
        %1843 = vmatpush1.bf16.xpose.msra.mxu0 0
        %1844 = vmatprep.subr.bf16.mxu0 0
        %1845 = vmatpush1.bf16.xpose.msra.mxu0 %v1828
        %1846 = vmatprep.subr.bf16.mxu0 0
        %1847 = vmatpush2.bf16.xpose.msra.mxu0 0
        %1848 = vmatprep.subr.bf16.mxu0 0
        %1849 = vmatpush2.bf16.xpose.msra.mxu0 0
        %1850 = vmatprep.subr.bf16.mxu0 0
        %1851 = vmatpush2.bf16.xpose.msra.mxu0 0
        %1852 = vmatprep.subr.bf16.mxu0 0
        %1853 = vmatpush2.bf16.xpose.msra.mxu0 0
        %1854 = vmatprep.subr.bf16.mxu0 0
        %1855 = vmatpush2.bf16.xpose.msra.mxu0 0
        %1856 = vmatprep.subr.bf16.mxu0 0
        %1857 = vmatpush2.bf16.xpose.msra.mxu0 0
        %1858 = vmatprep.subr.bf16.mxu0 0
        %1859 = vmatpush2.bf16.xpose.msra.mxu0 0
        %1860 = vmatprep.subr.bf16.mxu0 0
        %1861 = vmatpush2.bf16.xpose.msra.mxu0 0
        %1862 = vmatprep.mubr.bf16.mxu0 0
        %1863 = vmatmul.mubr.bf16.gmra.mxu0 %v1825
        %v1864 = vpop.f32.mrf.mxu0
        %v1865 = vadd.f32 %v1436, %v1864
        %v1866 = vpop.f32.mrf.mxu0
        %v1867 = vpop.f32.mrf.mxu0
        %v1868 = vadd.f32 %v1436, %v1867
        %v1869 = vpop.f32.mrf.mxu0
        %1870 = vdwg.mxu0
        %v1871 = vsel %vm913, %v1865, -inf
        %1872 = vmax.xlane.f32.xlu0 %v1871
        %v1873 = vpop.xlane.xlu0 %1872
        %v1874 = vsel %vm913, %v1868, -inf
        %1875 = vmax.xlane.f32.xlu0 %v1874
        %v1876 = vpop.xlane.xlu0 %1875
        %v1877 = vsub.f32 %v1865, %v1873
        %v1878 = vsub.f32 %v1868, %v1876
        %v1879 = vmul.f32 %v1877, 1.442695
        %v1880 = vpow.pop %v1879
        %v1881 = vmul.f32 %v1878, 1.442695
        %v1882 = vpow.pop %v1881
        %v1883 = vsel %vm913, %v1880, 0.0
        %1884 = vadd.xlane.f32.xlu0 %v1883
        %v1885 = vpop.xlane.xlu0 %1884
        %v1886 = vsel %vm913, %v1882, 0.0
        %1887 = vadd.xlane.f32.xlu0 %v1886
        %v1888 = vpop.xlane.xlu0 %1887
        %v1889 = vrcp.pop %v1885
        %v1890 = vrcp.pop %v1888
        %v1891 = vmul.f32 %v1880, %v1889
        %v1892 = vmul.f32 %v1882, %v1890
        %v1893 = vpack.c.bf16 %v1892, %v1891
        %1894 = vrot.lane.b32.xlu0 %v1432, 80
        %v1895 = vpop.permute.xlu0 %1894
        %v1898 = vsel %vm913, %v1893, 0
        %1900 = vmatprep.subr.bf16.mxu0 0
        %1901 = vmatpush1.bf16.msra.mxu0 0
        %1902 = vmatprep.subr.bf16.mxu0 0
        %1903 = vmatpush1.bf16.msra.mxu0 0
        %1904 = vmatprep.subr.bf16.mxu0 0
        %1905 = vmatpush1.bf16.msra.mxu0 0
        %1906 = vmatprep.subr.bf16.mxu0 0
        %1907 = vmatpush1.bf16.msra.mxu0 0
        %1908 = vmatprep.subr.bf16.mxu0 0
        %1909 = vmatpush1.bf16.msra.mxu0 0
        %1910 = vmatprep.subr.bf16.mxu0 0
        %1911 = vmatpush1.bf16.msra.mxu0 0
        %1912 = vmatprep.subr.bf16.mxu0 0
        %1913 = vmatpush1.bf16.msra.mxu0 0
        %1914 = vmatprep.subr.bf16.mxu0 0
        %1915 = vmatpush1.bf16.msra.mxu0 %v1895
        %1916 = vmatprep.subr.bf16.mxu0 0
        %1917 = vmatpush2.bf16.msra.mxu0 0
        %1918 = vmatprep.subr.bf16.mxu0 0
        %1919 = vmatpush2.bf16.msra.mxu0 0
        %1920 = vmatprep.subr.bf16.mxu0 0
        %1921 = vmatpush2.bf16.msra.mxu0 0
        %1922 = vmatprep.subr.bf16.mxu0 0
        %1923 = vmatpush2.bf16.msra.mxu0 0
        %1924 = vmatprep.subr.bf16.mxu0 0
        %1925 = vmatpush2.bf16.msra.mxu0 0
        %1926 = vmatprep.subr.bf16.mxu0 0
        %1927 = vmatpush2.bf16.msra.mxu0 0
        %1928 = vmatprep.subr.bf16.mxu0 0
        %1929 = vmatpush2.bf16.msra.mxu0 0
        %1930 = vmatprep.subr.bf16.mxu0 0
        %1931 = vmatpush2.bf16.msra.mxu0 0
        %1932 = vmatprep.mubr.bf16.mxu0 0
        %1933 = vmatmul.mubr.bf16.gmra.mxu0 %v1898
        %v1934 = vpop.f32.mrf.mxu0
        %v1935 = vadd.f32 0.0, %v1934
        %v1936 = vpop.f32.mrf.mxu0
        %v1937 = vpop.f32.mrf.mxu0
        %v1938 = vadd.f32 0.0, %v1937
        %v1939 = vpop.f32.mrf.mxu0
        %1940 = vdwg.mxu0
        %1943 = vrot.lane.b32.xlu0 %v1935, 48
        %v1944 = vpop.permute.xlu0 %1943
        %1945 = vrot.lane.b32.xlu0 %v1938, 48
        %v1946 = vpop.permute.xlu0 %1945
        %1949 = vst.msk [vmem:[#allocation3 + $0x10] sm:$0xff] %vm1425, %v1944
        %1950 = vst.msk [vmem:[#allocation3 + $0x18] sm:$0xff] %vm1425, %v1946
        %v1951 = vld [vmem:[#allocation3] sm:$0xff]
        %v1952 = vld [vmem:[#allocation3 + $0x8] sm:$0xff]
        %v1953 = vld [vmem:[#allocation3 + $0x10] sm:$0xff]
        %v1954 = vld [vmem:[#allocation3 + $0x18] sm:$0xff]
        %v1955 = vpack.c.bf16 %v1952, %v1951
        %v1956 = vpack.c.bf16 %v1954, %v1953
        %v1957 = vld [vmem:[%s651] sm:$0xf]
        %v1958 = vld [vmem:[%s651 + $0x4] sm:$0xf]
        %v1959 = vld [vmem:[%s651 + $0x8] sm:$0xf]
        %v1960 = vld [vmem:[%s651 + $0xc] sm:$0xf]
        %v1961 = vld [vmem:[%s651 + $0x10] sm:$0xf]
        %v1962 = vld [vmem:[%s651 + $0x14] sm:$0xf]
        %v1963 = vld [vmem:[%s651 + $0x18] sm:$0xf]
        %v1964 = vld [vmem:[%s651 + $0x1c] sm:$0xf]
        %v1965 = vld [vmem:[%s654] sm:$0x1]
        %v1967 = vlaneseq
        %v1968 = vshrl.u32 %v1967, 7
        %v1969 = vsub.s32 0, %v1968
        %v1970 = vrot.slane %v1965, %v1969
        %v1980 = vunpack.c.l.b16 %v1957
        %v1981 = vunpack.c.l.b16 %v1958
        %v1982 = vunpack.c.l.b16 %v1959
        %v1983 = vunpack.c.l.b16 %v1960
        %v1984 = vunpack.c.l.b16 %v1961
        %v1985 = vunpack.c.l.b16 %v1962
        %v1986 = vunpack.c.l.b16 %v1963
        %v1987 = vunpack.c.l.b16 %v1964
        %v1988 = vpack.c.b16 %v1981, %v1980
        %v1989 = vpack.c.b16 %v1983, %v1982
        %v1990 = vpack.c.b16 %v1985, %v1984
        %v1991 = vpack.c.b16 %v1987, %v1986
        %v1997 = vsel %vm839, %v1955, 0
        %v2000 = vsel %vm839, %v1956, 0
        %2002 = vmatprep.subr.bf16.mxu0 0
        %2003 = vmatpush1.bf16.msra.mxu0 0
        %2004 = vmatprep.subr.bf16.mxu0 0
        %2005 = vmatpush1.bf16.msra.mxu0 0
        %2006 = vmatprep.subr.bf16.mxu0 0
        %2007 = vmatpush1.bf16.msra.mxu0 0
        %2008 = vmatprep.subr.bf16.mxu0 0
        %2009 = vmatpush1.bf16.msra.mxu0 0
        %2010 = vmatprep.subr.bf16.mxu0 0
        %2011 = vmatpush1.bf16.msra.mxu0 %v1991
        %2012 = vmatprep.subr.bf16.mxu0 0
        %2013 = vmatpush1.bf16.msra.mxu0 %v1990
        %2014 = vmatprep.subr.bf16.mxu0 0
        %2015 = vmatpush1.bf16.msra.mxu0 %v1989
        %2016 = vmatprep.subr.bf16.mxu0 0
        %2017 = vmatpush1.bf16.msra.mxu0 %v1988
        %2018 = vmatprep.subr.bf16.mxu0 0
        %2019 = vmatpush2.bf16.msra.mxu0 0
        %2020 = vmatprep.subr.bf16.mxu0 0
        %2021 = vmatpush2.bf16.msra.mxu0 0
        %2022 = vmatprep.subr.bf16.mxu0 0
        %2023 = vmatpush2.bf16.msra.mxu0 0
        %2024 = vmatprep.subr.bf16.mxu0 0
        %2025 = vmatpush2.bf16.msra.mxu0 0
        %2026 = vmatprep.subr.bf16.mxu0 0
        %2027 = vmatpush2.bf16.msra.mxu0 0
        %2028 = vmatprep.subr.bf16.mxu0 0
        %2029 = vmatpush2.bf16.msra.mxu0 0
        %2030 = vmatprep.subr.bf16.mxu0 0
        %2031 = vmatpush2.bf16.msra.mxu0 0
        %2032 = vmatprep.subr.bf16.mxu0 0
        %2033 = vmatpush2.bf16.msra.mxu0 0
        %2034 = vmatprep.mubr.bf16.mxu0 0
        %2035 = vmatmul.mubr.bf16.gmra.mxu0 %v1997
        %v2036 = vpop.f32.mrf.mxu0
        %v2037 = vadd.f32 %v1970, %v2036
        %v2038 = vpop.f32.mrf.mxu0
        %v2039 = vpop.f32.mrf.mxu0
        %v2040 = vadd.f32 %v1970, %v2039
        %v2041 = vpop.f32.mrf.mxu0
        %2042 = vmatprep.mubr.bf16.mxu0 0
        %2043 = vmatmul.mubr.bf16.gmra.mxu0 %v2000
        %v2044 = vpop.f32.mrf.mxu0
        %v2045 = vadd.f32 %v1970, %v2044
        %v2046 = vpop.f32.mrf.mxu0
        %v2047 = vpop.f32.mrf.mxu0
        %v2048 = vadd.f32 %v1970, %v2047
        %v2049 = vpop.f32.mrf.mxu0
        %2050 = vdwg.mxu0
        %v2051 = vadd.f32 %v2037, %v772
        %v2052 = vadd.f32 %v2040, %v773
        %v2053 = vadd.f32 %v2045, %v774
        %v2054 = vadd.f32 %v2048, %v775
        %v2055 = vld [vmem:[%s657] sm:$0x1]
        %v2056 = vld [vmem:[%s660] sm:$0x1]
        %v2057 = vsel %vm839, %v2051, 0.0
        %2058 = vadd.xlane.f32.xlu0 %v2057
        %v2059 = vpop.xlane.xlu0 %2058
        %v2060 = vsel %vm839, %v2052, 0.0
        %2061 = vadd.xlane.f32.xlu0 %v2060
        %v2062 = vpop.xlane.xlu0 %2061
        %v2063 = vsel %vm839, %v2053, 0.0
        %2064 = vadd.xlane.f32.xlu0 %v2063
        %v2065 = vpop.xlane.xlu0 %2064
        %v2066 = vsel %vm839, %v2054, 0.0
        %2067 = vadd.xlane.f32.xlu0 %v2066
        %v2068 = vpop.xlane.xlu0 %2067
        %v2069 = vrcp.pop 64.0
        %v2070 = vmul.f32 %v2059, %v2069
        %v2071 = vmul.f32 %v2062, %v2069
        %v2072 = vmul.f32 %v2065, %v2069
        %v2073 = vmul.f32 %v2068, %v2069
        %v2074 = vsub.f32 %v2051, %v2070
        %v2075 = vsub.f32 %v2052, %v2071
        %v2076 = vsub.f32 %v2053, %v2072
        %v2077 = vsub.f32 %v2054, %v2073
        %v2078 = vmul.f32 %v2074, %v2074
        %v2079 = vmul.f32 %v2075, %v2075
        %v2080 = vmul.f32 %v2076, %v2076
        %v2081 = vmul.f32 %v2077, %v2077
        %v2082 = vsel %vm839, %v2078, 0.0
        %2083 = vadd.xlane.f32.xlu0 %v2082
        %v2084 = vpop.xlane.xlu0 %2083
        %v2085 = vsel %vm839, %v2079, 0.0
        %2086 = vadd.xlane.f32.xlu0 %v2085
        %v2087 = vpop.xlane.xlu0 %2086
        %v2088 = vsel %vm839, %v2080, 0.0
        %2089 = vadd.xlane.f32.xlu0 %v2088
        %v2090 = vpop.xlane.xlu0 %2089
        %v2091 = vsel %vm839, %v2081, 0.0
        %2092 = vadd.xlane.f32.xlu0 %v2091
        %v2093 = vpop.xlane.xlu0 %2092
        %v2094 = vmul.f32 %v2084, %v2069
        %v2095 = vmul.f32 %v2087, %v2069
        %v2096 = vmul.f32 %v2090, %v2069
        %v2097 = vmul.f32 %v2093, %v2069
        %v2098 = vadd.f32 %v2094, 1e-12
        %v2099 = vadd.f32 %v2095, 1e-12
        %v2100 = vadd.f32 %v2096, 1e-12
        %v2101 = vadd.f32 %v2097, 1e-12
        %v2102 = vrsqrt.pop %v2098
        %v2103 = vrsqrt.pop %v2099
        %v2104 = vrsqrt.pop %v2100
        %v2105 = vrsqrt.pop %v2101
        %v2106 = vmul.f32 %v2074, %v2102
        %v2107 = vmul.f32 %v2075, %v2103
        %v2108 = vmul.f32 %v2076, %v2104
        %v2109 = vmul.f32 %v2077, %v2105
        %v2111 = vlaneseq
        %v2112 = vshrl.u32 %v2111, 7
        %v2113 = vsub.s32 0, %v2112
        %v2114 = vrot.slane %v2055, %v2113
        %v2116 = vmul.f32 %v2106, %v2114
        %v2117 = vmul.f32 %v2107, %v2114
        %v2118 = vmul.f32 %v2108, %v2114
        %v2119 = vmul.f32 %v2109, %v2114
        %v2121 = vlaneseq
        %v2122 = vshrl.u32 %v2121, 7
        %v2123 = vsub.s32 0, %v2122
        %v2124 = vrot.slane %v2056, %v2123
        %v2126 = vadd.f32 %v2116, %v2124
        %v2127 = vadd.f32 %v2117, %v2124
        %v2128 = vadd.f32 %v2118, %v2124
        %v2129 = vadd.f32 %v2119, %v2124
        %v2130 = vpack.c.bf16 %v2127, %v2126
        %v2131 = vpack.c.bf16 %v2129, %v2128
        %v2132 = vld [vmem:[%s665] sm:$0xf]
        %v2133 = vld [vmem:[%s665 + $0x4] sm:$0xf]
        %v2134 = vld [vmem:[%s665 + $0x8] sm:$0xf]
        %v2135 = vld [vmem:[%s665 + $0xc] sm:$0xf]
        %v2136 = vld [vmem:[%s665 + $0x10] sm:$0xf]
        %v2137 = vld [vmem:[%s665 + $0x14] sm:$0xf]
        %v2138 = vld [vmem:[%s665 + $0x18] sm:$0xf]
        %v2139 = vld [vmem:[%s665 + $0x1c] sm:$0xf]
        %v2140 = vld [vmem:[%s668] sm:$0x1]
        %v2142 = vlaneseq
        %v2143 = vshrl.u32 %v2142, 7
        %v2144 = vsub.s32 0, %v2143
        %v2145 = vrot.slane %v2140, %v2144
        %v2155 = vunpack.c.l.b16 %v2132
        %v2156 = vunpack.c.l.b16 %v2133
        %v2157 = vunpack.c.l.b16 %v2134
        %v2158 = vunpack.c.l.b16 %v2135
        %v2159 = vunpack.c.l.b16 %v2136
        %v2160 = vunpack.c.l.b16 %v2137
        %v2161 = vunpack.c.l.b16 %v2138
        %v2162 = vunpack.c.l.b16 %v2139
        %v2163 = vpack.c.b16 %v2156, %v2155
        %v2164 = vpack.c.b16 %v2158, %v2157
        %v2165 = vpack.c.b16 %v2160, %v2159
        %v2166 = vpack.c.b16 %v2162, %v2161
        %v2172 = vsel %vm839, %v2130, 0
        %v2175 = vsel %vm839, %v2131, 0
        %2177 = vmatprep.subr.bf16.mxu0 0
        %2178 = vmatpush1.bf16.msra.mxu0 0
        %2179 = vmatprep.subr.bf16.mxu0 0
        %2180 = vmatpush1.bf16.msra.mxu0 0
        %2181 = vmatprep.subr.bf16.mxu0 0
        %2182 = vmatpush1.bf16.msra.mxu0 0
        %2183 = vmatprep.subr.bf16.mxu0 0
        %2184 = vmatpush1.bf16.msra.mxu0 0
        %2185 = vmatprep.subr.bf16.mxu0 0
        %2186 = vmatpush1.bf16.msra.mxu0 %v2166
        %2187 = vmatprep.subr.bf16.mxu0 0
        %2188 = vmatpush1.bf16.msra.mxu0 %v2165
        %2189 = vmatprep.subr.bf16.mxu0 0
        %2190 = vmatpush1.bf16.msra.mxu0 %v2164
        %2191 = vmatprep.subr.bf16.mxu0 0
        %2192 = vmatpush1.bf16.msra.mxu0 %v2163
        %2193 = vmatprep.subr.bf16.mxu0 0
        %2194 = vmatpush2.bf16.msra.mxu0 0
        %2195 = vmatprep.subr.bf16.mxu0 0
        %2196 = vmatpush2.bf16.msra.mxu0 0
        %2197 = vmatprep.subr.bf16.mxu0 0
        %2198 = vmatpush2.bf16.msra.mxu0 0
        %2199 = vmatprep.subr.bf16.mxu0 0
        %2200 = vmatpush2.bf16.msra.mxu0 0
        %2201 = vmatprep.subr.bf16.mxu0 0
        %2202 = vmatpush2.bf16.msra.mxu0 0
        %2203 = vmatprep.subr.bf16.mxu0 0
        %2204 = vmatpush2.bf16.msra.mxu0 0
        %2205 = vmatprep.subr.bf16.mxu0 0
        %2206 = vmatpush2.bf16.msra.mxu0 0
        %2207 = vmatprep.subr.bf16.mxu0 0
        %2208 = vmatpush2.bf16.msra.mxu0 0
        %2209 = vmatprep.mubr.bf16.mxu0 0
        %2210 = vmatmul.mubr.bf16.gmra.mxu0 %v2172
        %v2211 = vpop.f32.mrf.mxu0
        %v2212 = vadd.f32 %v2145, %v2211
        %v2213 = vpop.f32.mrf.mxu0
        %v2214 = vpop.f32.mrf.mxu0
        %v2215 = vadd.f32 %v2145, %v2214
        %v2216 = vpop.f32.mrf.mxu0
        %2217 = vmatprep.mubr.bf16.mxu0 0
        %2218 = vmatmul.mubr.bf16.gmra.mxu0 %v2175
        %v2219 = vpop.f32.mrf.mxu0
        %v2220 = vadd.f32 %v2145, %v2219
        %v2221 = vpop.f32.mrf.mxu0
        %v2222 = vpop.f32.mrf.mxu0
        %v2223 = vadd.f32 %v2145, %v2222
        %v2224 = vpop.f32.mrf.mxu0
        %2225 = vdwg.mxu0
        %v2226 = vmul.f32 %v2212, %v2212
        %v2227 = vmul.f32 %v2215, %v2215
        %v2228 = vmul.f32 %v2220, %v2220
        %v2229 = vmul.f32 %v2223, %v2223
        %v2230 = vmul.f32 %v2212, %v2226
        %v2231 = vmul.f32 %v2215, %v2227
        %v2232 = vmul.f32 %v2220, %v2228
        %v2233 = vmul.f32 %v2223, %v2229
        %v2234 = vmul.f32 %v2230, 0.044715
        %v2235 = vmul.f32 %v2231, 0.044715
        %v2236 = vmul.f32 %v2232, 0.044715
        %v2237 = vmul.f32 %v2233, 0.044715
        %v2238 = vadd.f32 %v2212, %v2234
        %v2239 = vadd.f32 %v2215, %v2235
        %v2240 = vadd.f32 %v2220, %v2236
        %v2241 = vadd.f32 %v2223, %v2237
        %v2242 = vmul.f32 %v2238, 0.7978846
        %v2243 = vmul.f32 %v2239, 0.7978846
        %v2244 = vmul.f32 %v2240, 0.7978846
        %v2245 = vmul.f32 %v2241, 0.7978846
        %v2246 = vtanh.pop %v2242
        %v2247 = vtanh.pop %v2243
        %v2248 = vtanh.pop %v2244
        %v2249 = vtanh.pop %v2245
        %v2250 = vadd.f32 %v2246, 1.0
        %v2251 = vadd.f32 %v2247, 1.0
        %v2252 = vadd.f32 %v2248, 1.0
        %v2253 = vadd.f32 %v2249, 1.0
        %v2254 = vmul.f32 %v2250, 0.5
        %v2255 = vmul.f32 %v2251, 0.5
        %v2256 = vmul.f32 %v2252, 0.5
        %v2257 = vmul.f32 %v2253, 0.5
        %v2258 = vmul.f32 %v2212, %v2254
        %v2259 = vmul.f32 %v2215, %v2255
        %v2260 = vmul.f32 %v2220, %v2256
        %v2261 = vmul.f32 %v2223, %v2257
        %v2262 = vpack.c.bf16 %v2259, %v2258
        %v2263 = vpack.c.bf16 %v2261, %v2260
        %v2264 = vld [vmem:[%s673] sm:$0xf]
        %v2265 = vld [vmem:[%s673 + $0x4] sm:$0xf]
        %v2266 = vld [vmem:[%s673 + $0x8] sm:$0xf]
        %v2267 = vld [vmem:[%s673 + $0xc] sm:$0xf]
        %v2268 = vld [vmem:[%s673 + $0x10] sm:$0xf]
        %v2269 = vld [vmem:[%s673 + $0x14] sm:$0xf]
        %v2270 = vld [vmem:[%s673 + $0x18] sm:$0xf]
        %v2271 = vld [vmem:[%s673 + $0x1c] sm:$0xf]
        %v2272 = vld [vmem:[%s673 + $0x20] sm:$0xf]
        %v2273 = vld [vmem:[%s673 + $0x24] sm:$0xf]
        %v2274 = vld [vmem:[%s673 + $0x28] sm:$0xf]
        %v2275 = vld [vmem:[%s673 + $0x2c] sm:$0xf]
        %v2276 = vld [vmem:[%s673 + $0x30] sm:$0xf]
        %v2277 = vld [vmem:[%s673 + $0x34] sm:$0xf]
        %v2278 = vld [vmem:[%s673 + $0x38] sm:$0xf]
        %v2279 = vld [vmem:[%s673 + $0x3c] sm:$0xf]
        %v2280 = vld [vmem:[%s676] sm:$0x1]
        %v2282 = vlaneseq
        %v2283 = vshrl.u32 %v2282, 7
        %v2284 = vsub.s32 0, %v2283
        %v2285 = vrot.slane %v2280, %v2284
        %v2303 = vunpack.c.l.b16 %v2264
        %v2304 = vunpack.c.l.b16 %v2265
        %v2305 = vunpack.c.l.b16 %v2266
        %v2306 = vunpack.c.l.b16 %v2267
        %v2307 = vunpack.c.l.b16 %v2268
        %v2308 = vunpack.c.l.b16 %v2269
        %v2309 = vunpack.c.l.b16 %v2270
        %v2310 = vunpack.c.l.b16 %v2271
        %v2311 = vunpack.c.l.b16 %v2272
        %v2312 = vunpack.c.l.b16 %v2273
        %v2313 = vunpack.c.l.b16 %v2274
        %v2314 = vunpack.c.l.b16 %v2275
        %v2315 = vunpack.c.l.b16 %v2276
        %v2316 = vunpack.c.l.b16 %v2277
        %v2317 = vunpack.c.l.b16 %v2278
        %v2318 = vunpack.c.l.b16 %v2279
        %v2319 = vpack.c.b16 %v2304, %v2303
        %v2320 = vpack.c.b16 %v2306, %v2305
        %v2321 = vpack.c.b16 %v2308, %v2307
        %v2322 = vpack.c.b16 %v2310, %v2309
        %v2323 = vpack.c.b16 %v2312, %v2311
        %v2324 = vpack.c.b16 %v2314, %v2313
        %v2325 = vpack.c.b16 %v2316, %v2315
        %v2326 = vpack.c.b16 %v2318, %v2317
        %2335 = vmatprep.subr.bf16.mxu0 0
        %2336 = vmatpush1.bf16.msra.mxu0 %v2326
        %2337 = vmatprep.subr.bf16.mxu0 0
        %2338 = vmatpush1.bf16.msra.mxu0 %v2325
        %2339 = vmatprep.subr.bf16.mxu0 0
        %2340 = vmatpush1.bf16.msra.mxu0 %v2324
        %2341 = vmatprep.subr.bf16.mxu0 0
        %2342 = vmatpush1.bf16.msra.mxu0 %v2323
        %2343 = vmatprep.subr.bf16.mxu0 0
        %2344 = vmatpush1.bf16.msra.mxu0 %v2322
        %2345 = vmatprep.subr.bf16.mxu0 0
        %2346 = vmatpush1.bf16.msra.mxu0 %v2321
        %2347 = vmatprep.subr.bf16.mxu0 0
        %2348 = vmatpush1.bf16.msra.mxu0 %v2320
        %2349 = vmatprep.subr.bf16.mxu0 0
        %2350 = vmatpush1.bf16.msra.mxu0 %v2319
        %2351 = vmatprep.subr.bf16.mxu0 0
        %2352 = vmatpush2.bf16.msra.mxu0 0
        %2353 = vmatprep.subr.bf16.mxu0 0
        %2354 = vmatpush2.bf16.msra.mxu0 0
        %2355 = vmatprep.subr.bf16.mxu0 0
        %2356 = vmatpush2.bf16.msra.mxu0 0
        %2357 = vmatprep.subr.bf16.mxu0 0
        %2358 = vmatpush2.bf16.msra.mxu0 0
        %2359 = vmatprep.subr.bf16.mxu0 0
        %2360 = vmatpush2.bf16.msra.mxu0 0
        %2361 = vmatprep.subr.bf16.mxu0 0
        %2362 = vmatpush2.bf16.msra.mxu0 0
        %2363 = vmatprep.subr.bf16.mxu0 0
        %2364 = vmatpush2.bf16.msra.mxu0 0
        %2365 = vmatprep.subr.bf16.mxu0 0
        %2366 = vmatpush2.bf16.msra.mxu0 0
        %2367 = vmatprep.mubr.bf16.mxu0 0
        %2368 = vmatmul.mubr.bf16.gmra.mxu0 %v2262
        %v2369 = vpop.f32.mrf.mxu0
        %v2370 = vadd.f32 %v2285, %v2369
        %v2371 = vpop.f32.mrf.mxu0
        %v2372 = vpop.f32.mrf.mxu0
        %v2373 = vadd.f32 %v2285, %v2372
        %v2374 = vpop.f32.mrf.mxu0
        %2375 = vmatprep.mubr.bf16.mxu0 0
        %2376 = vmatmul.mubr.bf16.gmra.mxu0 %v2263
        %v2377 = vpop.f32.mrf.mxu0
        %v2378 = vadd.f32 %v2285, %v2377
        %v2379 = vpop.f32.mrf.mxu0
        %v2380 = vpop.f32.mrf.mxu0
        %v2381 = vadd.f32 %v2285, %v2380
        %v2382 = vpop.f32.mrf.mxu0
        %2383 = vdwg.mxu0
        %v2384 = vadd.f32 %v2370, %v2126
        %v2385 = vadd.f32 %v2373, %v2127
        %v2386 = vadd.f32 %v2378, %v2128
        %v2387 = vadd.f32 %v2381, %v2129
        %v2388 = vld [vmem:[%s679] sm:$0x1]
        %v2389 = vld [vmem:[%s682] sm:$0x1]
        %v2390 = vsel %vm839, %v2384, 0.0
        %2391 = vadd.xlane.f32.xlu0 %v2390
        %v2392 = vpop.xlane.xlu0 %2391
        %v2393 = vsel %vm839, %v2385, 0.0
        %2394 = vadd.xlane.f32.xlu0 %v2393
        %v2395 = vpop.xlane.xlu0 %2394
        %v2396 = vsel %vm839, %v2386, 0.0
        %2397 = vadd.xlane.f32.xlu0 %v2396
        %v2398 = vpop.xlane.xlu0 %2397
        %v2399 = vsel %vm839, %v2387, 0.0
        %2400 = vadd.xlane.f32.xlu0 %v2399
        %v2401 = vpop.xlane.xlu0 %2400
        %v2402 = vmul.f32 %v2392, %v2069
        %v2403 = vmul.f32 %v2395, %v2069
        %v2404 = vmul.f32 %v2398, %v2069
        %v2405 = vmul.f32 %v2401, %v2069
        %v2406 = vsub.f32 %v2384, %v2402
        %v2407 = vsub.f32 %v2385, %v2403
        %v2408 = vsub.f32 %v2386, %v2404
        %v2409 = vsub.f32 %v2387, %v2405
        %v2410 = vmul.f32 %v2406, %v2406
        %v2411 = vmul.f32 %v2407, %v2407
        %v2412 = vmul.f32 %v2408, %v2408
        %v2413 = vmul.f32 %v2409, %v2409
        %v2414 = vsel %vm839, %v2410, 0.0
        %2415 = vadd.xlane.f32.xlu0 %v2414
        %v2416 = vpop.xlane.xlu0 %2415
        %v2417 = vsel %vm839, %v2411, 0.0
        %2418 = vadd.xlane.f32.xlu0 %v2417
        %v2419 = vpop.xlane.xlu0 %2418
        %v2420 = vsel %vm839, %v2412, 0.0
        %2421 = vadd.xlane.f32.xlu0 %v2420
        %v2422 = vpop.xlane.xlu0 %2421
        %v2423 = vsel %vm839, %v2413, 0.0
        %2424 = vadd.xlane.f32.xlu0 %v2423
        %v2425 = vpop.xlane.xlu0 %2424
        %v2426 = vmul.f32 %v2416, %v2069
        %v2427 = vmul.f32 %v2419, %v2069
        %v2428 = vmul.f32 %v2422, %v2069
        %v2429 = vmul.f32 %v2425, %v2069
        %v2430 = vadd.f32 %v2426, 1e-12
        %v2431 = vadd.f32 %v2427, 1e-12
        %v2432 = vadd.f32 %v2428, 1e-12
        %v2433 = vadd.f32 %v2429, 1e-12
        %v2434 = vrsqrt.pop %v2430
        %v2435 = vrsqrt.pop %v2431
        %v2436 = vrsqrt.pop %v2432
        %v2437 = vrsqrt.pop %v2433
        %v2438 = vmul.f32 %v2406, %v2434
        %v2439 = vmul.f32 %v2407, %v2435
        %v2440 = vmul.f32 %v2408, %v2436
        %v2441 = vmul.f32 %v2409, %v2437
        %v2443 = vlaneseq
        %v2444 = vshrl.u32 %v2443, 7
        %v2445 = vsub.s32 0, %v2444
        %v2446 = vrot.slane %v2388, %v2445
        %v2448 = vmul.f32 %v2438, %v2446
        %v2449 = vmul.f32 %v2439, %v2446
        %v2450 = vmul.f32 %v2440, %v2446
        %v2451 = vmul.f32 %v2441, %v2446
        %v2453 = vlaneseq
        %v2454 = vshrl.u32 %v2453, 7
        %v2455 = vsub.s32 0, %v2454
        %v2456 = vrot.slane %v2389, %v2455
        %v2458 = vadd.f32 %v2448, %v2456
        %v2459 = vadd.f32 %v2449, %v2456
        %v2460 = vadd.f32 %v2450, %v2456
        %v2461 = vadd.f32 %v2451, %v2456
        %2462 = vst.msk [vmem:[#allocation2] sm:$0xff] %vm839, %v2458
        %2463 = vst.msk [vmem:[#allocation2 + $0x8] sm:$0xff] %vm839, %v2459
        %2464 = vst.msk [vmem:[#allocation2 + $0x10] sm:$0xff] %vm839, %v2460
        %2465 = vst.msk [vmem:[#allocation2 + $0x18] sm:$0xff] %vm839, %v2461
        %p2466 = scmp.eq.s32.totalorder %s28, 1
        // Predicated region
        $region89: #{encoder_forward.1} parent=83 // pred_check
          %p2467 = pneg %p2466
        $region90: #{encoder_forward.1} parent=83 // pred_check_branch
          %2469 = sbr.rel (%p2467) target = $region92
        $region91: #{encoder_forward.1} parent=83 // pred_region
          %v2471 = vsel %vm913, %v776, 0
          %2473 = vmatprep.subr.mxu0 0.0
          %2474 = vmatpush1.msra.mxu0 0.0
          %2475 = vmatprep.subr.mxu0 0.0
          %2476 = vmatpush1.msra.mxu0 0.0
          %2477 = vmatprep.subr.mxu0 0.0
          %2478 = vmatpush1.msra.mxu0 0.0
          %2479 = vmatprep.subr.mxu0 0.0
          %2480 = vmatpush1.msra.mxu0 0.0
          %2481 = vmatprep.subr.mxu0 0.0
          %2482 = vmatpush1.msra.mxu0 0.0
          %2483 = vmatprep.subr.mxu0 0.0
          %2484 = vmatpush1.msra.mxu0 0.0
          %2485 = vmatprep.subr.mxu0 0.0
          %2486 = vmatpush1.msra.mxu0 0.0
          %2487 = vmatprep.subr.mxu0 0.0
          %2488 = vmatpush1.msra.mxu0 0.0
          %2489 = vmatprep.subr.mxu0 0.0
          %2490 = vmatpush1.msra.mxu0 0.0
          %2491 = vmatprep.subr.mxu0 0.0
          %2492 = vmatpush1.msra.mxu0 0.0
          %2493 = vmatprep.subr.mxu0 0.0
          %2494 = vmatpush1.msra.mxu0 0.0
          %2495 = vmatprep.subr.mxu0 0.0
          %2496 = vmatpush1.msra.mxu0 0.0
          %2497 = vmatprep.subr.mxu0 0.0
          %2498 = vmatpush1.msra.mxu0 0.0
          %2499 = vmatprep.subr.mxu0 0.0
          %2500 = vmatpush1.msra.mxu0 0.0
          %2501 = vmatprep.subr.mxu0 0.0
          %2502 = vmatpush1.msra.mxu0 %v2459
          %2503 = vmatprep.subr.mxu0 0.0
          %2504 = vmatpush1.msra.mxu0 %v2458
          %2505 = vmatprep.subr.mxu0 0.0
          %2506 = vmatpush2.msra.mxu0 0.0
          %2507 = vmatprep.subr.mxu0 0.0
          %2508 = vmatpush2.msra.mxu0 0.0
          %2509 = vmatprep.subr.mxu0 0.0
          %2510 = vmatpush2.msra.mxu0 0.0
          %2511 = vmatprep.subr.mxu0 0.0
          %2512 = vmatpush2.msra.mxu0 0.0
          %2513 = vmatprep.subr.mxu0 0.0
          %2514 = vmatpush2.msra.mxu0 0.0
          %2515 = vmatprep.subr.mxu0 0.0
          %2516 = vmatpush2.msra.mxu0 0.0
          %2517 = vmatprep.subr.mxu0 0.0
          %2518 = vmatpush2.msra.mxu0 0.0
          %2519 = vmatprep.subr.mxu0 0.0
          %2520 = vmatpush2.msra.mxu0 0.0
          %2521 = vmatprep.subr.mxu0 0.0
          %2522 = vmatpush2.msra.mxu0 0.0
          %2523 = vmatprep.subr.mxu0 0.0
          %2524 = vmatpush2.msra.mxu0 0.0
          %2525 = vmatprep.subr.mxu0 0.0
          %2526 = vmatpush2.msra.mxu0 0.0
          %2527 = vmatprep.subr.mxu0 0.0
          %2528 = vmatpush2.msra.mxu0 0.0
          %2529 = vmatprep.subr.mxu0 0.0
          %2530 = vmatpush2.msra.mxu0 0.0
          %2531 = vmatprep.subr.mxu0 0.0
          %2532 = vmatpush2.msra.mxu0 0.0
          %2533 = vmatprep.subr.mxu0 0.0
          %2534 = vmatpush2.msra.mxu0 0.0
          %2535 = vmatprep.subr.mxu0 0.0
          %2536 = vmatpush2.msra.mxu0 0.0
          %2537 = vmatprep.mubr.f32.mxu0 0.0
          %2538 = vmatmul.mubr.f32.gmra.mxu0 %v2471
          %v2539 = vpop.f32.mrf.mxu0
          %v2540 = vadd.f32 0.0, %v2539
          %v2541 = vpop.f32.mrf.mxu0
          %2542 = vdwg.mxu0
          %vm2543 = vcmask 122880
          %v2544 = vsel %vm2543, %v776, 0.0
          %2545 = vadd.xlane.f32.xlu0 %v2544
          %v2546 = vpop.xlane.xlu0 %2545
          %v2547 = vmax.f32 %v2546, 1e-09
          %v2548 = vrcp.pop %v2547
          %v2549 = vmul.f32 %v2540, %v2548
          %vm2550 = vcmask 516096
          %2551 = vst.msk [vmem:[#allocation4] sm:$0x1] %vm2550, %v2549
          %v2552 = vrot.slane %v776, 1
          %v2553 = vsel %vm913, %v2552, 0
          %2555 = vmatprep.subr.mxu0 0.0
          %2556 = vmatpush1.msra.mxu0 0.0
          %2557 = vmatprep.subr.mxu0 0.0
          %2558 = vmatpush1.msra.mxu0 0.0
          %2559 = vmatprep.subr.mxu0 0.0
          %2560 = vmatpush1.msra.mxu0 0.0
          %2561 = vmatprep.subr.mxu0 0.0
          %2562 = vmatpush1.msra.mxu0 0.0
          %2563 = vmatprep.subr.mxu0 0.0
          %2564 = vmatpush1.msra.mxu0 0.0
          %2565 = vmatprep.subr.mxu0 0.0
          %2566 = vmatpush1.msra.mxu0 0.0
          %2567 = vmatprep.subr.mxu0 0.0
          %2568 = vmatpush1.msra.mxu0 0.0
          %2569 = vmatprep.subr.mxu0 0.0
          %2570 = vmatpush1.msra.mxu0 0.0
          %2571 = vmatprep.subr.mxu0 0.0
          %2572 = vmatpush1.msra.mxu0 0.0
          %2573 = vmatprep.subr.mxu0 0.0
          %2574 = vmatpush1.msra.mxu0 0.0
          %2575 = vmatprep.subr.mxu0 0.0
          %2576 = vmatpush1.msra.mxu0 0.0
          %2577 = vmatprep.subr.mxu0 0.0
          %2578 = vmatpush1.msra.mxu0 0.0
          %2579 = vmatprep.subr.mxu0 0.0
          %2580 = vmatpush1.msra.mxu0 0.0
          %2581 = vmatprep.subr.mxu0 0.0
          %2582 = vmatpush1.msra.mxu0 0.0
          %2583 = vmatprep.subr.mxu0 0.0
          %2584 = vmatpush1.msra.mxu0 %v2461
          %2585 = vmatprep.subr.mxu0 0.0
          %2586 = vmatpush1.msra.mxu0 %v2460
          %2587 = vmatprep.subr.mxu0 0.0
          %2588 = vmatpush2.msra.mxu0 0.0
          %2589 = vmatprep.subr.mxu0 0.0
          %2590 = vmatpush2.msra.mxu0 0.0
          %2591 = vmatprep.subr.mxu0 0.0
          %2592 = vmatpush2.msra.mxu0 0.0
          %2593 = vmatprep.subr.mxu0 0.0
          %2594 = vmatpush2.msra.mxu0 0.0
          %2595 = vmatprep.subr.mxu0 0.0
          %2596 = vmatpush2.msra.mxu0 0.0
          %2597 = vmatprep.subr.mxu0 0.0
          %2598 = vmatpush2.msra.mxu0 0.0
          %2599 = vmatprep.subr.mxu0 0.0
          %2600 = vmatpush2.msra.mxu0 0.0
          %2601 = vmatprep.subr.mxu0 0.0
          %2602 = vmatpush2.msra.mxu0 0.0
          %2603 = vmatprep.subr.mxu0 0.0
          %2604 = vmatpush2.msra.mxu0 0.0
          %2605 = vmatprep.subr.mxu0 0.0
          %2606 = vmatpush2.msra.mxu0 0.0
          %2607 = vmatprep.subr.mxu0 0.0
          %2608 = vmatpush2.msra.mxu0 0.0
          %2609 = vmatprep.subr.mxu0 0.0
          %2610 = vmatpush2.msra.mxu0 0.0
          %2611 = vmatprep.subr.mxu0 0.0
          %2612 = vmatpush2.msra.mxu0 0.0
          %2613 = vmatprep.subr.mxu0 0.0
          %2614 = vmatpush2.msra.mxu0 0.0
          %2615 = vmatprep.subr.mxu0 0.0
          %2616 = vmatpush2.msra.mxu0 0.0
          %2617 = vmatprep.subr.mxu0 0.0
          %2618 = vmatpush2.msra.mxu0 0.0
          %2619 = vmatprep.mubr.f32.mxu0 0.0
          %2620 = vmatmul.mubr.f32.gmra.mxu0 %v2553
          %v2621 = vpop.f32.mrf.mxu0
          %v2622 = vadd.f32 0.0, %v2621
          %v2623 = vpop.f32.mrf.mxu0
          %2624 = vdwg.mxu0
          %vm2625 = vcmask 123905
          %v2626 = vsel %vm2625, %v776, 0.0
          %2627 = vadd.xlane.f32.xlu0 %v2626
          %v2628 = vpop.xlane.xlu0 %2627
          %v2629 = vmax.f32 %v2628, 1e-09
          %v2631 = vrot.slane %v2629, 1
          %v2633 = vrcp.pop %v2631
          %v2634 = vmul.f32 %v2622, %v2633
          %2635 = vst.msk [vmem:[#allocation4 + $0x1] sm:$0x1] %vm2550, %v2634
        $region92: #{encoder_forward.1} parent=83 // pred_fallthru
          _
        // Predicated region
        $region93: #{encoder_forward.1} parent=83 // pred_check
          %p2636 = pneg %p437
        $region94: #{encoder_forward.1} parent=83 // pred_check_branch
          %2638 = sbr.rel (%p2636) target = $region96
        $region95: #{encoder_forward.1} parent=83 // pred_region
          %s2640 = ssub.s32 32, 32
          %2641 = vsyncadd [#allocation5], %s2640
          %s2643 = sshll.u32 [#allocation4], 4
          %s2644 = int_to_ptr.vmem [resolvable:$true] %s2643
          %2646 = dma.vmem_to_hbm [thread:$0]  %s2644, 32, %s16, [#allocation5]
        $region96: #{encoder_forward.1} parent=83 // pred_fallthru
          _
        // Predicated region
        $region97: #{encoder_forward.1} parent=83 // pred_check
          %p2647 = pneg %p437
        $region98: #{encoder_forward.1} parent=83 // pred_check_branch
          %2649 = sbr.rel (%p2647) target = $region100
        $region99: #{encoder_forward.1} parent=83 // pred_region
          %2650 = dma.done [#allocation5], 32
        $region100: #{encoder_forward.1} parent=83 // pred_fallthru
          _
      $region84: #{encoder_forward.1} parent=5 // pred_fallthru
        _
      %p2651 = scmp.le.s32.totalorder 2, %s23
      // Predicated region
      $region101: #{encoder_forward.1} parent=5 // pred_check
        %p2652 = pneg %p2651
      $region102: #{encoder_forward.1} parent=5 // pred_check_branch
        %2654 = sbr.rel (%p2652) target = $region104
      $region103: #{encoder_forward.1} parent=5 // pred_region
        %s2655 = ssub.s32 %s23, 2
      $region104: #{encoder_forward.1} parent=5 // pred_fallthru
        _
    $region6: #{encoder_forward.1} parent=1 // loop_footer
      %s27 = sadd.s32 1, %s23
    $region7: #{encoder_forward.1} parent=1 // loop_footer_branch
      %22 = sbr.rel target = $region3
    $region8: #{encoder_forward.1} parent=1 // loop_exit
      _
    %2656 = vsyncpa [#allocation5], 1
    %s2657 = scalar_lea.sflag [#allocation5], 1
    %2658 = vsyncpa %s2657, 1

</llo_original>
